<compile_context>
chip_gen: v5e
topology: v5e:2x2
jax: 0.10.0
libtpu: 0.0.40
codegen_flags: <defaults>
</compile_context>

<pallas_src>
import functools

import jax
import jax.numpy as jnp
from jax.experimental import pallas as pl
from jax.experimental.pallas import tpu as pltpu


def _round_up(x, m):
    return (x + m - 1) // m * m


def _conv_mm_kernel(a_ref, w_ref, b_ref, o_ref, acc_ref, *, negative_slope):
    """Tiled (im2col) matmul with f32 accumulation; bias + LeakyReLU fused on the last K step."""
    k = pl.program_id(1)

    @pl.when(k == 0)
    def _():
        acc_ref[...] = jnp.zeros_like(acc_ref)

    acc_ref[...] += jnp.dot(a_ref[...], w_ref[...],
                            preferred_element_type=jnp.float32)

    @pl.when(k == pl.num_programs(1) - 1)
    def _():
        acc = acc_ref[...] + b_ref[...]          # (tm, Cout_pad) + (1, Cout_pad)
        if negative_slope is not None:
            acc = jnp.where(acc > 0, acc, negative_slope * acc)
        o_ref[...] = acc.astype(o_ref.dtype)


def _im2col(x_nhwc, k=4, s=2, p=1):
    """Extract k x k patches (stride s, pad p) -> (N*Ho*Wo, k*k*C), (i, j, c) row order."""
    n, h, w, c = x_nhwc.shape
    xp = jnp.pad(x_nhwc, ((0, 0), (p, p), (p, p), (0, 0)))
    ho = (h + 2 * p - k) // s + 1
    wo = (w + 2 * p - k) // s + 1
    cols = []
    for i in range(k):
        for j in range(k):
            cols.append(xp[:, i:i + s * ho:s, j:j + s * wo:s, :])
    patches = jnp.stack(cols, axis=3)            # (n, ho, wo, k*k, c)
    return patches.reshape(n * ho * wo, k * k * c), (n, ho, wo)


_TM_TARGET = 512    # row tile (multiple of 8); amortizes per-step overhead
_TK_TARGET = 512    # K tile (multiple of 128); keeps double-buffered blocks small


def conv4x4_s2_p1(x_nhwc, weight_oihw, bias, negative_slope=None,
                  out_dtype=jnp.bfloat16):
    """Conv2d(kernel=4, stride=2, padding=1) [+ LeakyReLU] via a gridded Pallas matmul."""
    cout, cin, kh, kw = weight_oihw.shape

    # bf16 before im2col so the materialized (4x inflated) patch matrix is bf16.
    # TODO(synk): replace materialized im2col with in-kernel patch assembly
    # (16 shifted (tm,Cin)@(Cin,Cout) matmuls reading NHWC directly) to remove
    # the remaining HBM blowup on the early, bandwidth-bound layers.
    a, (n, ho, wo) = _im2col(x_nhwc.astype(jnp.bfloat16), k=kh, s=2, p=1)

    # (Cout, Cin, kh, kw) -> (kh, kw, Cin, Cout) -> (kh*kw*Cin, Cout); matches
    # the (i, j, c) ordering produced by _im2col.
    w_mat = jnp.transpose(weight_oihw, (2, 3, 1, 0)).reshape(kh * kw * cin, cout)
    w_mat = w_mat.astype(jnp.bfloat16)

    m, kdim = a.shape

    # Tile / pad sizes: everything (8,128)-aligned and exactly covered by the grid.
    tm = min(_TM_TARGET, _round_up(m, 8))
    m_pad = _round_up(m, tm)
    k_pad = _round_up(kdim, 128)
    if k_pad <= _TK_TARGET:
        tk = k_pad
    else:
        tk = _TK_TARGET
        k_pad = _round_up(kdim, tk)
    cout_pad = _round_up(cout, 128)

    a_p = jnp.pad(a, ((0, m_pad - m), (0, k_pad - kdim)))
    w_p = jnp.pad(w_mat, ((0, k_pad - kdim), (0, cout_pad - cout)))
    b_p = jnp.pad(bias.astype(jnp.float32).reshape(1, cout),
                  ((0, 0), (0, cout_pad - cout)))

    grid = (m_pad // tm, k_pad // tk)

    out_bytes = m_pad * cout_pad * jnp.dtype(out_dtype).itemsize
    cost = pl.CostEstimate(
        flops=2 * m_pad * k_pad * cout_pad,
        transcendentals=0,
        bytes_accessed=a_p.size * 2 + w_p.size * 2 + b_p.size * 4 + out_bytes,
    )

    out = pl.pallas_call(
        functools.partial(_conv_mm_kernel, negative_slope=negative_slope),
        out_shape=jax.ShapeDtypeStruct((m_pad, cout_pad), out_dtype),
        grid_spec=pltpu.PrefetchScalarGridSpec(
            num_scalar_prefetch=0,
            grid=grid,
            in_specs=[
                pl.BlockSpec((tm, tk), lambda i, k: (i, k)),          # A tile
                pl.BlockSpec((tk, cout_pad), lambda i, k: (k, 0)),    # W tile
                pl.BlockSpec((1, cout_pad), lambda i, k: (0, 0)),     # bias
            ],
            out_specs=pl.BlockSpec((tm, cout_pad), lambda i, k: (i, 0)),
            scratch_shapes=[pltpu.VMEM((tm, cout_pad), jnp.float32)],
        ),
        compiler_params=pltpu.CompilerParams(
            dimension_semantics=("parallel", "arbitrary"),
            vmem_limit_bytes=48 * 1024 * 1024,
        ),
        cost_estimate=cost,
    )(a_p, w_p, b_p)

    out = out[:m, :cout]                          # strip M / Cout padding
    return out.reshape(n, ho, wo, cout)


def init_params(key, num_classes, ndf):
    """Deterministic synthetic parameters with the module's shapes (OIHW + bias)."""
    chans = [num_classes, ndf, ndf * 2, ndf * 4, ndf * 8, 1]
    params = []
    for i in range(5):
        key, kw_key, kb_key = jax.random.split(key, 3)
        cin, cout = chans[i], chans[i + 1]
        w = 0.05 * jax.random.normal(kw_key, (cout, cin, 4, 4), dtype=jnp.float32)
        b = 0.01 * jax.random.normal(kb_key, (cout,), dtype=jnp.float32)
        params.append((w, b))
    return params


@jax.jit
def fc_discriminator_forward(x_nchw, params):
    """Pallas-backed forward.  Input/output are NCHW (PyTorch convention)."""
    x = jnp.transpose(x_nchw, (0, 2, 3, 1))            # NCHW -> NHWC
    n_layers = len(params)
    for i, (w, b) in enumerate(params):
        last = i == n_layers - 1
        x = conv4x4_s2_p1(
            x, w, b,
            negative_slope=None if last else 0.2,      # classifier has no LeakyReLU
            out_dtype=jnp.float32 if last else jnp.bfloat16)
    return jnp.transpose(x, (0, 3, 1, 2))              # NHWC -> NCHW


def reference_forward(x_nchw, params):
    """Pure-JAX reference (lax.conv) mirroring the PyTorch forward."""
    x = x_nchw
    for i, (w, b) in enumerate(params):
        x = jax.lax.conv_general_dilated(
            x, w, window_strides=(2, 2), padding=((1, 1), (1, 1)),
            dimension_numbers=("NCHW", "OIHW", "NCHW"))
        x = x + b.reshape(1, -1, 1, 1)
        if i < len(params) - 1:
            x = jnp.where(x > 0, x, 0.2 * x)
    return x


if __name__ == "__main__":
    num_classes = 4
    ndf = 16          # small ndf for the example (module default is 64)
    key = jax.random.PRNGKey(0)
    key, xkey = jax.random.split(key)

    # 32x32 spatial is the minimum that survives five stride-2 convs -> (2,1,1,1)
    x = jax.random.normal(xkey, (2, num_classes, 32, 32), dtype=jnp.float32)
    params = init_params(key, num_classes, ndf)

    out = fc_discriminator_forward(x, params)
    out = jax.block_until_ready(out)

    ref = jax.block_until_ready(reference_forward(x, params))
    assert out.shape == ref.shape == (2, 1, 1, 1), out.shape
    # bf16 matmul inputs / bf16 intermediates vs f32 reference -> relaxed tolerance.
    assert jnp.allclose(out, ref, atol=3e-2, rtol=3e-2), (
        float(jnp.max(jnp.abs(out - ref))))

    print("KERNEL_OK")
</pallas_src>

<mosaic_0001>
module attributes {stable_mosaic.version = 11 : i64} {
  func.func @_conv_mm_kernel(%arg0: i32, %arg1: i32, %arg2: memref<512x128xbf16, #tpu.memory_space<vmem>>, %arg3: memref<128x128xbf16, #tpu.memory_space<vmem>>, %arg4: memref<1x128xf32, #tpu.memory_space<vmem>>, %arg5: memref<512x128xbf16, #tpu.memory_space<vmem>>, %arg6: memref<512x128xf32, #tpu.memory_space<vmem>>) attributes {dimension_semantics = [#tpu.dimension_semantics<parallel>, #tpu.dimension_semantics<arbitrary>], iteration_bounds = array<i64: 1, 1>, scalar_prefetch = 0 : i64, scratch_operands = 1 : i64, tpu.core_type = #tpu.core_type<tc>, window_params = [{transform_indices = @transform_0, window_bounds = array<i64: 512, 128>}, {transform_indices = @transform_1, window_bounds = array<i64: 128, 128>}, {pipeline_mode = #tpu.pipeline_mode<synchronous>, transform_indices = @transform_2, window_bounds = array<i64: 1, 128>}, {transform_indices = @transform_3, window_bounds = array<i64: 512, 128>}]} {
    %c0_i32 = arith.constant 0 : i32
    %0 = arith.cmpi eq, %arg1, %c0_i32 : i32
    %1 = arith.extui %0 : i1 to i32
    %c0_i32_0 = arith.constant 0 : i32
    %2 = arith.cmpi ne, %1, %c0_i32_0 : i32
    scf.if %2 {
      %cst_10 = arith.constant 0.000000e+00 : f32
      %12 = vector.broadcast %cst_10 : f32 to vector<512x128xf32>
      %c0_11 = arith.constant 0 : index
      %c0_12 = arith.constant 0 : index
      %13 = vector.load %arg6[%c0_11, %c0_12] : memref<512x128xf32, #tpu.memory_space<vmem>>, vector<512x128xf32>
      tpu.vector_store %arg6[%c0_11, %c0_12], %12 {strides = array<i32>} : memref<512x128xf32, #tpu.memory_space<vmem>>, vector<512x128xf32>,
    } else {
    }
    %c0 = arith.constant 0 : index
    %c0_1 = arith.constant 0 : index
    %3 = vector.load %arg6[%c0, %c0_1] : memref<512x128xf32, #tpu.memory_space<vmem>>, vector<512x128xf32>
    %c0_2 = arith.constant 0 : index
    %c0_3 = arith.constant 0 : index
    %4 = vector.load %arg2[%c0_2, %c0_3] : memref<512x128xbf16, #tpu.memory_space<vmem>>, vector<512x128xbf16>
    %c0_4 = arith.constant 0 : index
    %c0_5 = arith.constant 0 : index
    %5 = vector.load %arg3[%c0_4, %c0_5] : memref<128x128xbf16, #tpu.memory_space<vmem>>, vector<128x128xbf16>
    %cst = arith.constant dense<0.000000e+00> : vector<512x128xf32>
    %6 = tpu.matmul %4, %5, %cst {dimension_numbers = #tpu.dot_dimension_numbers<[1], [0], [0], [1], [0, 0, 1, 1], [], []>} : vector<512x128xbf16>, vector<128x128xbf16>, vector<512x128xf32> -> vector<512x128xf32>
    %7 = arith.addf %3, %6 : vector<512x128xf32>
    %c0_6 = arith.constant 0 : index
    %c0_7 = arith.constant 0 : index
    %8 = vector.load %arg6[%c0_6, %c0_7] : memref<512x128xf32, #tpu.memory_space<vmem>>, vector<512x128xf32>
    tpu.vector_store %arg6[%c0_6, %c0_7], %7 {strides = array<i32>} : memref<512x128xf32, #tpu.memory_space<vmem>>, vector<512x128xf32>,
    %c0_i32_8 = arith.constant 0 : i32
    %9 = arith.cmpi eq, %arg1, %c0_i32_8 : i32
    %10 = arith.extui %9 : i1 to i32
    %c0_i32_9 = arith.constant 0 : i32
    %11 = arith.cmpi ne, %10, %c0_i32_9 : i32
    scf.if %11 {
      %c0_10 = arith.constant 0 : index
      %c0_11 = arith.constant 0 : index
      %12 = vector.load %arg6[%c0_10, %c0_11] : memref<512x128xf32, #tpu.memory_space<vmem>>, vector<512x128xf32>
      %c0_12 = arith.constant 0 : index
      %c0_13 = arith.constant 0 : index
      %13 = vector.load %arg4[%c0_12, %c0_13] : memref<1x128xf32, #tpu.memory_space<vmem>>, vector<1x128xf32>
      %14 = vector.broadcast %13 : vector<1x128xf32> to vector<512x128xf32>
      %15 = arith.addf %12, %14 : vector<512x128xf32>
      %cst_14 = arith.constant 0.000000e+00 : f32
      %16 = vector.broadcast %cst_14 : f32 to vector<512x128xf32>
      %17 = arith.cmpf ogt, %15, %16 : vector<512x128xf32>
      %cst_15 = arith.constant 2.000000e-01 : f32
      %18 = vector.broadcast %cst_15 : f32 to vector<512x128xf32>
      %19 = arith.mulf %18, %15 : vector<512x128xf32>
      %20 = arith.select %17, %15, %19 : vector<512x128xi1>, vector<512x128xf32>
      %21 = arith.truncf %20 : vector<512x128xf32> to vector<512x128xbf16>
      %c0_16 = arith.constant 0 : index
      %c0_17 = arith.constant 0 : index
      %22 = vector.load %arg5[%c0_16, %c0_17] : memref<512x128xbf16, #tpu.memory_space<vmem>>, vector<512x128xbf16>
      tpu.vector_store %arg5[%c0_16, %c0_17], %21 {strides = array<i32>} : memref<512x128xbf16, #tpu.memory_space<vmem>>, vector<512x128xbf16>,
    } else {
    }
    return
  }
  func.func @transform_0(%arg0: i32, %arg1: i32) -> (i32, i32) {
    %c0_i32 = arith.constant 0 : i32
    return %arg0, %arg1 : i32, i32
  }
  func.func @transform_1(%arg0: i32, %arg1: i32) -> (i32, i32) {
    %c0_i32 = arith.constant 0 : i32
    %c0_i32_0 = arith.constant 0 : i32
    return %arg1, %c0_i32 : i32, i32
  }
  func.func @transform_2(%arg0: i32, %arg1: i32) -> (i32, i32) {
    %c0_i32 = arith.constant 0 : i32
    %c0_i32_0 = arith.constant 0 : i32
    %c0_i32_1 = arith.constant 0 : i32
    return %c0_i32, %c0_i32_0 : i32, i32
  }
  func.func @transform_3(%arg0: i32, %arg1: i32) -> (i32, i32) {
    %c0_i32 = arith.constant 0 : i32
    %c0_i32_0 = arith.constant 0 : i32
    return %arg0, %c0_i32 : i32, i32
  }
}

module attributes {stable_mosaic.version = 11 : i64} {
  func.func @_conv_mm_kernel(%arg0: i32, %arg1: i32, %arg2: memref<128x256xbf16, #tpu.memory_space<vmem>>, %arg3: memref<256x128xbf16, #tpu.memory_space<vmem>>, %arg4: memref<1x128xf32, #tpu.memory_space<vmem>>, %arg5: memref<128x128xbf16, #tpu.memory_space<vmem>>, %arg6: memref<128x128xf32, #tpu.memory_space<vmem>>) attributes {dimension_semantics = [#tpu.dimension_semantics<parallel>, #tpu.dimension_semantics<arbitrary>], iteration_bounds = array<i64: 1, 1>, scalar_prefetch = 0 : i64, scratch_operands = 1 : i64, tpu.core_type = #tpu.core_type<tc>, window_params = [{transform_indices = @transform_0, window_bounds = array<i64: 128, 256>}, {transform_indices = @transform_1, window_bounds = array<i64: 256, 128>}, {pipeline_mode = #tpu.pipeline_mode<synchronous>, transform_indices = @transform_2, window_bounds = array<i64: 1, 128>}, {transform_indices = @transform_3, window_bounds = array<i64: 128, 128>}]} {
    %c0_i32 = arith.constant 0 : i32
    %0 = arith.cmpi eq, %arg1, %c0_i32 : i32
    %1 = arith.extui %0 : i1 to i32
    %c0_i32_0 = arith.constant 0 : i32
    %2 = arith.cmpi ne, %1, %c0_i32_0 : i32
    scf.if %2 {
      %cst_10 = arith.constant 0.000000e+00 : f32
      %12 = vector.broadcast %cst_10 : f32 to vector<128x128xf32>
      %c0_11 = arith.constant 0 : index
      %c0_12 = arith.constant 0 : index
      %13 = vector.load %arg6[%c0_11, %c0_12] : memref<128x128xf32, #tpu.memory_space<vmem>>, vector<128x128xf32>
      tpu.vector_store %arg6[%c0_11, %c0_12], %12 {strides = array<i32>} : memref<128x128xf32, #tpu.memory_space<vmem>>, vector<128x128xf32>,
    } else {
    }
    %c0 = arith.constant 0 : index
    %c0_1 = arith.constant 0 : index
    %3 = vector.load %arg6[%c0, %c0_1] : memref<128x128xf32, #tpu.memory_space<vmem>>, vector<128x128xf32>
    %c0_2 = arith.constant 0 : index
    %c0_3 = arith.constant 0 : index
    %4 = vector.load %arg2[%c0_2, %c0_3] : memref<128x256xbf16, #tpu.memory_space<vmem>>, vector<128x256xbf16>
    %c0_4 = arith.constant 0 : index
    %c0_5 = arith.constant 0 : index
    %5 = vector.load %arg3[%c0_4, %c0_5] : memref<256x128xbf16, #tpu.memory_space<vmem>>, vector<256x128xbf16>
    %cst = arith.constant dense<0.000000e+00> : vector<128x128xf32>
    %6 = tpu.matmul %4, %5, %cst {dimension_numbers = #tpu.dot_dimension_numbers<[1], [0], [0], [1], [0, 0, 1, 1], [], []>} : vector<128x256xbf16>, vector<256x128xbf16>, vector<128x128xf32> -> vector<128x128xf32>
    %7 = arith.addf %3, %6 : vector<128x128xf32>
    %c0_6 = arith.constant 0 : index
    %c0_7 = arith.constant 0 : index
    %8 = vector.load %arg6[%c0_6, %c0_7] : memref<128x128xf32, #tpu.memory_space<vmem>>, vector<128x128xf32>
    tpu.vector_store %arg6[%c0_6, %c0_7], %7 {strides = array<i32>} : memref<128x128xf32, #tpu.memory_space<vmem>>, vector<128x128xf32>,
    %c0_i32_8 = arith.constant 0 : i32
    %9 = arith.cmpi eq, %arg1, %c0_i32_8 : i32
    %10 = arith.extui %9 : i1 to i32
    %c0_i32_9 = arith.constant 0 : i32
    %11 = arith.cmpi ne, %10, %c0_i32_9 : i32
    scf.if %11 {
      %c0_10 = arith.constant 0 : index
      %c0_11 = arith.constant 0 : index
      %12 = vector.load %arg6[%c0_10, %c0_11] : memref<128x128xf32, #tpu.memory_space<vmem>>, vector<128x128xf32>
      %c0_12 = arith.constant 0 : index
      %c0_13 = arith.constant 0 : index
      %13 = vector.load %arg4[%c0_12, %c0_13] : memref<1x128xf32, #tpu.memory_space<vmem>>, vector<1x128xf32>
      %14 = vector.broadcast %13 : vector<1x128xf32> to vector<128x128xf32>
      %15 = arith.addf %12, %14 : vector<128x128xf32>
      %cst_14 = arith.constant 0.000000e+00 : f32
      %16 = vector.broadcast %cst_14 : f32 to vector<128x128xf32>
      %17 = arith.cmpf ogt, %15, %16 : vector<128x128xf32>
      %cst_15 = arith.constant 2.000000e-01 : f32
      %18 = vector.broadcast %cst_15 : f32 to vector<128x128xf32>
      %19 = arith.mulf %18, %15 : vector<128x128xf32>
      %20 = arith.select %17, %15, %19 : vector<128x128xi1>, vector<128x128xf32>
      %21 = arith.truncf %20 : vector<128x128xf32> to vector<128x128xbf16>
      %c0_16 = arith.constant 0 : index
      %c0_17 = arith.constant 0 : index
      %22 = vector.load %arg5[%c0_16, %c0_17] : memref<128x128xbf16, #tpu.memory_space<vmem>>, vector<128x128xbf16>
      tpu.vector_store %arg5[%c0_16, %c0_17], %21 {strides = array<i32>} : memref<128x128xbf16, #tpu.memory_space<vmem>>, vector<128x128xbf16>,
    } else {
    }
    return
  }
  func.func @transform_0(%arg0: i32, %arg1: i32) -> (i32, i32) {
    %c0_i32 = arith.constant 0 : i32
    return %arg0, %arg1 : i32, i32
  }
  func.func @transform_1(%arg0: i32, %arg1: i32) -> (i32, i32) {
    %c0_i32 = arith.constant 0 : i32
    %c0_i32_0 = arith.constant 0 : i32
    return %arg1, %c0_i32 : i32, i32
  }
  func.func @transform_2(%arg0: i32, %arg1: i32) -> (i32, i32) {
    %c0_i32 = arith.constant 0 : i32
    %c0_i32_0 = arith.constant 0 : i32
    %c0_i32_1 = arith.constant 0 : i32
    return %c0_i32, %c0_i32_0 : i32, i32
  }
  func.func @transform_3(%arg0: i32, %arg1: i32) -> (i32, i32) {
    %c0_i32 = arith.constant 0 : i32
    %c0_i32_0 = arith.constant 0 : i32
    return %arg0, %c0_i32 : i32, i32
  }
}

module attributes {stable_mosaic.version = 11 : i64} {
  func.func @_conv_mm_kernel(%arg0: i32, %arg1: i32, %arg2: memref<32x512xbf16, #tpu.memory_space<vmem>>, %arg3: memref<512x128xbf16, #tpu.memory_space<vmem>>, %arg4: memref<1x128xf32, #tpu.memory_space<vmem>>, %arg5: memref<32x128xbf16, #tpu.memory_space<vmem>>, %arg6: memref<32x128xf32, #tpu.memory_space<vmem>>) attributes {dimension_semantics = [#tpu.dimension_semantics<parallel>, #tpu.dimension_semantics<arbitrary>], iteration_bounds = array<i64: 1, 1>, scalar_prefetch = 0 : i64, scratch_operands = 1 : i64, tpu.core_type = #tpu.core_type<tc>, window_params = [{transform_indices = @transform_0, window_bounds = array<i64: 32, 512>}, {transform_indices = @transform_1, window_bounds = array<i64: 512, 128>}, {pipeline_mode = #tpu.pipeline_mode<synchronous>, transform_indices = @transform_2, window_bounds = array<i64: 1, 128>}, {transform_indices = @transform_3, window_bounds = array<i64: 32, 128>}]} {
    %c0_i32 = arith.constant 0 : i32
    %0 = arith.cmpi eq, %arg1, %c0_i32 : i32
    %1 = arith.extui %0 : i1 to i32
    %c0_i32_0 = arith.constant 0 : i32
    %2 = arith.cmpi ne, %1, %c0_i32_0 : i32
    scf.if %2 {
      %cst_10 = arith.constant 0.000000e+00 : f32
      %12 = vector.broadcast %cst_10 : f32 to vector<32x128xf32>
      %c0_11 = arith.constant 0 : index
      %c0_12 = arith.constant 0 : index
      %13 = vector.load %arg6[%c0_11, %c0_12] : memref<32x128xf32, #tpu.memory_space<vmem>>, vector<32x128xf32>
      tpu.vector_store %arg6[%c0_11, %c0_12], %12 {strides = array<i32>} : memref<32x128xf32, #tpu.memory_space<vmem>>, vector<32x128xf32>,
    } else {
    }
    %c0 = arith.constant 0 : index
    %c0_1 = arith.constant 0 : index
    %3 = vector.load %arg6[%c0, %c0_1] : memref<32x128xf32, #tpu.memory_space<vmem>>, vector<32x128xf32>
    %c0_2 = arith.constant 0 : index
    %c0_3 = arith.constant 0 : index
    %4 = vector.load %arg2[%c0_2, %c0_3] : memref<32x512xbf16, #tpu.memory_space<vmem>>, vector<32x512xbf16>
    %c0_4 = arith.constant 0 : index
    %c0_5 = arith.constant 0 : index
    %5 = vector.load %arg3[%c0_4, %c0_5] : memref<512x128xbf16, #tpu.memory_space<vmem>>, vector<512x128xbf16>
    %cst = arith.constant dense<0.000000e+00> : vector<32x128xf32>
    %6 = tpu.matmul %4, %5, %cst {dimension_numbers = #tpu.dot_dimension_numbers<[1], [0], [0], [1], [0, 0, 1, 1], [], []>} : vector<32x512xbf16>, vector<512x128xbf16>, vector<32x128xf32> -> vector<32x128xf32>
    %7 = arith.addf %3, %6 : vector<32x128xf32>
    %c0_6 = arith.constant 0 : index
    %c0_7 = arith.constant 0 : index
    %8 = vector.load %arg6[%c0_6, %c0_7] : memref<32x128xf32, #tpu.memory_space<vmem>>, vector<32x128xf32>
    tpu.vector_store %arg6[%c0_6, %c0_7], %7 {strides = array<i32>} : memref<32x128xf32, #tpu.memory_space<vmem>>, vector<32x128xf32>,
    %c0_i32_8 = arith.constant 0 : i32
    %9 = arith.cmpi eq, %arg1, %c0_i32_8 : i32
    %10 = arith.extui %9 : i1 to i32
    %c0_i32_9 = arith.constant 0 : i32
    %11 = arith.cmpi ne, %10, %c0_i32_9 : i32
    scf.if %11 {
      %c0_10 = arith.constant 0 : index
      %c0_11 = arith.constant 0 : index
      %12 = vector.load %arg6[%c0_10, %c0_11] : memref<32x128xf32, #tpu.memory_space<vmem>>, vector<32x128xf32>
      %c0_12 = arith.constant 0 : index
      %c0_13 = arith.constant 0 : index
      %13 = vector.load %arg4[%c0_12, %c0_13] : memref<1x128xf32, #tpu.memory_space<vmem>>, vector<1x128xf32>
      %14 = vector.broadcast %13 : vector<1x128xf32> to vector<32x128xf32>
      %15 = arith.addf %12, %14 : vector<32x128xf32>
      %cst_14 = arith.constant 0.000000e+00 : f32
      %16 = vector.broadcast %cst_14 : f32 to vector<32x128xf32>
      %17 = arith.cmpf ogt, %15, %16 : vector<32x128xf32>
      %cst_15 = arith.constant 2.000000e-01 : f32
      %18 = vector.broadcast %cst_15 : f32 to vector<32x128xf32>
      %19 = arith.mulf %18, %15 : vector<32x128xf32>
      %20 = arith.select %17, %15, %19 : vector<32x128xi1>, vector<32x128xf32>
      %21 = arith.truncf %20 : vector<32x128xf32> to vector<32x128xbf16>
      %c0_16 = arith.constant 0 : index
      %c0_17 = arith.constant 0 : index
      %22 = vector.load %arg5[%c0_16, %c0_17] : memref<32x128xbf16, #tpu.memory_space<vmem>>, vector<32x128xbf16>
      tpu.vector_store %arg5[%c0_16, %c0_17], %21 {strides = array<i32>} : memref<32x128xbf16, #tpu.memory_space<vmem>>, vector<32x128xbf16>,
    } else {
    }
    return
  }
  func.func @transform_0(%arg0: i32, %arg1: i32) -> (i32, i32) {
    %c0_i32 = arith.constant 0 : i32
    return %arg0, %arg1 : i32, i32
  }
  func.func @transform_1(%arg0: i32, %arg1: i32) -> (i32, i32) {
    %c0_i32 = arith.constant 0 : i32
    %c0_i32_0 = arith.constant 0 : i32
    return %arg1, %c0_i32 : i32, i32
  }
  func.func @transform_2(%arg0: i32, %arg1: i32) -> (i32, i32) {
    %c0_i32 = arith.constant 0 : i32
    %c0_i32_0 = arith.constant 0 : i32
    %c0_i32_1 = arith.constant 0 : i32
    return %c0_i32, %c0_i32_0 : i32, i32
  }
  func.func @transform_3(%arg0: i32, %arg1: i32) -> (i32, i32) {
    %c0_i32 = arith.constant 0 : i32
    %c0_i32_0 = arith.constant 0 : i32
    return %arg0, %c0_i32 : i32, i32
  }
}

module attributes {stable_mosaic.version = 11 : i64} {
  func.func @_conv_mm_kernel(%arg0: i32, %arg1: i32, %arg2: memref<8x512xbf16, #tpu.memory_space<vmem>>, %arg3: memref<512x128xbf16, #tpu.memory_space<vmem>>, %arg4: memref<1x128xf32, #tpu.memory_space<vmem>>, %arg5: memref<8x128xbf16, #tpu.memory_space<vmem>>, %arg6: memref<8x128xf32, #tpu.memory_space<vmem>>) attributes {dimension_semantics = [#tpu.dimension_semantics<parallel>, #tpu.dimension_semantics<arbitrary>], iteration_bounds = array<i64: 1, 2>, scalar_prefetch = 0 : i64, scratch_operands = 1 : i64, tpu.core_type = #tpu.core_type<tc>, window_params = [{transform_indices = @transform_0, window_bounds = array<i64: 8, 512>}, {transform_indices = @transform_1, window_bounds = array<i64: 512, 128>}, {pipeline_mode = #tpu.pipeline_mode<synchronous>, transform_indices = @transform_2, window_bounds = array<i64: 1, 128>}, {transform_indices = @transform_3, window_bounds = array<i64: 8, 128>}]} {
    %c0_i32 = arith.constant 0 : i32
    %0 = arith.cmpi eq, %arg1, %c0_i32 : i32
    %1 = arith.extui %0 : i1 to i32
    %c0_i32_0 = arith.constant 0 : i32
    %2 = arith.cmpi ne, %1, %c0_i32_0 : i32
    scf.if %2 {
      %cst_9 = arith.constant 0.000000e+00 : f32
      %12 = vector.broadcast %cst_9 : f32 to vector<8x128xf32>
      %c0_10 = arith.constant 0 : index
      %c0_11 = arith.constant 0 : index
      %13 = vector.load %arg6[%c0_10, %c0_11] : memref<8x128xf32, #tpu.memory_space<vmem>>, vector<8x128xf32>
      tpu.vector_store %arg6[%c0_10, %c0_11], %12 {strides = array<i32>} : memref<8x128xf32, #tpu.memory_space<vmem>>, vector<8x128xf32>,
    } else {
    }
    %c0 = arith.constant 0 : index
    %c0_1 = arith.constant 0 : index
    %3 = vector.load %arg6[%c0, %c0_1] : memref<8x128xf32, #tpu.memory_space<vmem>>, vector<8x128xf32>
    %c0_2 = arith.constant 0 : index
    %c0_3 = arith.constant 0 : index
    %4 = vector.load %arg2[%c0_2, %c0_3] : memref<8x512xbf16, #tpu.memory_space<vmem>>, vector<8x512xbf16>
    %c0_4 = arith.constant 0 : index
    %c0_5 = arith.constant 0 : index
    %5 = vector.load %arg3[%c0_4, %c0_5] : memref<512x128xbf16, #tpu.memory_space<vmem>>, vector<512x128xbf16>
    %cst = arith.constant dense<0.000000e+00> : vector<8x128xf32>
    %6 = tpu.matmul %4, %5, %cst {dimension_numbers = #tpu.dot_dimension_numbers<[1], [0], [0], [1], [0, 0, 1, 1], [], []>} : vector<8x512xbf16>, vector<512x128xbf16>, vector<8x128xf32> -> vector<8x128xf32>
    %7 = arith.addf %3, %6 : vector<8x128xf32>
    %c0_6 = arith.constant 0 : index
    %c0_7 = arith.constant 0 : index
    %8 = vector.load %arg6[%c0_6, %c0_7] : memref<8x128xf32, #tpu.memory_space<vmem>>, vector<8x128xf32>
    tpu.vector_store %arg6[%c0_6, %c0_7], %7 {strides = array<i32>} : memref<8x128xf32, #tpu.memory_space<vmem>>, vector<8x128xf32>,
    %c1_i32 = arith.constant 1 : i32
    %9 = arith.cmpi eq, %arg1, %c1_i32 : i32
    %10 = arith.extui %9 : i1 to i32
    %c0_i32_8 = arith.constant 0 : i32
    %11 = arith.cmpi ne, %10, %c0_i32_8 : i32
    scf.if %11 {
      %c0_9 = arith.constant 0 : index
      %c0_10 = arith.constant 0 : index
      %12 = vector.load %arg6[%c0_9, %c0_10] : memref<8x128xf32, #tpu.memory_space<vmem>>, vector<8x128xf32>
      %c0_11 = arith.constant 0 : index
      %c0_12 = arith.constant 0 : index
      %13 = vector.load %arg4[%c0_11, %c0_12] : memref<1x128xf32, #tpu.memory_space<vmem>>, vector<1x128xf32>
      %14 = vector.broadcast %13 : vector<1x128xf32> to vector<8x128xf32>
      %15 = arith.addf %12, %14 : vector<8x128xf32>
      %cst_13 = arith.constant 0.000000e+00 : f32
      %16 = vector.broadcast %cst_13 : f32 to vector<8x128xf32>
      %17 = arith.cmpf ogt, %15, %16 : vector<8x128xf32>
      %cst_14 = arith.constant 2.000000e-01 : f32
      %18 = vector.broadcast %cst_14 : f32 to vector<8x128xf32>
      %19 = arith.mulf %18, %15 : vector<8x128xf32>
      %20 = arith.select %17, %15, %19 : vector<8x128xi1>, vector<8x128xf32>
      %21 = arith.truncf %20 : vector<8x128xf32> to vector<8x128xbf16>
      %c0_15 = arith.constant 0 : index
      %c0_16 = arith.constant 0 : index
      %22 = vector.load %arg5[%c0_15, %c0_16] : memref<8x128xbf16, #tpu.memory_space<vmem>>, vector<8x128xbf16>
      tpu.vector_store %arg5[%c0_15, %c0_16], %21 {strides = array<i32>} : memref<8x128xbf16, #tpu.memory_space<vmem>>, vector<8x128xbf16>,
    } else {
    }
    return
  }
  func.func @transform_0(%arg0: i32, %arg1: i32) -> (i32, i32) {
    %c0_i32 = arith.constant 0 : i32
    return %arg0, %arg1 : i32, i32
  }
  func.func @transform_1(%arg0: i32, %arg1: i32) -> (i32, i32) {
    %c0_i32 = arith.constant 0 : i32
    %c0_i32_0 = arith.constant 0 : i32
    return %arg1, %c0_i32 : i32, i32
  }
  func.func @transform_2(%arg0: i32, %arg1: i32) -> (i32, i32) {
    %c0_i32 = arith.constant 0 : i32
    %c0_i32_0 = arith.constant 0 : i32
    %c0_i32_1 = arith.constant 0 : i32
    return %c0_i32, %c0_i32_0 : i32, i32
  }
  func.func @transform_3(%arg0: i32, %arg1: i32) -> (i32, i32) {
    %c0_i32 = arith.constant 0 : i32
    %c0_i32_0 = arith.constant 0 : i32
    return %arg0, %c0_i32 : i32, i32
  }
}

module attributes {stable_mosaic.version = 11 : i64} {
  func.func @_conv_mm_kernel(%arg0: i32, %arg1: i32, %arg2: memref<8x512xbf16, #tpu.memory_space<vmem>>, %arg3: memref<512x128xbf16, #tpu.memory_space<vmem>>, %arg4: memref<1x128xf32, #tpu.memory_space<vmem>>, %arg5: memref<8x128xf32, #tpu.memory_space<vmem>>, %arg6: memref<8x128xf32, #tpu.memory_space<vmem>>) attributes {dimension_semantics = [#tpu.dimension_semantics<parallel>, #tpu.dimension_semantics<arbitrary>], iteration_bounds = array<i64: 1, 4>, scalar_prefetch = 0 : i64, scratch_operands = 1 : i64, tpu.core_type = #tpu.core_type<tc>, window_params = [{transform_indices = @transform_0, window_bounds = array<i64: 8, 512>}, {transform_indices = @transform_1, window_bounds = array<i64: 512, 128>}, {pipeline_mode = #tpu.pipeline_mode<synchronous>, transform_indices = @transform_2, window_bounds = array<i64: 1, 128>}, {transform_indices = @transform_3, window_bounds = array<i64: 8, 128>}]} {
    %c0_i32 = arith.constant 0 : i32
    %0 = arith.cmpi eq, %arg1, %c0_i32 : i32
    %1 = arith.extui %0 : i1 to i32
    %c0_i32_0 = arith.constant 0 : i32
    %2 = arith.cmpi ne, %1, %c0_i32_0 : i32
    scf.if %2 {
      %cst_9 = arith.constant 0.000000e+00 : f32
      %12 = vector.broadcast %cst_9 : f32 to vector<8x128xf32>
      %c0_10 = arith.constant 0 : index
      %c0_11 = arith.constant 0 : index
      %13 = vector.load %arg6[%c0_10, %c0_11] : memref<8x128xf32, #tpu.memory_space<vmem>>, vector<8x128xf32>
      tpu.vector_store %arg6[%c0_10, %c0_11], %12 {strides = array<i32>} : memref<8x128xf32, #tpu.memory_space<vmem>>, vector<8x128xf32>,
    } else {
    }
    %c0 = arith.constant 0 : index
    %c0_1 = arith.constant 0 : index
    %3 = vector.load %arg6[%c0, %c0_1] : memref<8x128xf32, #tpu.memory_space<vmem>>, vector<8x128xf32>
    %c0_2 = arith.constant 0 : index
    %c0_3 = arith.constant 0 : index
    %4 = vector.load %arg2[%c0_2, %c0_3] : memref<8x512xbf16, #tpu.memory_space<vmem>>, vector<8x512xbf16>
    %c0_4 = arith.constant 0 : index
    %c0_5 = arith.constant 0 : index
    %5 = vector.load %arg3[%c0_4, %c0_5] : memref<512x128xbf16, #tpu.memory_space<vmem>>, vector<512x128xbf16>
    %cst = arith.constant dense<0.000000e+00> : vector<8x128xf32>
    %6 = tpu.matmul %4, %5, %cst {dimension_numbers = #tpu.dot_dimension_numbers<[1], [0], [0], [1], [0, 0, 1, 1], [], []>} : vector<8x512xbf16>, vector<512x128xbf16>, vector<8x128xf32> -> vector<8x128xf32>
    %7 = arith.addf %3, %6 : vector<8x128xf32>
    %c0_6 = arith.constant 0 : index
    %c0_7 = arith.constant 0 : index
    %8 = vector.load %arg6[%c0_6, %c0_7] : memref<8x128xf32, #tpu.memory_space<vmem>>, vector<8x128xf32>
    tpu.vector_store %arg6[%c0_6, %c0_7], %7 {strides = array<i32>} : memref<8x128xf32, #tpu.memory_space<vmem>>, vector<8x128xf32>,
    %c3_i32 = arith.constant 3 : i32
    %9 = arith.cmpi eq, %arg1, %c3_i32 : i32
    %10 = arith.extui %9 : i1 to i32
    %c0_i32_8 = arith.constant 0 : i32
    %11 = arith.cmpi ne, %10, %c0_i32_8 : i32
    scf.if %11 {
      %c0_9 = arith.constant 0 : index
      %c0_10 = arith.constant 0 : index
      %12 = vector.load %arg6[%c0_9, %c0_10] : memref<8x128xf32, #tpu.memory_space<vmem>>, vector<8x128xf32>
      %c0_11 = arith.constant 0 : index
      %c0_12 = arith.constant 0 : index
      %13 = vector.load %arg4[%c0_11, %c0_12] : memref<1x128xf32, #tpu.memory_space<vmem>>, vector<1x128xf32>
      %14 = vector.broadcast %13 : vector<1x128xf32> to vector<8x128xf32>
      %15 = arith.addf %12, %14 : vector<8x128xf32>
      %c0_13 = arith.constant 0 : index
      %c0_14 = arith.constant 0 : index
      %16 = vector.load %arg5[%c0_13, %c0_14] : memref<8x128xf32, #tpu.memory_space<vmem>>, vector<8x128xf32>
      tpu.vector_store %arg5[%c0_13, %c0_14], %15 {strides = array<i32>} : memref<8x128xf32, #tpu.memory_space<vmem>>, vector<8x128xf32>,
    } else {
    }
    return
  }
  func.func @transform_0(%arg0: i32, %arg1: i32) -> (i32, i32) {
    %c0_i32 = arith.constant 0 : i32
    return %arg0, %arg1 : i32, i32
  }
  func.func @transform_1(%arg0: i32, %arg1: i32) -> (i32, i32) {
    %c0_i32 = arith.constant 0 : i32
    %c0_i32_0 = arith.constant 0 : i32
    return %arg1, %c0_i32 : i32, i32
  }
  func.func @transform_2(%arg0: i32, %arg1: i32) -> (i32, i32) {
    %c0_i32 = arith.constant 0 : i32
    %c0_i32_0 = arith.constant 0 : i32
    %c0_i32_1 = arith.constant 0 : i32
    return %c0_i32, %c0_i32_0 : i32, i32
  }
  func.func @transform_3(%arg0: i32, %arg1: i32) -> (i32, i32) {
    %c0_i32 = arith.constant 0 : i32
    %c0_i32_0 = arith.constant 0 : i32
    return %arg0, %c0_i32 : i32, i32
  }
}

</mosaic_0001>

<llo_original>
// kernel: fc_discriminator_forward.5
$region0: #{fc_discriminator_forward.5}
  #allocation0 [shape = 'u32[]', space=smem, size = 0x4, offset = 0x4, fixed_abs, tag = 'smem constant byte address 0x4 - core index']
  #allocation1 [shape = 'u32[72,128]{1,0:T(1,128)}', space=vmem, size = 0x9000, scoped, tag = 'internal scratch']
  #allocation2 [shape = 'f32[512,128]{1,0:T(8,128)}', space=vmem, size = 0x40000, scoped, tag = 'scratch operand']
  %s0 = inlined_call_operand.vmem [shape: bf16[512,128], index: 0, kind: input, shape index: {}]
  %s1 = inlined_call_operand.vmem [shape: bf16[128,128], index: 1, kind: input, shape index: {}]
  %s2 = inlined_call_operand.vmem [shape: f32[1,128], index: 2, kind: input, shape index: {}]
  %s3 = inlined_call_operand.vmem [shape: bf16[512,128], index: 3, kind: output, shape index: {}]
  %s4 = sld [smem:[#allocation0]]
  $region30: #{fc_discriminator_forward.5} parent=0
    _
  %s6 = ssub.s32 1, %s4
  %s7 = scalar_select 0, %s6, %s4
  // Predicated region
  $region2: #{fc_discriminator_forward.5} parent=0 // pred_check
    _
  $region3: #{fc_discriminator_forward.5} parent=0 // pred_check_branch
    %9 = sbr.rel (0) target = $region5
  $region4: #{fc_discriminator_forward.5} parent=0 // pred_region
    _
  $region5: #{fc_discriminator_forward.5} parent=0 // pred_fallthru
    _
  // Predicated region
  $region6: #{fc_discriminator_forward.5} parent=0 // pred_check
    _
  $region7: #{fc_discriminator_forward.5} parent=0 // pred_check_branch
    %11 = sbr.rel (0) target = $region9
  $region8: #{fc_discriminator_forward.5} parent=0 // pred_region
    _
  $region9: #{fc_discriminator_forward.5} parent=0 // pred_fallthru
    _
  // Predicated region
  $region10: #{fc_discriminator_forward.5} parent=0 // pred_check
    _
  $region11: #{fc_discriminator_forward.5} parent=0 // pred_check_branch
    %13 = sbr.rel (0) target = $region13
  $region12: #{fc_discriminator_forward.5} parent=0 // pred_region
    _
  $region13: #{fc_discriminator_forward.5} parent=0 // pred_fallthru
    _
  %p14 = scmp.eq.s32.totalorder 0, 0
  // Predicated region
  $region14: #{fc_discriminator_forward.5} parent=0 // pred_check
    %p15 = pneg %p14
  $region15: #{fc_discriminator_forward.5} parent=0 // pred_check_branch
    %17 = sbr.rel (%p15) target = $region17
  $region16: #{fc_discriminator_forward.5} parent=0 // pred_region
    %18 = vst [vmem:[#allocation2] sm:$0xff] 0.0
    %19 = vst [vmem:[#allocation2 + $0x8] sm:$0xff] 0.0
    %20 = vst [vmem:[#allocation2 + $0x10] sm:$0xff] 0.0
    %21 = vst [vmem:[#allocation2 + $0x18] sm:$0xff] 0.0
    %22 = vst [vmem:[#allocation2 + $0x20] sm:$0xff] 0.0
    %23 = vst [vmem:[#allocation2 + $0x28] sm:$0xff] 0.0
    %24 = vst [vmem:[#allocation2 + $0x30] sm:$0xff] 0.0
    %25 = vst [vmem:[#allocation2 + $0x38] sm:$0xff] 0.0
    %26 = vst [vmem:[#allocation2 + $0x40] sm:$0xff] 0.0
    %27 = vst [vmem:[#allocation2 + $0x48] sm:$0xff] 0.0
    %28 = vst [vmem:[#allocation2 + $0x50] sm:$0xff] 0.0
    %29 = vst [vmem:[#allocation2 + $0x58] sm:$0xff] 0.0
    %30 = vst [vmem:[#allocation2 + $0x60] sm:$0xff] 0.0
    %31 = vst [vmem:[#allocation2 + $0x68] sm:$0xff] 0.0
    %32 = vst [vmem:[#allocation2 + $0x70] sm:$0xff] 0.0
    %33 = vst [vmem:[#allocation2 + $0x78] sm:$0xff] 0.0
    %34 = vst [vmem:[#allocation2 + $0x80] sm:$0xff] 0.0
    %35 = vst [vmem:[#allocation2 + $0x88] sm:$0xff] 0.0
    %36 = vst [vmem:[#allocation2 + $0x90] sm:$0xff] 0.0
    %37 = vst [vmem:[#allocation2 + $0x98] sm:$0xff] 0.0
    %38 = vst [vmem:[#allocation2 + $0xa0] sm:$0xff] 0.0
    %39 = vst [vmem:[#allocation2 + $0xa8] sm:$0xff] 0.0
    %40 = vst [vmem:[#allocation2 + $0xb0] sm:$0xff] 0.0
    %41 = vst [vmem:[#allocation2 + $0xb8] sm:$0xff] 0.0
    %42 = vst [vmem:[#allocation2 + $0xc0] sm:$0xff] 0.0
    %43 = vst [vmem:[#allocation2 + $0xc8] sm:$0xff] 0.0
    %44 = vst [vmem:[#allocation2 + $0xd0] sm:$0xff] 0.0
    %45 = vst [vmem:[#allocation2 + $0xd8] sm:$0xff] 0.0
    %46 = vst [vmem:[#allocation2 + $0xe0] sm:$0xff] 0.0
    %47 = vst [vmem:[#allocation2 + $0xe8] sm:$0xff] 0.0
    %48 = vst [vmem:[#allocation2 + $0xf0] sm:$0xff] 0.0
    %49 = vst [vmem:[#allocation2 + $0xf8] sm:$0xff] 0.0
    %50 = vst [vmem:[#allocation2 + $0x100] sm:$0xff] 0.0
    %51 = vst [vmem:[#allocation2 + $0x108] sm:$0xff] 0.0
    %52 = vst [vmem:[#allocation2 + $0x110] sm:$0xff] 0.0
    %53 = vst [vmem:[#allocation2 + $0x118] sm:$0xff] 0.0
    %54 = vst [vmem:[#allocation2 + $0x120] sm:$0xff] 0.0
    %55 = vst [vmem:[#allocation2 + $0x128] sm:$0xff] 0.0
    %56 = vst [vmem:[#allocation2 + $0x130] sm:$0xff] 0.0
    %57 = vst [vmem:[#allocation2 + $0x138] sm:$0xff] 0.0
    %58 = vst [vmem:[#allocation2 + $0x140] sm:$0xff] 0.0
    %59 = vst [vmem:[#allocation2 + $0x148] sm:$0xff] 0.0
    %60 = vst [vmem:[#allocation2 + $0x150] sm:$0xff] 0.0
    %61 = vst [vmem:[#allocation2 + $0x158] sm:$0xff] 0.0
    %62 = vst [vmem:[#allocation2 + $0x160] sm:$0xff] 0.0
    %63 = vst [vmem:[#allocation2 + $0x168] sm:$0xff] 0.0
    %64 = vst [vmem:[#allocation2 + $0x170] sm:$0xff] 0.0
    %65 = vst [vmem:[#allocation2 + $0x178] sm:$0xff] 0.0
    %66 = vst [vmem:[#allocation2 + $0x180] sm:$0xff] 0.0
    %67 = vst [vmem:[#allocation2 + $0x188] sm:$0xff] 0.0
    %68 = vst [vmem:[#allocation2 + $0x190] sm:$0xff] 0.0
    %69 = vst [vmem:[#allocation2 + $0x198] sm:$0xff] 0.0
    %70 = vst [vmem:[#allocation2 + $0x1a0] sm:$0xff] 0.0
    %71 = vst [vmem:[#allocation2 + $0x1a8] sm:$0xff] 0.0
    %72 = vst [vmem:[#allocation2 + $0x1b0] sm:$0xff] 0.0
    %73 = vst [vmem:[#allocation2 + $0x1b8] sm:$0xff] 0.0
    %74 = vst [vmem:[#allocation2 + $0x1c0] sm:$0xff] 0.0
    %75 = vst [vmem:[#allocation2 + $0x1c8] sm:$0xff] 0.0
    %76 = vst [vmem:[#allocation2 + $0x1d0] sm:$0xff] 0.0
    %77 = vst [vmem:[#allocation2 + $0x1d8] sm:$0xff] 0.0
    %78 = vst [vmem:[#allocation2 + $0x1e0] sm:$0xff] 0.0
    %79 = vst [vmem:[#allocation2 + $0x1e8] sm:$0xff] 0.0
    %80 = vst [vmem:[#allocation2 + $0x1f0] sm:$0xff] 0.0
    %81 = vst [vmem:[#allocation2 + $0x1f8] sm:$0xff] 0.0
  $region17: #{fc_discriminator_forward.5} parent=0 // pred_fallthru
    _
  %v82 = vld [vmem:[#allocation2] sm:$0xff]
  %v83 = vld [vmem:[#allocation2 + $0x8] sm:$0xff]
  %v84 = vld [vmem:[#allocation2 + $0x10] sm:$0xff]
  %v85 = vld [vmem:[#allocation2 + $0x18] sm:$0xff]
  %v86 = vld [vmem:[#allocation2 + $0x20] sm:$0xff]
  %v87 = vld [vmem:[#allocation2 + $0x28] sm:$0xff]
  %v88 = vld [vmem:[#allocation2 + $0x30] sm:$0xff]
  %v89 = vld [vmem:[#allocation2 + $0x38] sm:$0xff]
  %v90 = vld [vmem:[#allocation2 + $0x40] sm:$0xff]
  %v91 = vld [vmem:[#allocation2 + $0x48] sm:$0xff]
  %v92 = vld [vmem:[#allocation2 + $0x50] sm:$0xff]
  %v93 = vld [vmem:[#allocation2 + $0x58] sm:$0xff]
  %v94 = vld [vmem:[#allocation2 + $0x60] sm:$0xff]
  %v95 = vld [vmem:[#allocation2 + $0x68] sm:$0xff]
  %v96 = vld [vmem:[#allocation2 + $0x70] sm:$0xff]
  %v97 = vld [vmem:[#allocation2 + $0x78] sm:$0xff]
  %v98 = vld [vmem:[#allocation2 + $0x80] sm:$0xff]
  %v99 = vld [vmem:[#allocation2 + $0x88] sm:$0xff]
  %v100 = vld [vmem:[#allocation2 + $0x90] sm:$0xff]
  %v101 = vld [vmem:[#allocation2 + $0x98] sm:$0xff]
  %v102 = vld [vmem:[#allocation2 + $0xa0] sm:$0xff]
  %v103 = vld [vmem:[#allocation2 + $0xa8] sm:$0xff]
  %v104 = vld [vmem:[#allocation2 + $0xb0] sm:$0xff]
  %v105 = vld [vmem:[#allocation2 + $0xb8] sm:$0xff]
  %v106 = vld [vmem:[#allocation2 + $0xc0] sm:$0xff]
  %v107 = vld [vmem:[#allocation2 + $0xc8] sm:$0xff]
  %v108 = vld [vmem:[#allocation2 + $0xd0] sm:$0xff]
  %v109 = vld [vmem:[#allocation2 + $0xd8] sm:$0xff]
  %v110 = vld [vmem:[#allocation2 + $0xe0] sm:$0xff]
  %v111 = vld [vmem:[#allocation2 + $0xe8] sm:$0xff]
  %v112 = vld [vmem:[#allocation2 + $0xf0] sm:$0xff]
  %v113 = vld [vmem:[#allocation2 + $0xf8] sm:$0xff]
  %v114 = vld [vmem:[#allocation2 + $0x100] sm:$0xff]
  %v115 = vld [vmem:[#allocation2 + $0x108] sm:$0xff]
  %v116 = vld [vmem:[#allocation2 + $0x110] sm:$0xff]
  %v117 = vld [vmem:[#allocation2 + $0x118] sm:$0xff]
  %v118 = vld [vmem:[#allocation2 + $0x120] sm:$0xff]
  %v119 = vld [vmem:[#allocation2 + $0x128] sm:$0xff]
  %v120 = vld [vmem:[#allocation2 + $0x130] sm:$0xff]
  %v121 = vld [vmem:[#allocation2 + $0x138] sm:$0xff]
  %v122 = vld [vmem:[#allocation2 + $0x140] sm:$0xff]
  %v123 = vld [vmem:[#allocation2 + $0x148] sm:$0xff]
  %v124 = vld [vmem:[#allocation2 + $0x150] sm:$0xff]
  %v125 = vld [vmem:[#allocation2 + $0x158] sm:$0xff]
  %v126 = vld [vmem:[#allocation2 + $0x160] sm:$0xff]
  %v127 = vld [vmem:[#allocation2 + $0x168] sm:$0xff]
  %v128 = vld [vmem:[#allocation2 + $0x170] sm:$0xff]
  %v129 = vld [vmem:[#allocation2 + $0x178] sm:$0xff]
  %v130 = vld [vmem:[#allocation2 + $0x180] sm:$0xff]
  %v131 = vld [vmem:[#allocation2 + $0x188] sm:$0xff]
  %v132 = vld [vmem:[#allocation2 + $0x190] sm:$0xff]
  %v133 = vld [vmem:[#allocation2 + $0x198] sm:$0xff]
  %v134 = vld [vmem:[#allocation2 + $0x1a0] sm:$0xff]
  %v135 = vld [vmem:[#allocation2 + $0x1a8] sm:$0xff]
  %v136 = vld [vmem:[#allocation2 + $0x1b0] sm:$0xff]
  %v137 = vld [vmem:[#allocation2 + $0x1b8] sm:$0xff]
  %v138 = vld [vmem:[#allocation2 + $0x1c0] sm:$0xff]
  %v139 = vld [vmem:[#allocation2 + $0x1c8] sm:$0xff]
  %v140 = vld [vmem:[#allocation2 + $0x1d0] sm:$0xff]
  %v141 = vld [vmem:[#allocation2 + $0x1d8] sm:$0xff]
  %v142 = vld [vmem:[#allocation2 + $0x1e0] sm:$0xff]
  %v143 = vld [vmem:[#allocation2 + $0x1e8] sm:$0xff]
  %v144 = vld [vmem:[#allocation2 + $0x1f0] sm:$0xff]
  %v145 = vld [vmem:[#allocation2 + $0x1f8] sm:$0xff]
  %v146 = vld [vmem:[%s0] sm:$0xf]
  %v147 = vld [vmem:[%s0 + $0x4] sm:$0xf]
  %v148 = vld [vmem:[%s0 + $0x8] sm:$0xf]
  %v149 = vld [vmem:[%s0 + $0xc] sm:$0xf]
  %v150 = vld [vmem:[%s0 + $0x10] sm:$0xf]
  %v151 = vld [vmem:[%s0 + $0x14] sm:$0xf]
  %v152 = vld [vmem:[%s0 + $0x18] sm:$0xf]
  %v153 = vld [vmem:[%s0 + $0x1c] sm:$0xf]
  %v154 = vld [vmem:[%s0 + $0x20] sm:$0xf]
  %v155 = vld [vmem:[%s0 + $0x24] sm:$0xf]
  %v156 = vld [vmem:[%s0 + $0x28] sm:$0xf]
  %v157 = vld [vmem:[%s0 + $0x2c] sm:$0xf]
  %v158 = vld [vmem:[%s0 + $0x30] sm:$0xf]
  %v159 = vld [vmem:[%s0 + $0x34] sm:$0xf]
  %v160 = vld [vmem:[%s0 + $0x38] sm:$0xf]
  %v161 = vld [vmem:[%s0 + $0x3c] sm:$0xf]
  %v162 = vld [vmem:[%s0 + $0x40] sm:$0xf]
  %v163 = vld [vmem:[%s0 + $0x44] sm:$0xf]
  %v164 = vld [vmem:[%s0 + $0x48] sm:$0xf]
  %v165 = vld [vmem:[%s0 + $0x4c] sm:$0xf]
  %v166 = vld [vmem:[%s0 + $0x50] sm:$0xf]
  %v167 = vld [vmem:[%s0 + $0x54] sm:$0xf]
  %v168 = vld [vmem:[%s0 + $0x58] sm:$0xf]
  %v169 = vld [vmem:[%s0 + $0x5c] sm:$0xf]
  %v170 = vld [vmem:[%s0 + $0x60] sm:$0xf]
  %v171 = vld [vmem:[%s0 + $0x64] sm:$0xf]
  %v172 = vld [vmem:[%s0 + $0x68] sm:$0xf]
  %v173 = vld [vmem:[%s0 + $0x6c] sm:$0xf]
  %v174 = vld [vmem:[%s0 + $0x70] sm:$0xf]
  %v175 = vld [vmem:[%s0 + $0x74] sm:$0xf]
  %v176 = vld [vmem:[%s0 + $0x78] sm:$0xf]
  %v177 = vld [vmem:[%s0 + $0x7c] sm:$0xf]
  %v178 = vld [vmem:[%s0 + $0x80] sm:$0xf]
  %v179 = vld [vmem:[%s0 + $0x84] sm:$0xf]
  %v180 = vld [vmem:[%s0 + $0x88] sm:$0xf]
  %v181 = vld [vmem:[%s0 + $0x8c] sm:$0xf]
  %v182 = vld [vmem:[%s0 + $0x90] sm:$0xf]
  %v183 = vld [vmem:[%s0 + $0x94] sm:$0xf]
  %v184 = vld [vmem:[%s0 + $0x98] sm:$0xf]
  %v185 = vld [vmem:[%s0 + $0x9c] sm:$0xf]
  %v186 = vld [vmem:[%s0 + $0xa0] sm:$0xf]
  %v187 = vld [vmem:[%s0 + $0xa4] sm:$0xf]
  %v188 = vld [vmem:[%s0 + $0xa8] sm:$0xf]
  %v189 = vld [vmem:[%s0 + $0xac] sm:$0xf]
  %v190 = vld [vmem:[%s0 + $0xb0] sm:$0xf]
  %v191 = vld [vmem:[%s0 + $0xb4] sm:$0xf]
  %v192 = vld [vmem:[%s0 + $0xb8] sm:$0xf]
  %v193 = vld [vmem:[%s0 + $0xbc] sm:$0xf]
  %v194 = vld [vmem:[%s0 + $0xc0] sm:$0xf]
  %v195 = vld [vmem:[%s0 + $0xc4] sm:$0xf]
  %v196 = vld [vmem:[%s0 + $0xc8] sm:$0xf]
  %v197 = vld [vmem:[%s0 + $0xcc] sm:$0xf]
  %v198 = vld [vmem:[%s0 + $0xd0] sm:$0xf]
  %v199 = vld [vmem:[%s0 + $0xd4] sm:$0xf]
  %v200 = vld [vmem:[%s0 + $0xd8] sm:$0xf]
  %v201 = vld [vmem:[%s0 + $0xdc] sm:$0xf]
  %v202 = vld [vmem:[%s0 + $0xe0] sm:$0xf]
  %v203 = vld [vmem:[%s0 + $0xe4] sm:$0xf]
  %v204 = vld [vmem:[%s0 + $0xe8] sm:$0xf]
  %v205 = vld [vmem:[%s0 + $0xec] sm:$0xf]
  %v206 = vld [vmem:[%s0 + $0xf0] sm:$0xf]
  %v207 = vld [vmem:[%s0 + $0xf4] sm:$0xf]
  %v208 = vld [vmem:[%s0 + $0xf8] sm:$0xf]
  %v209 = vld [vmem:[%s0 + $0xfc] sm:$0xf]
  %v210 = vld [vmem:[%s1] sm:$0xf]
  %v211 = vld [vmem:[%s1 + $0x4] sm:$0xf]
  %v212 = vld [vmem:[%s1 + $0x8] sm:$0xf]
  %v213 = vld [vmem:[%s1 + $0xc] sm:$0xf]
  %v214 = vld [vmem:[%s1 + $0x10] sm:$0xf]
  %v215 = vld [vmem:[%s1 + $0x14] sm:$0xf]
  %v216 = vld [vmem:[%s1 + $0x18] sm:$0xf]
  %v217 = vld [vmem:[%s1 + $0x1c] sm:$0xf]
  %v218 = vld [vmem:[%s1 + $0x20] sm:$0xf]
  %v219 = vld [vmem:[%s1 + $0x24] sm:$0xf]
  %v220 = vld [vmem:[%s1 + $0x28] sm:$0xf]
  %v221 = vld [vmem:[%s1 + $0x2c] sm:$0xf]
  %v222 = vld [vmem:[%s1 + $0x30] sm:$0xf]
  %v223 = vld [vmem:[%s1 + $0x34] sm:$0xf]
  %v224 = vld [vmem:[%s1 + $0x38] sm:$0xf]
  %v225 = vld [vmem:[%s1 + $0x3c] sm:$0xf]
  %v290 = vunpack.c.l.b16 %v146
  %v291 = vunpack.c.l.b16 %v147
  %v292 = vunpack.c.l.b16 %v148
  %v293 = vunpack.c.l.b16 %v149
  %v294 = vunpack.c.l.b16 %v150
  %v295 = vunpack.c.l.b16 %v151
  %v296 = vunpack.c.l.b16 %v152
  %v297 = vunpack.c.l.b16 %v153
  %v298 = vunpack.c.l.b16 %v154
  %v299 = vunpack.c.l.b16 %v155
  %v300 = vunpack.c.l.b16 %v156
  %v301 = vunpack.c.l.b16 %v157
  %v302 = vunpack.c.l.b16 %v158
  %v303 = vunpack.c.l.b16 %v159
  %v304 = vunpack.c.l.b16 %v160
  %v305 = vunpack.c.l.b16 %v161
  %v306 = vunpack.c.l.b16 %v162
  %v307 = vunpack.c.l.b16 %v163
  %v308 = vunpack.c.l.b16 %v164
  %v309 = vunpack.c.l.b16 %v165
  %v310 = vunpack.c.l.b16 %v166
  %v311 = vunpack.c.l.b16 %v167
  %v312 = vunpack.c.l.b16 %v168
  %v313 = vunpack.c.l.b16 %v169
  %v314 = vunpack.c.l.b16 %v170
  %v315 = vunpack.c.l.b16 %v171
  %v316 = vunpack.c.l.b16 %v172
  %v317 = vunpack.c.l.b16 %v173
  %v318 = vunpack.c.l.b16 %v174
  %v319 = vunpack.c.l.b16 %v175
  %v320 = vunpack.c.l.b16 %v176
  %v321 = vunpack.c.l.b16 %v177
  %v322 = vunpack.c.l.b16 %v178
  %v323 = vunpack.c.l.b16 %v179
  %v324 = vunpack.c.l.b16 %v180
  %v325 = vunpack.c.l.b16 %v181
  %v326 = vunpack.c.l.b16 %v182
  %v327 = vunpack.c.l.b16 %v183
  %v328 = vunpack.c.l.b16 %v184
  %v329 = vunpack.c.l.b16 %v185
  %v330 = vunpack.c.l.b16 %v186
  %v331 = vunpack.c.l.b16 %v187
  %v332 = vunpack.c.l.b16 %v188
  %v333 = vunpack.c.l.b16 %v189
  %v334 = vunpack.c.l.b16 %v190
  %v335 = vunpack.c.l.b16 %v191
  %v336 = vunpack.c.l.b16 %v192
  %v337 = vunpack.c.l.b16 %v193
  %v338 = vunpack.c.l.b16 %v194
  %v339 = vunpack.c.l.b16 %v195
  %v340 = vunpack.c.l.b16 %v196
  %v341 = vunpack.c.l.b16 %v197
  %v342 = vunpack.c.l.b16 %v198
  %v343 = vunpack.c.l.b16 %v199
  %v344 = vunpack.c.l.b16 %v200
  %v345 = vunpack.c.l.b16 %v201
  %v346 = vunpack.c.l.b16 %v202
  %v347 = vunpack.c.l.b16 %v203
  %v348 = vunpack.c.l.b16 %v204
  %v349 = vunpack.c.l.b16 %v205
  %v350 = vunpack.c.l.b16 %v206
  %v351 = vunpack.c.l.b16 %v207
  %v352 = vunpack.c.l.b16 %v208
  %v353 = vunpack.c.l.b16 %v209
  %v354 = vpack.c.b16 %v291, %v290
  %v355 = vpack.c.b16 %v293, %v292
  %v356 = vpack.c.b16 %v295, %v294
  %v357 = vpack.c.b16 %v297, %v296
  %v358 = vpack.c.b16 %v299, %v298
  %v359 = vpack.c.b16 %v301, %v300
  %v360 = vpack.c.b16 %v303, %v302
  %v361 = vpack.c.b16 %v305, %v304
  %v362 = vpack.c.b16 %v307, %v306
  %v363 = vpack.c.b16 %v309, %v308
  %v364 = vpack.c.b16 %v311, %v310
  %v365 = vpack.c.b16 %v313, %v312
  %v366 = vpack.c.b16 %v315, %v314
  %v367 = vpack.c.b16 %v317, %v316
  %v368 = vpack.c.b16 %v319, %v318
  %v369 = vpack.c.b16 %v321, %v320
  %v370 = vpack.c.b16 %v323, %v322
  %v371 = vpack.c.b16 %v325, %v324
  %v372 = vpack.c.b16 %v327, %v326
  %v373 = vpack.c.b16 %v329, %v328
  %v374 = vpack.c.b16 %v331, %v330
  %v375 = vpack.c.b16 %v333, %v332
  %v376 = vpack.c.b16 %v335, %v334
  %v377 = vpack.c.b16 %v337, %v336
  %v378 = vpack.c.b16 %v339, %v338
  %v379 = vpack.c.b16 %v341, %v340
  %v380 = vpack.c.b16 %v343, %v342
  %v381 = vpack.c.b16 %v345, %v344
  %v382 = vpack.c.b16 %v347, %v346
  %v383 = vpack.c.b16 %v349, %v348
  %v384 = vpack.c.b16 %v351, %v350
  %v385 = vpack.c.b16 %v353, %v352
  %v434 = vunpack.c.l.b16 %v210
  %v435 = vunpack.c.l.b16 %v211
  %v436 = vunpack.c.l.b16 %v212
  %v437 = vunpack.c.l.b16 %v213
  %v438 = vunpack.c.l.b16 %v214
  %v439 = vunpack.c.l.b16 %v215
  %v440 = vunpack.c.l.b16 %v216
  %v441 = vunpack.c.l.b16 %v217
  %v442 = vunpack.c.l.b16 %v218
  %v443 = vunpack.c.l.b16 %v219
  %v444 = vunpack.c.l.b16 %v220
  %v445 = vunpack.c.l.b16 %v221
  %v446 = vunpack.c.l.b16 %v222
  %v447 = vunpack.c.l.b16 %v223
  %v448 = vunpack.c.l.b16 %v224
  %v449 = vunpack.c.l.b16 %v225
  %v450 = vpack.c.b16 %v435, %v434
  %v451 = vpack.c.b16 %v437, %v436
  %v452 = vpack.c.b16 %v439, %v438
  %v453 = vpack.c.b16 %v441, %v440
  %v454 = vpack.c.b16 %v443, %v442
  %v455 = vpack.c.b16 %v445, %v444
  %v456 = vpack.c.b16 %v447, %v446
  %v457 = vpack.c.b16 %v449, %v448
  %466 = vmatpush.bf16.msra.mxu0 %v457
  %467 = vmatpush.bf16.msra.mxu0 %v456
  %468 = vmatpush.bf16.msra.mxu0 %v455
  %469 = vmatpush.bf16.msra.mxu0 %v454
  %470 = vmatpush.bf16.msra.mxu0 %v453
  %471 = vmatpush.bf16.msra.mxu0 %v452
  %472 = vmatpush.bf16.msra.mxu0 %v451
  %473 = vmatpush.bf16.msra.mxu0 %v450
  %474 = vmatmul.bf16.gmra.mxu0 %v354
  %v475 = vpop.f32.mrf.mxu0
  %v476 = vadd.f32 0.0, %v475
  %v477 = vpop.f32.mrf.mxu0
  %v478 = vadd.f32 0.0, %v477
  %479 = vmatmul.bf16.gmra.mxu0 %v355
  %v480 = vpop.f32.mrf.mxu0
  %v481 = vadd.f32 0.0, %v480
  %v482 = vpop.f32.mrf.mxu0
  %v483 = vadd.f32 0.0, %v482
  %484 = vmatmul.bf16.gmra.mxu0 %v356
  %v485 = vpop.f32.mrf.mxu0
  %v486 = vadd.f32 0.0, %v485
  %v487 = vpop.f32.mrf.mxu0
  %v488 = vadd.f32 0.0, %v487
  %489 = vmatmul.bf16.gmra.mxu0 %v357
  %v490 = vpop.f32.mrf.mxu0
  %v491 = vadd.f32 0.0, %v490
  %v492 = vpop.f32.mrf.mxu0
  %v493 = vadd.f32 0.0, %v492
  %494 = vmatmul.bf16.gmra.mxu0 %v358
  %v495 = vpop.f32.mrf.mxu0
  %v496 = vadd.f32 0.0, %v495
  %v497 = vpop.f32.mrf.mxu0
  %v498 = vadd.f32 0.0, %v497
  %499 = vmatmul.bf16.gmra.mxu0 %v359
  %v500 = vpop.f32.mrf.mxu0
  %v501 = vadd.f32 0.0, %v500
  %v502 = vpop.f32.mrf.mxu0
  %v503 = vadd.f32 0.0, %v502
  %504 = vmatmul.bf16.gmra.mxu0 %v360
  %v505 = vpop.f32.mrf.mxu0
  %v506 = vadd.f32 0.0, %v505
  %v507 = vpop.f32.mrf.mxu0
  %v508 = vadd.f32 0.0, %v507
  %509 = vmatmul.bf16.gmra.mxu0 %v361
  %v510 = vpop.f32.mrf.mxu0
  %v511 = vadd.f32 0.0, %v510
  %v512 = vpop.f32.mrf.mxu0
  %v513 = vadd.f32 0.0, %v512
  %514 = vmatmul.bf16.gmra.mxu0 %v362
  %v515 = vpop.f32.mrf.mxu0
  %v516 = vadd.f32 0.0, %v515
  %v517 = vpop.f32.mrf.mxu0
  %v518 = vadd.f32 0.0, %v517
  %519 = vmatmul.bf16.gmra.mxu0 %v363
  %v520 = vpop.f32.mrf.mxu0
  %v521 = vadd.f32 0.0, %v520
  %v522 = vpop.f32.mrf.mxu0
  %v523 = vadd.f32 0.0, %v522
  %524 = vmatmul.bf16.gmra.mxu0 %v364
  %v525 = vpop.f32.mrf.mxu0
  %v526 = vadd.f32 0.0, %v525
  %v527 = vpop.f32.mrf.mxu0
  %v528 = vadd.f32 0.0, %v527
  %529 = vmatmul.bf16.gmra.mxu0 %v365
  %v530 = vpop.f32.mrf.mxu0
  %v531 = vadd.f32 0.0, %v530
  %v532 = vpop.f32.mrf.mxu0
  %v533 = vadd.f32 0.0, %v532
  %534 = vmatmul.bf16.gmra.mxu0 %v366
  %v535 = vpop.f32.mrf.mxu0
  %v536 = vadd.f32 0.0, %v535
  %v537 = vpop.f32.mrf.mxu0
  %v538 = vadd.f32 0.0, %v537
  %539 = vmatmul.bf16.gmra.mxu0 %v367
  %v540 = vpop.f32.mrf.mxu0
  %v541 = vadd.f32 0.0, %v540
  %v542 = vpop.f32.mrf.mxu0
  %v543 = vadd.f32 0.0, %v542
  %544 = vmatmul.bf16.gmra.mxu0 %v368
  %v545 = vpop.f32.mrf.mxu0
  %v546 = vadd.f32 0.0, %v545
  %v547 = vpop.f32.mrf.mxu0
  %v548 = vadd.f32 0.0, %v547
  %549 = vmatmul.bf16.gmra.mxu0 %v369
  %v550 = vpop.f32.mrf.mxu0
  %v551 = vadd.f32 0.0, %v550
  %v552 = vpop.f32.mrf.mxu0
  %v553 = vadd.f32 0.0, %v552
  %554 = vmatmul.bf16.gmra.mxu0 %v370
  %v555 = vpop.f32.mrf.mxu0
  %v556 = vadd.f32 0.0, %v555
  %v557 = vpop.f32.mrf.mxu0
  %v558 = vadd.f32 0.0, %v557
  %559 = vmatmul.bf16.gmra.mxu0 %v371
  %v560 = vpop.f32.mrf.mxu0
  %v561 = vadd.f32 0.0, %v560
  %v562 = vpop.f32.mrf.mxu0
  %v563 = vadd.f32 0.0, %v562
  %564 = vmatmul.bf16.gmra.mxu0 %v372
  %v565 = vpop.f32.mrf.mxu0
  %v566 = vadd.f32 0.0, %v565
  %v567 = vpop.f32.mrf.mxu0
  %v568 = vadd.f32 0.0, %v567
  %569 = vmatmul.bf16.gmra.mxu0 %v373
  %v570 = vpop.f32.mrf.mxu0
  %v571 = vadd.f32 0.0, %v570
  %v572 = vpop.f32.mrf.mxu0
  %v573 = vadd.f32 0.0, %v572
  %574 = vmatmul.bf16.gmra.mxu0 %v374
  %v575 = vpop.f32.mrf.mxu0
  %v576 = vadd.f32 0.0, %v575
  %v577 = vpop.f32.mrf.mxu0
  %v578 = vadd.f32 0.0, %v577
  %579 = vmatmul.bf16.gmra.mxu0 %v375
  %v580 = vpop.f32.mrf.mxu0
  %v581 = vadd.f32 0.0, %v580
  %v582 = vpop.f32.mrf.mxu0
  %v583 = vadd.f32 0.0, %v582
  %584 = vmatmul.bf16.gmra.mxu0 %v376
  %v585 = vpop.f32.mrf.mxu0
  %v586 = vadd.f32 0.0, %v585
  %v587 = vpop.f32.mrf.mxu0
  %v588 = vadd.f32 0.0, %v587
  %589 = vmatmul.bf16.gmra.mxu0 %v377
  %v590 = vpop.f32.mrf.mxu0
  %v591 = vadd.f32 0.0, %v590
  %v592 = vpop.f32.mrf.mxu0
  %v593 = vadd.f32 0.0, %v592
  %594 = vmatmul.bf16.gmra.mxu0 %v378
  %v595 = vpop.f32.mrf.mxu0
  %v596 = vadd.f32 0.0, %v595
  %v597 = vpop.f32.mrf.mxu0
  %v598 = vadd.f32 0.0, %v597
  %599 = vmatmul.bf16.gmra.mxu0 %v379
  %v600 = vpop.f32.mrf.mxu0
  %v601 = vadd.f32 0.0, %v600
  %v602 = vpop.f32.mrf.mxu0
  %v603 = vadd.f32 0.0, %v602
  %604 = vmatmul.bf16.gmra.mxu0 %v380
  %v605 = vpop.f32.mrf.mxu0
  %v606 = vadd.f32 0.0, %v605
  %v607 = vpop.f32.mrf.mxu0
  %v608 = vadd.f32 0.0, %v607
  %609 = vmatmul.bf16.gmra.mxu0 %v381
  %v610 = vpop.f32.mrf.mxu0
  %v611 = vadd.f32 0.0, %v610
  %v612 = vpop.f32.mrf.mxu0
  %v613 = vadd.f32 0.0, %v612
  %614 = vmatmul.bf16.gmra.mxu0 %v382
  %v615 = vpop.f32.mrf.mxu0
  %v616 = vadd.f32 0.0, %v615
  %v617 = vpop.f32.mrf.mxu0
  %v618 = vadd.f32 0.0, %v617
  %619 = vmatmul.bf16.gmra.mxu0 %v383
  %v620 = vpop.f32.mrf.mxu0
  %v621 = vadd.f32 0.0, %v620
  %v622 = vpop.f32.mrf.mxu0
  %v623 = vadd.f32 0.0, %v622
  %624 = vmatmul.bf16.gmra.mxu0 %v384
  %v625 = vpop.f32.mrf.mxu0
  %v626 = vadd.f32 0.0, %v625
  %v627 = vpop.f32.mrf.mxu0
  %v628 = vadd.f32 0.0, %v627
  %629 = vmatmul.bf16.gmra.mxu0 %v385
  %v630 = vpop.f32.mrf.mxu0
  %v631 = vadd.f32 0.0, %v630
  %v632 = vpop.f32.mrf.mxu0
  %v633 = vadd.f32 0.0, %v632
  %634 = vdwg.mxu0
  %v635 = vadd.f32 %v82, %v476
  %v636 = vadd.f32 %v83, %v478
  %v637 = vadd.f32 %v84, %v481
  %v638 = vadd.f32 %v85, %v483
  %v639 = vadd.f32 %v86, %v486
  %v640 = vadd.f32 %v87, %v488
  %v641 = vadd.f32 %v88, %v491
  %v642 = vadd.f32 %v89, %v493
  %v643 = vadd.f32 %v90, %v496
  %v644 = vadd.f32 %v91, %v498
  %v645 = vadd.f32 %v92, %v501
  %v646 = vadd.f32 %v93, %v503
  %v647 = vadd.f32 %v94, %v506
  %v648 = vadd.f32 %v95, %v508
  %v649 = vadd.f32 %v96, %v511
  %v650 = vadd.f32 %v97, %v513
  %v651 = vadd.f32 %v98, %v516
  %v652 = vadd.f32 %v99, %v518
  %v653 = vadd.f32 %v100, %v521
  %v654 = vadd.f32 %v101, %v523
  %v655 = vadd.f32 %v102, %v526
  %v656 = vadd.f32 %v103, %v528
  %v657 = vadd.f32 %v104, %v531
  %v658 = vadd.f32 %v105, %v533
  %v659 = vadd.f32 %v106, %v536
  %v660 = vadd.f32 %v107, %v538
  %v661 = vadd.f32 %v108, %v541
  %v662 = vadd.f32 %v109, %v543
  %v663 = vadd.f32 %v110, %v546
  %v664 = vadd.f32 %v111, %v548
  %v665 = vadd.f32 %v112, %v551
  %v666 = vadd.f32 %v113, %v553
  %v667 = vadd.f32 %v114, %v556
  %v668 = vadd.f32 %v115, %v558
  %v669 = vadd.f32 %v116, %v561
  %v670 = vadd.f32 %v117, %v563
  %v671 = vadd.f32 %v118, %v566
  %v672 = vadd.f32 %v119, %v568
  %v673 = vadd.f32 %v120, %v571
  %v674 = vadd.f32 %v121, %v573
  %v675 = vadd.f32 %v122, %v576
  %v676 = vadd.f32 %v123, %v578
  %v677 = vadd.f32 %v124, %v581
  %v678 = vadd.f32 %v125, %v583
  %v679 = vadd.f32 %v126, %v586
  %v680 = vadd.f32 %v127, %v588
  %v681 = vadd.f32 %v128, %v591
  %v682 = vadd.f32 %v129, %v593
  %v683 = vadd.f32 %v130, %v596
  %v684 = vadd.f32 %v131, %v598
  %v685 = vadd.f32 %v132, %v601
  %v686 = vadd.f32 %v133, %v603
  %v687 = vadd.f32 %v134, %v606
  %v688 = vadd.f32 %v135, %v608
  %v689 = vadd.f32 %v136, %v611
  %v690 = vadd.f32 %v137, %v613
  %v691 = vadd.f32 %v138, %v616
  %v692 = vadd.f32 %v139, %v618
  %v693 = vadd.f32 %v140, %v621
  %v694 = vadd.f32 %v141, %v623
  %v695 = vadd.f32 %v142, %v626
  %v696 = vadd.f32 %v143, %v628
  %v697 = vadd.f32 %v144, %v631
  %v698 = vadd.f32 %v145, %v633
  %699 = vst [vmem:[#allocation2] sm:$0xff] %v635
  %700 = vst [vmem:[#allocation2 + $0x8] sm:$0xff] %v636
  %701 = vst [vmem:[#allocation2 + $0x10] sm:$0xff] %v637
  %702 = vst [vmem:[#allocation2 + $0x18] sm:$0xff] %v638
  %703 = vst [vmem:[#allocation2 + $0x20] sm:$0xff] %v639
  %704 = vst [vmem:[#allocation2 + $0x28] sm:$0xff] %v640
  %705 = vst [vmem:[#allocation2 + $0x30] sm:$0xff] %v641
  %706 = vst [vmem:[#allocation2 + $0x38] sm:$0xff] %v642
  %707 = vst [vmem:[#allocation2 + $0x40] sm:$0xff] %v643
  %708 = vst [vmem:[#allocation2 + $0x48] sm:$0xff] %v644
  %709 = vst [vmem:[#allocation2 + $0x50] sm:$0xff] %v645
  %710 = vst [vmem:[#allocation2 + $0x58] sm:$0xff] %v646
  %711 = vst [vmem:[#allocation2 + $0x60] sm:$0xff] %v647
  %712 = vst [vmem:[#allocation2 + $0x68] sm:$0xff] %v648
  %713 = vst [vmem:[#allocation2 + $0x70] sm:$0xff] %v649
  %714 = vst [vmem:[#allocation2 + $0x78] sm:$0xff] %v650
  %715 = vst [vmem:[#allocation2 + $0x80] sm:$0xff] %v651
  %716 = vst [vmem:[#allocation2 + $0x88] sm:$0xff] %v652
  %717 = vst [vmem:[#allocation2 + $0x90] sm:$0xff] %v653
  %718 = vst [vmem:[#allocation2 + $0x98] sm:$0xff] %v654
  %719 = vst [vmem:[#allocation2 + $0xa0] sm:$0xff] %v655
  %720 = vst [vmem:[#allocation2 + $0xa8] sm:$0xff] %v656
  %721 = vst [vmem:[#allocation2 + $0xb0] sm:$0xff] %v657
  %722 = vst [vmem:[#allocation2 + $0xb8] sm:$0xff] %v658
  %723 = vst [vmem:[#allocation2 + $0xc0] sm:$0xff] %v659
  %724 = vst [vmem:[#allocation2 + $0xc8] sm:$0xff] %v660
  %725 = vst [vmem:[#allocation2 + $0xd0] sm:$0xff] %v661
  %726 = vst [vmem:[#allocation2 + $0xd8] sm:$0xff] %v662
  %727 = vst [vmem:[#allocation2 + $0xe0] sm:$0xff] %v663
  %728 = vst [vmem:[#allocation2 + $0xe8] sm:$0xff] %v664
  %729 = vst [vmem:[#allocation2 + $0xf0] sm:$0xff] %v665
  %730 = vst [vmem:[#allocation2 + $0xf8] sm:$0xff] %v666
  %731 = vst [vmem:[#allocation2 + $0x100] sm:$0xff] %v667
  %732 = vst [vmem:[#allocation2 + $0x108] sm:$0xff] %v668
  %733 = vst [vmem:[#allocation2 + $0x110] sm:$0xff] %v669
  %734 = vst [vmem:[#allocation2 + $0x118] sm:$0xff] %v670
  %735 = vst [vmem:[#allocation2 + $0x120] sm:$0xff] %v671
  %736 = vst [vmem:[#allocation2 + $0x128] sm:$0xff] %v672
  %737 = vst [vmem:[#allocation2 + $0x130] sm:$0xff] %v673
  %738 = vst [vmem:[#allocation2 + $0x138] sm:$0xff] %v674
  %739 = vst [vmem:[#allocation2 + $0x140] sm:$0xff] %v675
  %740 = vst [vmem:[#allocation2 + $0x148] sm:$0xff] %v676
  %741 = vst [vmem:[#allocation2 + $0x150] sm:$0xff] %v677
  %742 = vst [vmem:[#allocation2 + $0x158] sm:$0xff] %v678
  %743 = vst [vmem:[#allocation2 + $0x160] sm:$0xff] %v679
  %744 = vst [vmem:[#allocation2 + $0x168] sm:$0xff] %v680
  %745 = vst [vmem:[#allocation2 + $0x170] sm:$0xff] %v681
  %746 = vst [vmem:[#allocation2 + $0x178] sm:$0xff] %v682
  %747 = vst [vmem:[#allocation2 + $0x180] sm:$0xff] %v683
  %748 = vst [vmem:[#allocation2 + $0x188] sm:$0xff] %v684
  %749 = vst [vmem:[#allocation2 + $0x190] sm:$0xff] %v685
  %750 = vst [vmem:[#allocation2 + $0x198] sm:$0xff] %v686
  %751 = vst [vmem:[#allocation2 + $0x1a0] sm:$0xff] %v687
  %752 = vst [vmem:[#allocation2 + $0x1a8] sm:$0xff] %v688
  %753 = vst [vmem:[#allocation2 + $0x1b0] sm:$0xff] %v689
  %754 = vst [vmem:[#allocation2 + $0x1b8] sm:$0xff] %v690
  %755 = vst [vmem:[#allocation2 + $0x1c0] sm:$0xff] %v691
  %756 = vst [vmem:[#allocation2 + $0x1c8] sm:$0xff] %v692
  %757 = vst [vmem:[#allocation2 + $0x1d0] sm:$0xff] %v693
  %758 = vst [vmem:[#allocation2 + $0x1d8] sm:$0xff] %v694
  %759 = vst [vmem:[#allocation2 + $0x1e0] sm:$0xff] %v695
  %760 = vst [vmem:[#allocation2 + $0x1e8] sm:$0xff] %v696
  %761 = vst [vmem:[#allocation2 + $0x1f0] sm:$0xff] %v697
  %762 = vst [vmem:[#allocation2 + $0x1f8] sm:$0xff] %v698
  // Predicated region
  $region18: #{fc_discriminator_forward.5} parent=0 // pred_check
    %p763 = pneg %p14
  $region19: #{fc_discriminator_forward.5} parent=0 // pred_check_branch
    %765 = sbr.rel (%p763) target = $region21
  $region20: #{fc_discriminator_forward.5} parent=0 // pred_region
    %v766 = vld [vmem:[#allocation2] sm:$0xff]
    %v767 = vld [vmem:[#allocation2 + $0x8] sm:$0xff]
    %v768 = vld [vmem:[#allocation2 + $0x10] sm:$0xff]
    %v769 = vld [vmem:[#allocation2 + $0x18] sm:$0xff]
    %v770 = vld [vmem:[#allocation2 + $0x20] sm:$0xff]
    %v771 = vld [vmem:[#allocation2 + $0x28] sm:$0xff]
    %v772 = vld [vmem:[#allocation2 + $0x30] sm:$0xff]
    %v773 = vld [vmem:[#allocation2 + $0x38] sm:$0xff]
    %v774 = vld [vmem:[#allocation2 + $0x40] sm:$0xff]
    %v775 = vld [vmem:[#allocation2 + $0x48] sm:$0xff]
    %v776 = vld [vmem:[#allocation2 + $0x50] sm:$0xff]
    %v777 = vld [vmem:[#allocation2 + $0x58] sm:$0xff]
    %v778 = vld [vmem:[#allocation2 + $0x60] sm:$0xff]
    %v779 = vld [vmem:[#allocation2 + $0x68] sm:$0xff]
    %v780 = vld [vmem:[#allocation2 + $0x70] sm:$0xff]
    %v781 = vld [vmem:[#allocation2 + $0x78] sm:$0xff]
    %v782 = vld [vmem:[#allocation2 + $0x80] sm:$0xff]
    %v783 = vld [vmem:[#allocation2 + $0x88] sm:$0xff]
    %v784 = vld [vmem:[#allocation2 + $0x90] sm:$0xff]
    %v785 = vld [vmem:[#allocation2 + $0x98] sm:$0xff]
    %v786 = vld [vmem:[#allocation2 + $0xa0] sm:$0xff]
    %v787 = vld [vmem:[#allocation2 + $0xa8] sm:$0xff]
    %v788 = vld [vmem:[#allocation2 + $0xb0] sm:$0xff]
    %v789 = vld [vmem:[#allocation2 + $0xb8] sm:$0xff]
    %v790 = vld [vmem:[#allocation2 + $0xc0] sm:$0xff]
    %v791 = vld [vmem:[#allocation2 + $0xc8] sm:$0xff]
    %v792 = vld [vmem:[#allocation2 + $0xd0] sm:$0xff]
    %v793 = vld [vmem:[#allocation2 + $0xd8] sm:$0xff]
    %v794 = vld [vmem:[#allocation2 + $0xe0] sm:$0xff]
    %v795 = vld [vmem:[#allocation2 + $0xe8] sm:$0xff]
    %v796 = vld [vmem:[#allocation2 + $0xf0] sm:$0xff]
    %v797 = vld [vmem:[#allocation2 + $0xf8] sm:$0xff]
    %v798 = vld [vmem:[#allocation2 + $0x100] sm:$0xff]
    %v799 = vld [vmem:[#allocation2 + $0x108] sm:$0xff]
    %v800 = vld [vmem:[#allocation2 + $0x110] sm:$0xff]
    %v801 = vld [vmem:[#allocation2 + $0x118] sm:$0xff]
    %v802 = vld [vmem:[#allocation2 + $0x120] sm:$0xff]
    %v803 = vld [vmem:[#allocation2 + $0x128] sm:$0xff]
    %v804 = vld [vmem:[#allocation2 + $0x130] sm:$0xff]
    %v805 = vld [vmem:[#allocation2 + $0x138] sm:$0xff]
    %v806 = vld [vmem:[#allocation2 + $0x140] sm:$0xff]
    %v807 = vld [vmem:[#allocation2 + $0x148] sm:$0xff]
    %v808 = vld [vmem:[#allocation2 + $0x150] sm:$0xff]
    %v809 = vld [vmem:[#allocation2 + $0x158] sm:$0xff]
    %v810 = vld [vmem:[#allocation2 + $0x160] sm:$0xff]
    %v811 = vld [vmem:[#allocation2 + $0x168] sm:$0xff]
    %v812 = vld [vmem:[#allocation2 + $0x170] sm:$0xff]
    %v813 = vld [vmem:[#allocation2 + $0x178] sm:$0xff]
    %v814 = vld [vmem:[#allocation2 + $0x180] sm:$0xff]
    %v815 = vld [vmem:[#allocation2 + $0x188] sm:$0xff]
    %v816 = vld [vmem:[#allocation2 + $0x190] sm:$0xff]
    %v817 = vld [vmem:[#allocation2 + $0x198] sm:$0xff]
    %v818 = vld [vmem:[#allocation2 + $0x1a0] sm:$0xff]
    %v819 = vld [vmem:[#allocation2 + $0x1a8] sm:$0xff]
    %v820 = vld [vmem:[#allocation2 + $0x1b0] sm:$0xff]
    %v821 = vld [vmem:[#allocation2 + $0x1b8] sm:$0xff]
    %v822 = vld [vmem:[#allocation2 + $0x1c0] sm:$0xff]
    %v823 = vld [vmem:[#allocation2 + $0x1c8] sm:$0xff]
    %v824 = vld [vmem:[#allocation2 + $0x1d0] sm:$0xff]
    %v825 = vld [vmem:[#allocation2 + $0x1d8] sm:$0xff]
    %v826 = vld [vmem:[#allocation2 + $0x1e0] sm:$0xff]
    %v827 = vld [vmem:[#allocation2 + $0x1e8] sm:$0xff]
    %v828 = vld [vmem:[#allocation2 + $0x1f0] sm:$0xff]
    %v829 = vld [vmem:[#allocation2 + $0x1f8] sm:$0xff]
    %v830 = vld [vmem:[%s2] sm:$0x1]
    %v832 = vperm.slane %v830, 0
    %v834 = vadd.f32 %v766, %v832
    %v835 = vadd.f32 %v767, %v832
    %v836 = vadd.f32 %v768, %v832
    %v837 = vadd.f32 %v769, %v832
    %v838 = vadd.f32 %v770, %v832
    %v839 = vadd.f32 %v771, %v832
    %v840 = vadd.f32 %v772, %v832
    %v841 = vadd.f32 %v773, %v832
    %v842 = vadd.f32 %v774, %v832
    %v843 = vadd.f32 %v775, %v832
    %v844 = vadd.f32 %v776, %v832
    %v845 = vadd.f32 %v777, %v832
    %v846 = vadd.f32 %v778, %v832
    %v847 = vadd.f32 %v779, %v832
    %v848 = vadd.f32 %v780, %v832
    %v849 = vadd.f32 %v781, %v832
    %v850 = vadd.f32 %v782, %v832
    %v851 = vadd.f32 %v783, %v832
    %v852 = vadd.f32 %v784, %v832
    %v853 = vadd.f32 %v785, %v832
    %v854 = vadd.f32 %v786, %v832
    %v855 = vadd.f32 %v787, %v832
    %v856 = vadd.f32 %v788, %v832
    %v857 = vadd.f32 %v789, %v832
    %v858 = vadd.f32 %v790, %v832
    %v859 = vadd.f32 %v791, %v832
    %v860 = vadd.f32 %v792, %v832
    %v861 = vadd.f32 %v793, %v832
    %v862 = vadd.f32 %v794, %v832
    %v863 = vadd.f32 %v795, %v832
    %v864 = vadd.f32 %v796, %v832
    %v865 = vadd.f32 %v797, %v832
    %v866 = vadd.f32 %v798, %v832
    %v867 = vadd.f32 %v799, %v832
    %v868 = vadd.f32 %v800, %v832
    %v869 = vadd.f32 %v801, %v832
    %v870 = vadd.f32 %v802, %v832
    %v871 = vadd.f32 %v803, %v832
    %v872 = vadd.f32 %v804, %v832
    %v873 = vadd.f32 %v805, %v832
    %v874 = vadd.f32 %v806, %v832
    %v875 = vadd.f32 %v807, %v832
    %v876 = vadd.f32 %v808, %v832
    %v877 = vadd.f32 %v809, %v832
    %v878 = vadd.f32 %v810, %v832
    %v879 = vadd.f32 %v811, %v832
    %v880 = vadd.f32 %v812, %v832
    %v881 = vadd.f32 %v813, %v832
    %v882 = vadd.f32 %v814, %v832
    %v883 = vadd.f32 %v815, %v832
    %v884 = vadd.f32 %v816, %v832
    %v885 = vadd.f32 %v817, %v832
    %v886 = vadd.f32 %v818, %v832
    %v887 = vadd.f32 %v819, %v832
    %v888 = vadd.f32 %v820, %v832
    %v889 = vadd.f32 %v821, %v832
    %v890 = vadd.f32 %v822, %v832
    %v891 = vadd.f32 %v823, %v832
    %v892 = vadd.f32 %v824, %v832
    %v893 = vadd.f32 %v825, %v832
    %v894 = vadd.f32 %v826, %v832
    %v895 = vadd.f32 %v827, %v832
    %v896 = vadd.f32 %v828, %v832
    %v897 = vadd.f32 %v829, %v832
    %vm898 = vcmp.gt.f32.partialorder %v834, 0.0
    %vm899 = vcmp.gt.f32.partialorder %v835, 0.0
    %vm900 = vcmp.gt.f32.partialorder %v836, 0.0
    %vm901 = vcmp.gt.f32.partialorder %v837, 0.0
    %vm902 = vcmp.gt.f32.partialorder %v838, 0.0
    %vm903 = vcmp.gt.f32.partialorder %v839, 0.0
    %vm904 = vcmp.gt.f32.partialorder %v840, 0.0
    %vm905 = vcmp.gt.f32.partialorder %v841, 0.0
    %vm906 = vcmp.gt.f32.partialorder %v842, 0.0
    %vm907 = vcmp.gt.f32.partialorder %v843, 0.0
    %vm908 = vcmp.gt.f32.partialorder %v844, 0.0
    %vm909 = vcmp.gt.f32.partialorder %v845, 0.0
    %vm910 = vcmp.gt.f32.partialorder %v846, 0.0
    %vm911 = vcmp.gt.f32.partialorder %v847, 0.0
    %vm912 = vcmp.gt.f32.partialorder %v848, 0.0
    %vm913 = vcmp.gt.f32.partialorder %v849, 0.0
    %vm914 = vcmp.gt.f32.partialorder %v850, 0.0
    %vm915 = vcmp.gt.f32.partialorder %v851, 0.0
    %vm916 = vcmp.gt.f32.partialorder %v852, 0.0
    %vm917 = vcmp.gt.f32.partialorder %v853, 0.0
    %vm918 = vcmp.gt.f32.partialorder %v854, 0.0
    %vm919 = vcmp.gt.f32.partialorder %v855, 0.0
    %vm920 = vcmp.gt.f32.partialorder %v856, 0.0
    %vm921 = vcmp.gt.f32.partialorder %v857, 0.0
    %vm922 = vcmp.gt.f32.partialorder %v858, 0.0
    %vm923 = vcmp.gt.f32.partialorder %v859, 0.0
    %vm924 = vcmp.gt.f32.partialorder %v860, 0.0
    %vm925 = vcmp.gt.f32.partialorder %v861, 0.0
    %vm926 = vcmp.gt.f32.partialorder %v862, 0.0
    %vm927 = vcmp.gt.f32.partialorder %v863, 0.0
    %vm928 = vcmp.gt.f32.partialorder %v864, 0.0
    %vm929 = vcmp.gt.f32.partialorder %v865, 0.0
    %vm930 = vcmp.gt.f32.partialorder %v866, 0.0
    %vm931 = vcmp.gt.f32.partialorder %v867, 0.0
    %vm932 = vcmp.gt.f32.partialorder %v868, 0.0
    %vm933 = vcmp.gt.f32.partialorder %v869, 0.0
    %vm934 = vcmp.gt.f32.partialorder %v870, 0.0
    %vm935 = vcmp.gt.f32.partialorder %v871, 0.0
    %vm936 = vcmp.gt.f32.partialorder %v872, 0.0
    %vm937 = vcmp.gt.f32.partialorder %v873, 0.0
    %vm938 = vcmp.gt.f32.partialorder %v874, 0.0
    %vm939 = vcmp.gt.f32.partialorder %v875, 0.0
    %vm940 = vcmp.gt.f32.partialorder %v876, 0.0
    %vm941 = vcmp.gt.f32.partialorder %v877, 0.0
    %vm942 = vcmp.gt.f32.partialorder %v878, 0.0
    %vm943 = vcmp.gt.f32.partialorder %v879, 0.0
    %vm944 = vcmp.gt.f32.partialorder %v880, 0.0
    %vm945 = vcmp.gt.f32.partialorder %v881, 0.0
    %vm946 = vcmp.gt.f32.partialorder %v882, 0.0
    %vm947 = vcmp.gt.f32.partialorder %v883, 0.0
    %vm948 = vcmp.gt.f32.partialorder %v884, 0.0
    %vm949 = vcmp.gt.f32.partialorder %v885, 0.0
    %vm950 = vcmp.gt.f32.partialorder %v886, 0.0
    %vm951 = vcmp.gt.f32.partialorder %v887, 0.0
    %vm952 = vcmp.gt.f32.partialorder %v888, 0.0
    %vm953 = vcmp.gt.f32.partialorder %v889, 0.0
    %vm954 = vcmp.gt.f32.partialorder %v890, 0.0
    %vm955 = vcmp.gt.f32.partialorder %v891, 0.0
    %vm956 = vcmp.gt.f32.partialorder %v892, 0.0
    %vm957 = vcmp.gt.f32.partialorder %v893, 0.0
    %vm958 = vcmp.gt.f32.partialorder %v894, 0.0
    %vm959 = vcmp.gt.f32.partialorder %v895, 0.0
    %vm960 = vcmp.gt.f32.partialorder %v896, 0.0
    %vm961 = vcmp.gt.f32.partialorder %v897, 0.0
    %v962 = vmul.f32 %v834, 0.2
    %v963 = vmul.f32 %v835, 0.2
    %v964 = vmul.f32 %v836, 0.2
    %v965 = vmul.f32 %v837, 0.2
    %v966 = vmul.f32 %v838, 0.2
    %v967 = vmul.f32 %v839, 0.2
    %v968 = vmul.f32 %v840, 0.2
    %v969 = vmul.f32 %v841, 0.2
    %v970 = vmul.f32 %v842, 0.2
    %v971 = vmul.f32 %v843, 0.2
    %v972 = vmul.f32 %v844, 0.2
    %v973 = vmul.f32 %v845, 0.2
    %v974 = vmul.f32 %v846, 0.2
    %v975 = vmul.f32 %v847, 0.2
    %v976 = vmul.f32 %v848, 0.2
    %v977 = vmul.f32 %v849, 0.2
    %v978 = vmul.f32 %v850, 0.2
    %v979 = vmul.f32 %v851, 0.2
    %v980 = vmul.f32 %v852, 0.2
    %v981 = vmul.f32 %v853, 0.2
    %v982 = vmul.f32 %v854, 0.2
    %v983 = vmul.f32 %v855, 0.2
    %v984 = vmul.f32 %v856, 0.2
    %v985 = vmul.f32 %v857, 0.2
    %v986 = vmul.f32 %v858, 0.2
    %v987 = vmul.f32 %v859, 0.2
    %v988 = vmul.f32 %v860, 0.2
    %v989 = vmul.f32 %v861, 0.2
    %v990 = vmul.f32 %v862, 0.2
    %v991 = vmul.f32 %v863, 0.2
    %v992 = vmul.f32 %v864, 0.2
    %v993 = vmul.f32 %v865, 0.2
    %v994 = vmul.f32 %v866, 0.2
    %v995 = vmul.f32 %v867, 0.2
    %v996 = vmul.f32 %v868, 0.2
    %v997 = vmul.f32 %v869, 0.2
    %v998 = vmul.f32 %v870, 0.2
    %v999 = vmul.f32 %v871, 0.2
    %v1000 = vmul.f32 %v872, 0.2
    %v1001 = vmul.f32 %v873, 0.2
    %v1002 = vmul.f32 %v874, 0.2
    %v1003 = vmul.f32 %v875, 0.2
    %v1004 = vmul.f32 %v876, 0.2
    %v1005 = vmul.f32 %v877, 0.2
    %v1006 = vmul.f32 %v878, 0.2
    %v1007 = vmul.f32 %v879, 0.2
    %v1008 = vmul.f32 %v880, 0.2
    %v1009 = vmul.f32 %v881, 0.2
    %v1010 = vmul.f32 %v882, 0.2
    %v1011 = vmul.f32 %v883, 0.2
    %v1012 = vmul.f32 %v884, 0.2
    %v1013 = vmul.f32 %v885, 0.2
    %v1014 = vmul.f32 %v886, 0.2
    %v1015 = vmul.f32 %v887, 0.2
    %v1016 = vmul.f32 %v888, 0.2
    %v1017 = vmul.f32 %v889, 0.2
    %v1018 = vmul.f32 %v890, 0.2
    %v1019 = vmul.f32 %v891, 0.2
    %v1020 = vmul.f32 %v892, 0.2
    %v1021 = vmul.f32 %v893, 0.2
    %v1022 = vmul.f32 %v894, 0.2
    %v1023 = vmul.f32 %v895, 0.2
    %v1024 = vmul.f32 %v896, 0.2
    %v1025 = vmul.f32 %v897, 0.2
    %v1026 = vsel %vm898, %v834, %v962
    %v1027 = vsel %vm899, %v835, %v963
    %v1028 = vsel %vm900, %v836, %v964
    %v1029 = vsel %vm901, %v837, %v965
    %v1030 = vsel %vm902, %v838, %v966
    %v1031 = vsel %vm903, %v839, %v967
    %v1032 = vsel %vm904, %v840, %v968
    %v1033 = vsel %vm905, %v841, %v969
    %v1034 = vsel %vm906, %v842, %v970
    %v1035 = vsel %vm907, %v843, %v971
    %v1036 = vsel %vm908, %v844, %v972
    %v1037 = vsel %vm909, %v845, %v973
    %v1038 = vsel %vm910, %v846, %v974
    %v1039 = vsel %vm911, %v847, %v975
    %v1040 = vsel %vm912, %v848, %v976
    %v1041 = vsel %vm913, %v849, %v977
    %v1042 = vsel %vm914, %v850, %v978
    %v1043 = vsel %vm915, %v851, %v979
    %v1044 = vsel %vm916, %v852, %v980
    %v1045 = vsel %vm917, %v853, %v981
    %v1046 = vsel %vm918, %v854, %v982
    %v1047 = vsel %vm919, %v855, %v983
    %v1048 = vsel %vm920, %v856, %v984
    %v1049 = vsel %vm921, %v857, %v985
    %v1050 = vsel %vm922, %v858, %v986
    %v1051 = vsel %vm923, %v859, %v987
    %v1052 = vsel %vm924, %v860, %v988
    %v1053 = vsel %vm925, %v861, %v989
    %v1054 = vsel %vm926, %v862, %v990
    %v1055 = vsel %vm927, %v863, %v991
    %v1056 = vsel %vm928, %v864, %v992
    %v1057 = vsel %vm929, %v865, %v993
    %v1058 = vsel %vm930, %v866, %v994
    %v1059 = vsel %vm931, %v867, %v995
    %v1060 = vsel %vm932, %v868, %v996
    %v1061 = vsel %vm933, %v869, %v997
    %v1062 = vsel %vm934, %v870, %v998
    %v1063 = vsel %vm935, %v871, %v999
    %v1064 = vsel %vm936, %v872, %v1000
    %v1065 = vsel %vm937, %v873, %v1001
    %v1066 = vsel %vm938, %v874, %v1002
    %v1067 = vsel %vm939, %v875, %v1003
    %v1068 = vsel %vm940, %v876, %v1004
    %v1069 = vsel %vm941, %v877, %v1005
    %v1070 = vsel %vm942, %v878, %v1006
    %v1071 = vsel %vm943, %v879, %v1007
    %v1072 = vsel %vm944, %v880, %v1008
    %v1073 = vsel %vm945, %v881, %v1009
    %v1074 = vsel %vm946, %v882, %v1010
    %v1075 = vsel %vm947, %v883, %v1011
    %v1076 = vsel %vm948, %v884, %v1012
    %v1077 = vsel %vm949, %v885, %v1013
    %v1078 = vsel %vm950, %v886, %v1014
    %v1079 = vsel %vm951, %v887, %v1015
    %v1080 = vsel %vm952, %v888, %v1016
    %v1081 = vsel %vm953, %v889, %v1017
    %v1082 = vsel %vm954, %v890, %v1018
    %v1083 = vsel %vm955, %v891, %v1019
    %v1084 = vsel %vm956, %v892, %v1020
    %v1085 = vsel %vm957, %v893, %v1021
    %v1086 = vsel %vm958, %v894, %v1022
    %v1087 = vsel %vm959, %v895, %v1023
    %v1088 = vsel %vm960, %v896, %v1024
    %v1089 = vsel %vm961, %v897, %v1025
    %v1090 = vpack.c.bf16 %v1026, %v1026
    %v1091 = vpack.c.bf16 %v1027, %v1027
    %v1092 = vpack.c.bf16 %v1028, %v1028
    %v1093 = vpack.c.bf16 %v1029, %v1029
    %v1094 = vpack.c.bf16 %v1030, %v1030
    %v1095 = vpack.c.bf16 %v1031, %v1031
    %v1096 = vpack.c.bf16 %v1032, %v1032
    %v1097 = vpack.c.bf16 %v1033, %v1033
    %v1098 = vpack.c.bf16 %v1034, %v1034
    %v1099 = vpack.c.bf16 %v1035, %v1035
    %v1100 = vpack.c.bf16 %v1036, %v1036
    %v1101 = vpack.c.bf16 %v1037, %v1037
    %v1102 = vpack.c.bf16 %v1038, %v1038
    %v1103 = vpack.c.bf16 %v1039, %v1039
    %v1104 = vpack.c.bf16 %v1040, %v1040
    %v1105 = vpack.c.bf16 %v1041, %v1041
    %v1106 = vpack.c.bf16 %v1042, %v1042
    %v1107 = vpack.c.bf16 %v1043, %v1043
    %v1108 = vpack.c.bf16 %v1044, %v1044
    %v1109 = vpack.c.bf16 %v1045, %v1045
    %v1110 = vpack.c.bf16 %v1046, %v1046
    %v1111 = vpack.c.bf16 %v1047, %v1047
    %v1112 = vpack.c.bf16 %v1048, %v1048
    %v1113 = vpack.c.bf16 %v1049, %v1049
    %v1114 = vpack.c.bf16 %v1050, %v1050
    %v1115 = vpack.c.bf16 %v1051, %v1051
    %v1116 = vpack.c.bf16 %v1052, %v1052
    %v1117 = vpack.c.bf16 %v1053, %v1053
    %v1118 = vpack.c.bf16 %v1054, %v1054
    %v1119 = vpack.c.bf16 %v1055, %v1055
    %v1120 = vpack.c.bf16 %v1056, %v1056
    %v1121 = vpack.c.bf16 %v1057, %v1057
    %v1122 = vpack.c.bf16 %v1058, %v1058
    %v1123 = vpack.c.bf16 %v1059, %v1059
    %v1124 = vpack.c.bf16 %v1060, %v1060
    %v1125 = vpack.c.bf16 %v1061, %v1061
    %v1126 = vpack.c.bf16 %v1062, %v1062
    %v1127 = vpack.c.bf16 %v1063, %v1063
    %v1128 = vpack.c.bf16 %v1064, %v1064
    %v1129 = vpack.c.bf16 %v1065, %v1065
    %v1130 = vpack.c.bf16 %v1066, %v1066
    %v1131 = vpack.c.bf16 %v1067, %v1067
    %v1132 = vpack.c.bf16 %v1068, %v1068
    %v1133 = vpack.c.bf16 %v1069, %v1069
    %v1134 = vpack.c.bf16 %v1070, %v1070
    %v1135 = vpack.c.bf16 %v1071, %v1071
    %v1136 = vpack.c.bf16 %v1072, %v1072
    %v1137 = vpack.c.bf16 %v1073, %v1073
    %v1138 = vpack.c.bf16 %v1074, %v1074
    %v1139 = vpack.c.bf16 %v1075, %v1075
    %v1140 = vpack.c.bf16 %v1076, %v1076
    %v1141 = vpack.c.bf16 %v1077, %v1077
    %v1142 = vpack.c.bf16 %v1078, %v1078
    %v1143 = vpack.c.bf16 %v1079, %v1079
    %v1144 = vpack.c.bf16 %v1080, %v1080
    %v1145 = vpack.c.bf16 %v1081, %v1081
    %v1146 = vpack.c.bf16 %v1082, %v1082
    %v1147 = vpack.c.bf16 %v1083, %v1083
    %v1148 = vpack.c.bf16 %v1084, %v1084
    %v1149 = vpack.c.bf16 %v1085, %v1085
    %v1150 = vpack.c.bf16 %v1086, %v1086
    %v1151 = vpack.c.bf16 %v1087, %v1087
    %v1152 = vpack.c.bf16 %v1088, %v1088
    %v1153 = vpack.c.bf16 %v1089, %v1089
    %1154 = vst [vmem:[%s3] sm:$0xf] %v1090
    %1155 = vst [vmem:[%s3 + $0x4] sm:$0xf] %v1091
    %1156 = vst [vmem:[%s3 + $0x8] sm:$0xf] %v1092
    %1157 = vst [vmem:[%s3 + $0xc] sm:$0xf] %v1093
    %1158 = vst [vmem:[%s3 + $0x10] sm:$0xf] %v1094
    %1159 = vst [vmem:[%s3 + $0x14] sm:$0xf] %v1095
    %1160 = vst [vmem:[%s3 + $0x18] sm:$0xf] %v1096
    %1161 = vst [vmem:[%s3 + $0x1c] sm:$0xf] %v1097
    %1162 = vst [vmem:[%s3 + $0x20] sm:$0xf] %v1098
    %1163 = vst [vmem:[%s3 + $0x24] sm:$0xf] %v1099
    %1164 = vst [vmem:[%s3 + $0x28] sm:$0xf] %v1100
    %1165 = vst [vmem:[%s3 + $0x2c] sm:$0xf] %v1101
    %1166 = vst [vmem:[%s3 + $0x30] sm:$0xf] %v1102
    %1167 = vst [vmem:[%s3 + $0x34] sm:$0xf] %v1103
    %1168 = vst [vmem:[%s3 + $0x38] sm:$0xf] %v1104
    %1169 = vst [vmem:[%s3 + $0x3c] sm:$0xf] %v1105
    %1170 = vst [vmem:[%s3 + $0x40] sm:$0xf] %v1106
    %1171 = vst [vmem:[%s3 + $0x44] sm:$0xf] %v1107
    %1172 = vst [vmem:[%s3 + $0x48] sm:$0xf] %v1108
    %1173 = vst [vmem:[%s3 + $0x4c] sm:$0xf] %v1109
    %1174 = vst [vmem:[%s3 + $0x50] sm:$0xf] %v1110
    %1175 = vst [vmem:[%s3 + $0x54] sm:$0xf] %v1111
    %1176 = vst [vmem:[%s3 + $0x58] sm:$0xf] %v1112
    %1177 = vst [vmem:[%s3 + $0x5c] sm:$0xf] %v1113
    %1178 = vst [vmem:[%s3 + $0x60] sm:$0xf] %v1114
    %1179 = vst [vmem:[%s3 + $0x64] sm:$0xf] %v1115
    %1180 = vst [vmem:[%s3 + $0x68] sm:$0xf] %v1116
    %1181 = vst [vmem:[%s3 + $0x6c] sm:$0xf] %v1117
    %1182 = vst [vmem:[%s3 + $0x70] sm:$0xf] %v1118
    %1183 = vst [vmem:[%s3 + $0x74] sm:$0xf] %v1119
    %1184 = vst [vmem:[%s3 + $0x78] sm:$0xf] %v1120
    %1185 = vst [vmem:[%s3 + $0x7c] sm:$0xf] %v1121
    %1186 = vst [vmem:[%s3 + $0x80] sm:$0xf] %v1122
    %1187 = vst [vmem:[%s3 + $0x84] sm:$0xf] %v1123
    %1188 = vst [vmem:[%s3 + $0x88] sm:$0xf] %v1124
    %1189 = vst [vmem:[%s3 + $0x8c] sm:$0xf] %v1125
    %1190 = vst [vmem:[%s3 + $0x90] sm:$0xf] %v1126
    %1191 = vst [vmem:[%s3 + $0x94] sm:$0xf] %v1127
    %1192 = vst [vmem:[%s3 + $0x98] sm:$0xf] %v1128
    %1193 = vst [vmem:[%s3 + $0x9c] sm:$0xf] %v1129
    %1194 = vst [vmem:[%s3 + $0xa0] sm:$0xf] %v1130
    %1195 = vst [vmem:[%s3 + $0xa4] sm:$0xf] %v1131
    %1196 = vst [vmem:[%s3 + $0xa8] sm:$0xf] %v1132
    %1197 = vst [vmem:[%s3 + $0xac] sm:$0xf] %v1133
    %1198 = vst [vmem:[%s3 + $0xb0] sm:$0xf] %v1134
    %1199 = vst [vmem:[%s3 + $0xb4] sm:$0xf] %v1135
    %1200 = vst [vmem:[%s3 + $0xb8] sm:$0xf] %v1136
    %1201 = vst [vmem:[%s3 + $0xbc] sm:$0xf] %v1137
    %1202 = vst [vmem:[%s3 + $0xc0] sm:$0xf] %v1138
    %1203 = vst [vmem:[%s3 + $0xc4] sm:$0xf] %v1139
    %1204 = vst [vmem:[%s3 + $0xc8] sm:$0xf] %v1140
    %1205 = vst [vmem:[%s3 + $0xcc] sm:$0xf] %v1141
    %1206 = vst [vmem:[%s3 + $0xd0] sm:$0xf] %v1142
    %1207 = vst [vmem:[%s3 + $0xd4] sm:$0xf] %v1143
    %1208 = vst [vmem:[%s3 + $0xd8] sm:$0xf] %v1144
    %1209 = vst [vmem:[%s3 + $0xdc] sm:$0xf] %v1145
    %1210 = vst [vmem:[%s3 + $0xe0] sm:$0xf] %v1146
    %1211 = vst [vmem:[%s3 + $0xe4] sm:$0xf] %v1147
    %1212 = vst [vmem:[%s3 + $0xe8] sm:$0xf] %v1148
    %1213 = vst [vmem:[%s3 + $0xec] sm:$0xf] %v1149
    %1214 = vst [vmem:[%s3 + $0xf0] sm:$0xf] %v1150
    %1215 = vst [vmem:[%s3 + $0xf4] sm:$0xf] %v1151
    %1216 = vst [vmem:[%s3 + $0xf8] sm:$0xf] %v1152
    %1217 = vst [vmem:[%s3 + $0xfc] sm:$0xf] %v1153
  $region21: #{fc_discriminator_forward.5} parent=0 // pred_fallthru
    _
  // Predicated region
  $region22: #{fc_discriminator_forward.5} parent=0 // pred_check
    _
  $region23: #{fc_discriminator_forward.5} parent=0 // pred_check_branch
    %1219 = sbr.rel (0) target = $region25
  $region24: #{fc_discriminator_forward.5} parent=0 // pred_region
    _
  $region25: #{fc_discriminator_forward.5} parent=0 // pred_fallthru
    _
  // Predicated region
  $region26: #{fc_discriminator_forward.5} parent=0 // pred_check
    _
  $region27: #{fc_discriminator_forward.5} parent=0 // pred_check_branch
    %1221 = sbr.rel (0) target = $region29
  $region28: #{fc_discriminator_forward.5} parent=0 // pred_region
    _
  $region29: #{fc_discriminator_forward.5} parent=0 // pred_fallthru
    _

// kernel: fc_discriminator_forward.6
$region0: #{fc_discriminator_forward.6}
  #allocation0 [shape = 'u32[]', space=smem, size = 0x4, offset = 0x4, fixed_abs, tag = 'smem constant byte address 0x4 - core index']
  #allocation1 [shape = 'u32[72,128]{1,0:T(1,128)}', space=vmem, size = 0x9000, scoped, tag = 'internal scratch']
  #allocation2 [shape = 'f32[128,128]{1,0:T(8,128)}', space=vmem, size = 0x10000, scoped, tag = 'scratch operand']
  %s0 = inlined_call_operand.vmem [shape: bf16[128,256], index: 0, kind: input, shape index: {}]
  %s1 = inlined_call_operand.vmem [shape: bf16[256,128], index: 1, kind: input, shape index: {}]
  %s2 = inlined_call_operand.vmem [shape: f32[1,128], index: 2, kind: input, shape index: {}]
  %s3 = inlined_call_operand.vmem [shape: bf16[128,128], index: 3, kind: output, shape index: {}]
  %s4 = sld [smem:[#allocation0]]
  $region30: #{fc_discriminator_forward.6} parent=0
    _
  %s6 = ssub.s32 1, %s4
  %s7 = scalar_select 0, %s6, %s4
  // Predicated region
  $region2: #{fc_discriminator_forward.6} parent=0 // pred_check
    _
  $region3: #{fc_discriminator_forward.6} parent=0 // pred_check_branch
    %9 = sbr.rel (0) target = $region5
  $region4: #{fc_discriminator_forward.6} parent=0 // pred_region
    _
  $region5: #{fc_discriminator_forward.6} parent=0 // pred_fallthru
    _
  // Predicated region
  $region6: #{fc_discriminator_forward.6} parent=0 // pred_check
    _
  $region7: #{fc_discriminator_forward.6} parent=0 // pred_check_branch
    %11 = sbr.rel (0) target = $region9
  $region8: #{fc_discriminator_forward.6} parent=0 // pred_region
    _
  $region9: #{fc_discriminator_forward.6} parent=0 // pred_fallthru
    _
  // Predicated region
  $region10: #{fc_discriminator_forward.6} parent=0 // pred_check
    _
  $region11: #{fc_discriminator_forward.6} parent=0 // pred_check_branch
    %13 = sbr.rel (0) target = $region13
  $region12: #{fc_discriminator_forward.6} parent=0 // pred_region
    _
  $region13: #{fc_discriminator_forward.6} parent=0 // pred_fallthru
    _
  %p14 = scmp.eq.s32.totalorder 0, 0
  // Predicated region
  $region14: #{fc_discriminator_forward.6} parent=0 // pred_check
    %p15 = pneg %p14
  $region15: #{fc_discriminator_forward.6} parent=0 // pred_check_branch
    %17 = sbr.rel (%p15) target = $region17
  $region16: #{fc_discriminator_forward.6} parent=0 // pred_region
    %18 = vst [vmem:[#allocation2] sm:$0xff] 0.0
    %19 = vst [vmem:[#allocation2 + $0x8] sm:$0xff] 0.0
    %20 = vst [vmem:[#allocation2 + $0x10] sm:$0xff] 0.0
    %21 = vst [vmem:[#allocation2 + $0x18] sm:$0xff] 0.0
    %22 = vst [vmem:[#allocation2 + $0x20] sm:$0xff] 0.0
    %23 = vst [vmem:[#allocation2 + $0x28] sm:$0xff] 0.0
    %24 = vst [vmem:[#allocation2 + $0x30] sm:$0xff] 0.0
    %25 = vst [vmem:[#allocation2 + $0x38] sm:$0xff] 0.0
    %26 = vst [vmem:[#allocation2 + $0x40] sm:$0xff] 0.0
    %27 = vst [vmem:[#allocation2 + $0x48] sm:$0xff] 0.0
    %28 = vst [vmem:[#allocation2 + $0x50] sm:$0xff] 0.0
    %29 = vst [vmem:[#allocation2 + $0x58] sm:$0xff] 0.0
    %30 = vst [vmem:[#allocation2 + $0x60] sm:$0xff] 0.0
    %31 = vst [vmem:[#allocation2 + $0x68] sm:$0xff] 0.0
    %32 = vst [vmem:[#allocation2 + $0x70] sm:$0xff] 0.0
    %33 = vst [vmem:[#allocation2 + $0x78] sm:$0xff] 0.0
  $region17: #{fc_discriminator_forward.6} parent=0 // pred_fallthru
    _
  %v34 = vld [vmem:[#allocation2] sm:$0xff]
  %v35 = vld [vmem:[#allocation2 + $0x8] sm:$0xff]
  %v36 = vld [vmem:[#allocation2 + $0x10] sm:$0xff]
  %v37 = vld [vmem:[#allocation2 + $0x18] sm:$0xff]
  %v38 = vld [vmem:[#allocation2 + $0x20] sm:$0xff]
  %v39 = vld [vmem:[#allocation2 + $0x28] sm:$0xff]
  %v40 = vld [vmem:[#allocation2 + $0x30] sm:$0xff]
  %v41 = vld [vmem:[#allocation2 + $0x38] sm:$0xff]
  %v42 = vld [vmem:[#allocation2 + $0x40] sm:$0xff]
  %v43 = vld [vmem:[#allocation2 + $0x48] sm:$0xff]
  %v44 = vld [vmem:[#allocation2 + $0x50] sm:$0xff]
  %v45 = vld [vmem:[#allocation2 + $0x58] sm:$0xff]
  %v46 = vld [vmem:[#allocation2 + $0x60] sm:$0xff]
  %v47 = vld [vmem:[#allocation2 + $0x68] sm:$0xff]
  %v48 = vld [vmem:[#allocation2 + $0x70] sm:$0xff]
  %v49 = vld [vmem:[#allocation2 + $0x78] sm:$0xff]
  %v50 = vld [vmem:[%s0] sm:$0xff]
  %v51 = vld [vmem:[%s0 + $0x8] sm:$0xff]
  %v52 = vld [vmem:[%s0 + $0x10] sm:$0xff]
  %v53 = vld [vmem:[%s0 + $0x18] sm:$0xff]
  %v54 = vld [vmem:[%s0 + $0x20] sm:$0xff]
  %v55 = vld [vmem:[%s0 + $0x28] sm:$0xff]
  %v56 = vld [vmem:[%s0 + $0x30] sm:$0xff]
  %v57 = vld [vmem:[%s0 + $0x38] sm:$0xff]
  %v58 = vld [vmem:[%s0 + $0x40] sm:$0xff]
  %v59 = vld [vmem:[%s0 + $0x48] sm:$0xff]
  %v60 = vld [vmem:[%s0 + $0x50] sm:$0xff]
  %v61 = vld [vmem:[%s0 + $0x58] sm:$0xff]
  %v62 = vld [vmem:[%s0 + $0x60] sm:$0xff]
  %v63 = vld [vmem:[%s0 + $0x68] sm:$0xff]
  %v64 = vld [vmem:[%s0 + $0x70] sm:$0xff]
  %v65 = vld [vmem:[%s0 + $0x78] sm:$0xff]
  %v66 = vld [vmem:[%s1] sm:$0xf]
  %v67 = vld [vmem:[%s1 + $0x4] sm:$0xf]
  %v68 = vld [vmem:[%s1 + $0x8] sm:$0xf]
  %v69 = vld [vmem:[%s1 + $0xc] sm:$0xf]
  %v70 = vld [vmem:[%s1 + $0x10] sm:$0xf]
  %v71 = vld [vmem:[%s1 + $0x14] sm:$0xf]
  %v72 = vld [vmem:[%s1 + $0x18] sm:$0xf]
  %v73 = vld [vmem:[%s1 + $0x1c] sm:$0xf]
  %v74 = vld [vmem:[%s1 + $0x20] sm:$0xf]
  %v75 = vld [vmem:[%s1 + $0x24] sm:$0xf]
  %v76 = vld [vmem:[%s1 + $0x28] sm:$0xf]
  %v77 = vld [vmem:[%s1 + $0x2c] sm:$0xf]
  %v78 = vld [vmem:[%s1 + $0x30] sm:$0xf]
  %v79 = vld [vmem:[%s1 + $0x34] sm:$0xf]
  %v80 = vld [vmem:[%s1 + $0x38] sm:$0xf]
  %v81 = vld [vmem:[%s1 + $0x3c] sm:$0xf]
  %v82 = vld [vmem:[%s1 + $0x40] sm:$0xf]
  %v83 = vld [vmem:[%s1 + $0x44] sm:$0xf]
  %v84 = vld [vmem:[%s1 + $0x48] sm:$0xf]
  %v85 = vld [vmem:[%s1 + $0x4c] sm:$0xf]
  %v86 = vld [vmem:[%s1 + $0x50] sm:$0xf]
  %v87 = vld [vmem:[%s1 + $0x54] sm:$0xf]
  %v88 = vld [vmem:[%s1 + $0x58] sm:$0xf]
  %v89 = vld [vmem:[%s1 + $0x5c] sm:$0xf]
  %v90 = vld [vmem:[%s1 + $0x60] sm:$0xf]
  %v91 = vld [vmem:[%s1 + $0x64] sm:$0xf]
  %v92 = vld [vmem:[%s1 + $0x68] sm:$0xf]
  %v93 = vld [vmem:[%s1 + $0x6c] sm:$0xf]
  %v94 = vld [vmem:[%s1 + $0x70] sm:$0xf]
  %v95 = vld [vmem:[%s1 + $0x74] sm:$0xf]
  %v96 = vld [vmem:[%s1 + $0x78] sm:$0xf]
  %v97 = vld [vmem:[%s1 + $0x7c] sm:$0xf]
  %v114 = vunpack.c.l.b16 %v50
  %v115 = vunpack.c.h.b16 %v50
  %v116 = vunpack.c.l.b16 %v51
  %v117 = vunpack.c.h.b16 %v51
  %v118 = vunpack.c.l.b16 %v52
  %v119 = vunpack.c.h.b16 %v52
  %v120 = vunpack.c.l.b16 %v53
  %v121 = vunpack.c.h.b16 %v53
  %v122 = vunpack.c.l.b16 %v54
  %v123 = vunpack.c.h.b16 %v54
  %v124 = vunpack.c.l.b16 %v55
  %v125 = vunpack.c.h.b16 %v55
  %v126 = vunpack.c.l.b16 %v56
  %v127 = vunpack.c.h.b16 %v56
  %v128 = vunpack.c.l.b16 %v57
  %v129 = vunpack.c.h.b16 %v57
  %v130 = vunpack.c.l.b16 %v58
  %v131 = vunpack.c.h.b16 %v58
  %v132 = vunpack.c.l.b16 %v59
  %v133 = vunpack.c.h.b16 %v59
  %v134 = vunpack.c.l.b16 %v60
  %v135 = vunpack.c.h.b16 %v60
  %v136 = vunpack.c.l.b16 %v61
  %v137 = vunpack.c.h.b16 %v61
  %v138 = vunpack.c.l.b16 %v62
  %v139 = vunpack.c.h.b16 %v62
  %v140 = vunpack.c.l.b16 %v63
  %v141 = vunpack.c.h.b16 %v63
  %v142 = vunpack.c.l.b16 %v64
  %v143 = vunpack.c.h.b16 %v64
  %v144 = vunpack.c.l.b16 %v65
  %v145 = vunpack.c.h.b16 %v65
  %v146 = vpack.c.b16 %v116, %v114
  %v147 = vpack.c.b16 %v117, %v115
  %v148 = vpack.c.b16 %v120, %v118
  %v149 = vpack.c.b16 %v121, %v119
  %v150 = vpack.c.b16 %v124, %v122
  %v151 = vpack.c.b16 %v125, %v123
  %v152 = vpack.c.b16 %v128, %v126
  %v153 = vpack.c.b16 %v129, %v127
  %v154 = vpack.c.b16 %v132, %v130
  %v155 = vpack.c.b16 %v133, %v131
  %v156 = vpack.c.b16 %v136, %v134
  %v157 = vpack.c.b16 %v137, %v135
  %v158 = vpack.c.b16 %v140, %v138
  %v159 = vpack.c.b16 %v141, %v139
  %v160 = vpack.c.b16 %v144, %v142
  %v161 = vpack.c.b16 %v145, %v143
  %v210 = vunpack.c.l.b16 %v66
  %v211 = vunpack.c.l.b16 %v67
  %v212 = vunpack.c.l.b16 %v68
  %v213 = vunpack.c.l.b16 %v69
  %v214 = vunpack.c.l.b16 %v70
  %v215 = vunpack.c.l.b16 %v71
  %v216 = vunpack.c.l.b16 %v72
  %v217 = vunpack.c.l.b16 %v73
  %v218 = vunpack.c.l.b16 %v74
  %v219 = vunpack.c.l.b16 %v75
  %v220 = vunpack.c.l.b16 %v76
  %v221 = vunpack.c.l.b16 %v77
  %v222 = vunpack.c.l.b16 %v78
  %v223 = vunpack.c.l.b16 %v79
  %v224 = vunpack.c.l.b16 %v80
  %v225 = vunpack.c.l.b16 %v81
  %v226 = vunpack.c.l.b16 %v82
  %v227 = vunpack.c.l.b16 %v83
  %v228 = vunpack.c.l.b16 %v84
  %v229 = vunpack.c.l.b16 %v85
  %v230 = vunpack.c.l.b16 %v86
  %v231 = vunpack.c.l.b16 %v87
  %v232 = vunpack.c.l.b16 %v88
  %v233 = vunpack.c.l.b16 %v89
  %v234 = vunpack.c.l.b16 %v90
  %v235 = vunpack.c.l.b16 %v91
  %v236 = vunpack.c.l.b16 %v92
  %v237 = vunpack.c.l.b16 %v93
  %v238 = vunpack.c.l.b16 %v94
  %v239 = vunpack.c.l.b16 %v95
  %v240 = vunpack.c.l.b16 %v96
  %v241 = vunpack.c.l.b16 %v97
  %v242 = vpack.c.b16 %v211, %v210
  %v243 = vpack.c.b16 %v213, %v212
  %v244 = vpack.c.b16 %v215, %v214
  %v245 = vpack.c.b16 %v217, %v216
  %v246 = vpack.c.b16 %v219, %v218
  %v247 = vpack.c.b16 %v221, %v220
  %v248 = vpack.c.b16 %v223, %v222
  %v249 = vpack.c.b16 %v225, %v224
  %v250 = vpack.c.b16 %v227, %v226
  %v251 = vpack.c.b16 %v229, %v228
  %v252 = vpack.c.b16 %v231, %v230
  %v253 = vpack.c.b16 %v233, %v232
  %v254 = vpack.c.b16 %v235, %v234
  %v255 = vpack.c.b16 %v237, %v236
  %v256 = vpack.c.b16 %v239, %v238
  %v257 = vpack.c.b16 %v241, %v240
  %274 = vmatpush.bf16.msra.mxu0 %v249
  %275 = vmatpush.bf16.msra.mxu0 %v248
  %276 = vmatpush.bf16.msra.mxu0 %v247
  %277 = vmatpush.bf16.msra.mxu0 %v246
  %278 = vmatpush.bf16.msra.mxu0 %v245
  %279 = vmatpush.bf16.msra.mxu0 %v244
  %280 = vmatpush.bf16.msra.mxu0 %v243
  %281 = vmatpush.bf16.msra.mxu0 %v242
  %282 = vmatmul.bf16.gmra.mxu0 %v146
  %v283 = vpop.f32.mrf.mxu0
  %v284 = vadd.f32 0.0, %v283
  %v285 = vpop.f32.mrf.mxu0
  %v286 = vadd.f32 0.0, %v285
  %287 = vmatmul.bf16.gmra.mxu0 %v148
  %v288 = vpop.f32.mrf.mxu0
  %v289 = vadd.f32 0.0, %v288
  %v290 = vpop.f32.mrf.mxu0
  %v291 = vadd.f32 0.0, %v290
  %292 = vmatmul.bf16.gmra.mxu0 %v150
  %v293 = vpop.f32.mrf.mxu0
  %v294 = vadd.f32 0.0, %v293
  %v295 = vpop.f32.mrf.mxu0
  %v296 = vadd.f32 0.0, %v295
  %297 = vmatmul.bf16.gmra.mxu0 %v152
  %v298 = vpop.f32.mrf.mxu0
  %v299 = vadd.f32 0.0, %v298
  %v300 = vpop.f32.mrf.mxu0
  %v301 = vadd.f32 0.0, %v300
  %302 = vmatmul.bf16.gmra.mxu0 %v154
  %v303 = vpop.f32.mrf.mxu0
  %v304 = vadd.f32 0.0, %v303
  %v305 = vpop.f32.mrf.mxu0
  %v306 = vadd.f32 0.0, %v305
  %307 = vmatmul.bf16.gmra.mxu0 %v156
  %v308 = vpop.f32.mrf.mxu0
  %v309 = vadd.f32 0.0, %v308
  %v310 = vpop.f32.mrf.mxu0
  %v311 = vadd.f32 0.0, %v310
  %312 = vmatmul.bf16.gmra.mxu0 %v158
  %v313 = vpop.f32.mrf.mxu0
  %v314 = vadd.f32 0.0, %v313
  %v315 = vpop.f32.mrf.mxu0
  %v316 = vadd.f32 0.0, %v315
  %317 = vmatmul.bf16.gmra.mxu0 %v160
  %v318 = vpop.f32.mrf.mxu0
  %v319 = vadd.f32 0.0, %v318
  %v320 = vpop.f32.mrf.mxu0
  %v321 = vadd.f32 0.0, %v320
  %322 = vdwg.mxu0
  %323 = vmatpush.bf16.msra.mxu0 %v257
  %324 = vmatpush.bf16.msra.mxu0 %v256
  %325 = vmatpush.bf16.msra.mxu0 %v255
  %326 = vmatpush.bf16.msra.mxu0 %v254
  %327 = vmatpush.bf16.msra.mxu0 %v253
  %328 = vmatpush.bf16.msra.mxu0 %v252
  %329 = vmatpush.bf16.msra.mxu0 %v251
  %330 = vmatpush.bf16.msra.mxu0 %v250
  %331 = vmatmul.bf16.gmra.mxu0 %v147
  %v332 = vpop.f32.mrf.mxu0
  %v333 = vadd.f32 %v284, %v332
  %v334 = vpop.f32.mrf.mxu0
  %v335 = vadd.f32 %v286, %v334
  %336 = vmatmul.bf16.gmra.mxu0 %v149
  %v337 = vpop.f32.mrf.mxu0
  %v338 = vadd.f32 %v289, %v337
  %v339 = vpop.f32.mrf.mxu0
  %v340 = vadd.f32 %v291, %v339
  %341 = vmatmul.bf16.gmra.mxu0 %v151
  %v342 = vpop.f32.mrf.mxu0
  %v343 = vadd.f32 %v294, %v342
  %v344 = vpop.f32.mrf.mxu0
  %v345 = vadd.f32 %v296, %v344
  %346 = vmatmul.bf16.gmra.mxu0 %v153
  %v347 = vpop.f32.mrf.mxu0
  %v348 = vadd.f32 %v299, %v347
  %v349 = vpop.f32.mrf.mxu0
  %v350 = vadd.f32 %v301, %v349
  %351 = vmatmul.bf16.gmra.mxu0 %v155
  %v352 = vpop.f32.mrf.mxu0
  %v353 = vadd.f32 %v304, %v352
  %v354 = vpop.f32.mrf.mxu0
  %v355 = vadd.f32 %v306, %v354
  %356 = vmatmul.bf16.gmra.mxu0 %v157
  %v357 = vpop.f32.mrf.mxu0
  %v358 = vadd.f32 %v309, %v357
  %v359 = vpop.f32.mrf.mxu0
  %v360 = vadd.f32 %v311, %v359
  %361 = vmatmul.bf16.gmra.mxu0 %v159
  %v362 = vpop.f32.mrf.mxu0
  %v363 = vadd.f32 %v314, %v362
  %v364 = vpop.f32.mrf.mxu0
  %v365 = vadd.f32 %v316, %v364
  %366 = vmatmul.bf16.gmra.mxu0 %v161
  %v367 = vpop.f32.mrf.mxu0
  %v368 = vadd.f32 %v319, %v367
  %v369 = vpop.f32.mrf.mxu0
  %v370 = vadd.f32 %v321, %v369
  %371 = vdwg.mxu0
  %v372 = vadd.f32 %v34, %v333
  %v373 = vadd.f32 %v35, %v335
  %v374 = vadd.f32 %v36, %v338
  %v375 = vadd.f32 %v37, %v340
  %v376 = vadd.f32 %v38, %v343
  %v377 = vadd.f32 %v39, %v345
  %v378 = vadd.f32 %v40, %v348
  %v379 = vadd.f32 %v41, %v350
  %v380 = vadd.f32 %v42, %v353
  %v381 = vadd.f32 %v43, %v355
  %v382 = vadd.f32 %v44, %v358
  %v383 = vadd.f32 %v45, %v360
  %v384 = vadd.f32 %v46, %v363
  %v385 = vadd.f32 %v47, %v365
  %v386 = vadd.f32 %v48, %v368
  %v387 = vadd.f32 %v49, %v370
  %388 = vst [vmem:[#allocation2] sm:$0xff] %v372
  %389 = vst [vmem:[#allocation2 + $0x8] sm:$0xff] %v373
  %390 = vst [vmem:[#allocation2 + $0x10] sm:$0xff] %v374
  %391 = vst [vmem:[#allocation2 + $0x18] sm:$0xff] %v375
  %392 = vst [vmem:[#allocation2 + $0x20] sm:$0xff] %v376
  %393 = vst [vmem:[#allocation2 + $0x28] sm:$0xff] %v377
  %394 = vst [vmem:[#allocation2 + $0x30] sm:$0xff] %v378
  %395 = vst [vmem:[#allocation2 + $0x38] sm:$0xff] %v379
  %396 = vst [vmem:[#allocation2 + $0x40] sm:$0xff] %v380
  %397 = vst [vmem:[#allocation2 + $0x48] sm:$0xff] %v381
  %398 = vst [vmem:[#allocation2 + $0x50] sm:$0xff] %v382
  %399 = vst [vmem:[#allocation2 + $0x58] sm:$0xff] %v383
  %400 = vst [vmem:[#allocation2 + $0x60] sm:$0xff] %v384
  %401 = vst [vmem:[#allocation2 + $0x68] sm:$0xff] %v385
  %402 = vst [vmem:[#allocation2 + $0x70] sm:$0xff] %v386
  %403 = vst [vmem:[#allocation2 + $0x78] sm:$0xff] %v387
  // Predicated region
  $region18: #{fc_discriminator_forward.6} parent=0 // pred_check
    %p404 = pneg %p14
  $region19: #{fc_discriminator_forward.6} parent=0 // pred_check_branch
    %406 = sbr.rel (%p404) target = $region21
  $region20: #{fc_discriminator_forward.6} parent=0 // pred_region
    %v407 = vld [vmem:[#allocation2] sm:$0xff]
    %v408 = vld [vmem:[#allocation2 + $0x8] sm:$0xff]
    %v409 = vld [vmem:[#allocation2 + $0x10] sm:$0xff]
    %v410 = vld [vmem:[#allocation2 + $0x18] sm:$0xff]
    %v411 = vld [vmem:[#allocation2 + $0x20] sm:$0xff]
    %v412 = vld [vmem:[#allocation2 + $0x28] sm:$0xff]
    %v413 = vld [vmem:[#allocation2 + $0x30] sm:$0xff]
    %v414 = vld [vmem:[#allocation2 + $0x38] sm:$0xff]
    %v415 = vld [vmem:[#allocation2 + $0x40] sm:$0xff]
    %v416 = vld [vmem:[#allocation2 + $0x48] sm:$0xff]
    %v417 = vld [vmem:[#allocation2 + $0x50] sm:$0xff]
    %v418 = vld [vmem:[#allocation2 + $0x58] sm:$0xff]
    %v419 = vld [vmem:[#allocation2 + $0x60] sm:$0xff]
    %v420 = vld [vmem:[#allocation2 + $0x68] sm:$0xff]
    %v421 = vld [vmem:[#allocation2 + $0x70] sm:$0xff]
    %v422 = vld [vmem:[#allocation2 + $0x78] sm:$0xff]
    %v423 = vld [vmem:[%s2] sm:$0x1]
    %v425 = vperm.slane %v423, 0
    %v427 = vadd.f32 %v407, %v425
    %v428 = vadd.f32 %v408, %v425
    %v429 = vadd.f32 %v409, %v425
    %v430 = vadd.f32 %v410, %v425
    %v431 = vadd.f32 %v411, %v425
    %v432 = vadd.f32 %v412, %v425
    %v433 = vadd.f32 %v413, %v425
    %v434 = vadd.f32 %v414, %v425
    %v435 = vadd.f32 %v415, %v425
    %v436 = vadd.f32 %v416, %v425
    %v437 = vadd.f32 %v417, %v425
    %v438 = vadd.f32 %v418, %v425
    %v439 = vadd.f32 %v419, %v425
    %v440 = vadd.f32 %v420, %v425
    %v441 = vadd.f32 %v421, %v425
    %v442 = vadd.f32 %v422, %v425
    %vm443 = vcmp.gt.f32.partialorder %v427, 0.0
    %vm444 = vcmp.gt.f32.partialorder %v428, 0.0
    %vm445 = vcmp.gt.f32.partialorder %v429, 0.0
    %vm446 = vcmp.gt.f32.partialorder %v430, 0.0
    %vm447 = vcmp.gt.f32.partialorder %v431, 0.0
    %vm448 = vcmp.gt.f32.partialorder %v432, 0.0
    %vm449 = vcmp.gt.f32.partialorder %v433, 0.0
    %vm450 = vcmp.gt.f32.partialorder %v434, 0.0
    %vm451 = vcmp.gt.f32.partialorder %v435, 0.0
    %vm452 = vcmp.gt.f32.partialorder %v436, 0.0
    %vm453 = vcmp.gt.f32.partialorder %v437, 0.0
    %vm454 = vcmp.gt.f32.partialorder %v438, 0.0
    %vm455 = vcmp.gt.f32.partialorder %v439, 0.0
    %vm456 = vcmp.gt.f32.partialorder %v440, 0.0
    %vm457 = vcmp.gt.f32.partialorder %v441, 0.0
    %vm458 = vcmp.gt.f32.partialorder %v442, 0.0
    %v459 = vmul.f32 %v427, 0.2
    %v460 = vmul.f32 %v428, 0.2
    %v461 = vmul.f32 %v429, 0.2
    %v462 = vmul.f32 %v430, 0.2
    %v463 = vmul.f32 %v431, 0.2
    %v464 = vmul.f32 %v432, 0.2
    %v465 = vmul.f32 %v433, 0.2
    %v466 = vmul.f32 %v434, 0.2
    %v467 = vmul.f32 %v435, 0.2
    %v468 = vmul.f32 %v436, 0.2
    %v469 = vmul.f32 %v437, 0.2
    %v470 = vmul.f32 %v438, 0.2
    %v471 = vmul.f32 %v439, 0.2
    %v472 = vmul.f32 %v440, 0.2
    %v473 = vmul.f32 %v441, 0.2
    %v474 = vmul.f32 %v442, 0.2
    %v475 = vsel %vm443, %v427, %v459
    %v476 = vsel %vm444, %v428, %v460
    %v477 = vsel %vm445, %v429, %v461
    %v478 = vsel %vm446, %v430, %v462
    %v479 = vsel %vm447, %v431, %v463
    %v480 = vsel %vm448, %v432, %v464
    %v481 = vsel %vm449, %v433, %v465
    %v482 = vsel %vm450, %v434, %v466
    %v483 = vsel %vm451, %v435, %v467
    %v484 = vsel %vm452, %v436, %v468
    %v485 = vsel %vm453, %v437, %v469
    %v486 = vsel %vm454, %v438, %v470
    %v487 = vsel %vm455, %v439, %v471
    %v488 = vsel %vm456, %v440, %v472
    %v489 = vsel %vm457, %v441, %v473
    %v490 = vsel %vm458, %v442, %v474
    %v491 = vpack.c.bf16 %v475, %v475
    %v492 = vpack.c.bf16 %v476, %v476
    %v493 = vpack.c.bf16 %v477, %v477
    %v494 = vpack.c.bf16 %v478, %v478
    %v495 = vpack.c.bf16 %v479, %v479
    %v496 = vpack.c.bf16 %v480, %v480
    %v497 = vpack.c.bf16 %v481, %v481
    %v498 = vpack.c.bf16 %v482, %v482
    %v499 = vpack.c.bf16 %v483, %v483
    %v500 = vpack.c.bf16 %v484, %v484
    %v501 = vpack.c.bf16 %v485, %v485
    %v502 = vpack.c.bf16 %v486, %v486
    %v503 = vpack.c.bf16 %v487, %v487
    %v504 = vpack.c.bf16 %v488, %v488
    %v505 = vpack.c.bf16 %v489, %v489
    %v506 = vpack.c.bf16 %v490, %v490
    %507 = vst [vmem:[%s3] sm:$0xf] %v491
    %508 = vst [vmem:[%s3 + $0x4] sm:$0xf] %v492
    %509 = vst [vmem:[%s3 + $0x8] sm:$0xf] %v493
    %510 = vst [vmem:[%s3 + $0xc] sm:$0xf] %v494
    %511 = vst [vmem:[%s3 + $0x10] sm:$0xf] %v495
    %512 = vst [vmem:[%s3 + $0x14] sm:$0xf] %v496
    %513 = vst [vmem:[%s3 + $0x18] sm:$0xf] %v497
    %514 = vst [vmem:[%s3 + $0x1c] sm:$0xf] %v498
    %515 = vst [vmem:[%s3 + $0x20] sm:$0xf] %v499
    %516 = vst [vmem:[%s3 + $0x24] sm:$0xf] %v500
    %517 = vst [vmem:[%s3 + $0x28] sm:$0xf] %v501
    %518 = vst [vmem:[%s3 + $0x2c] sm:$0xf] %v502
    %519 = vst [vmem:[%s3 + $0x30] sm:$0xf] %v503
    %520 = vst [vmem:[%s3 + $0x34] sm:$0xf] %v504
    %521 = vst [vmem:[%s3 + $0x38] sm:$0xf] %v505
    %522 = vst [vmem:[%s3 + $0x3c] sm:$0xf] %v506
  $region21: #{fc_discriminator_forward.6} parent=0 // pred_fallthru
    _
  // Predicated region
  $region22: #{fc_discriminator_forward.6} parent=0 // pred_check
    _
  $region23: #{fc_discriminator_forward.6} parent=0 // pred_check_branch
    %524 = sbr.rel (0) target = $region25
  $region24: #{fc_discriminator_forward.6} parent=0 // pred_region
    _
  $region25: #{fc_discriminator_forward.6} parent=0 // pred_fallthru
    _
  // Predicated region
  $region26: #{fc_discriminator_forward.6} parent=0 // pred_check
    _
  $region27: #{fc_discriminator_forward.6} parent=0 // pred_check_branch
    %526 = sbr.rel (0) target = $region29
  $region28: #{fc_discriminator_forward.6} parent=0 // pred_region
    _
  $region29: #{fc_discriminator_forward.6} parent=0 // pred_fallthru
    _

// kernel: fc_discriminator_forward.7
$region0: #{fc_discriminator_forward.7}
  #allocation0 [shape = 'u32[]', space=smem, size = 0x4, offset = 0x4, fixed_abs, tag = 'smem constant byte address 0x4 - core index']
  #allocation1 [shape = 'u32[72,128]{1,0:T(1,128)}', space=vmem, size = 0x9000, scoped, tag = 'internal scratch']
  #allocation2 [shape = 'f32[32,128]{1,0:T(8,128)}', space=vmem, size = 0x4000, scoped, tag = 'scratch operand']
  %s0 = inlined_call_operand.vmem [shape: bf16[32,512], index: 0, kind: input, shape index: {}]
  %s1 = inlined_call_operand.vmem [shape: bf16[512,128], index: 1, kind: input, shape index: {}]
  %s2 = inlined_call_operand.vmem [shape: f32[1,128], index: 2, kind: input, shape index: {}]
  %s3 = inlined_call_operand.vmem [shape: bf16[32,128], index: 3, kind: output, shape index: {}]
  %s4 = sld [smem:[#allocation0]]
  $region30: #{fc_discriminator_forward.7} parent=0
    _
  %s6 = ssub.s32 1, %s4
  %s7 = scalar_select 0, %s6, %s4
  // Predicated region
  $region2: #{fc_discriminator_forward.7} parent=0 // pred_check
    _
  $region3: #{fc_discriminator_forward.7} parent=0 // pred_check_branch
    %9 = sbr.rel (0) target = $region5
  $region4: #{fc_discriminator_forward.7} parent=0 // pred_region
    _
  $region5: #{fc_discriminator_forward.7} parent=0 // pred_fallthru
    _
  // Predicated region
  $region6: #{fc_discriminator_forward.7} parent=0 // pred_check
    _
  $region7: #{fc_discriminator_forward.7} parent=0 // pred_check_branch
    %11 = sbr.rel (0) target = $region9
  $region8: #{fc_discriminator_forward.7} parent=0 // pred_region
    _
  $region9: #{fc_discriminator_forward.7} parent=0 // pred_fallthru
    _
  // Predicated region
  $region10: #{fc_discriminator_forward.7} parent=0 // pred_check
    _
  $region11: #{fc_discriminator_forward.7} parent=0 // pred_check_branch
    %13 = sbr.rel (0) target = $region13
  $region12: #{fc_discriminator_forward.7} parent=0 // pred_region
    _
  $region13: #{fc_discriminator_forward.7} parent=0 // pred_fallthru
    _
  %p14 = scmp.eq.s32.totalorder 0, 0
  // Predicated region
  $region14: #{fc_discriminator_forward.7} parent=0 // pred_check
    %p15 = pneg %p14
  $region15: #{fc_discriminator_forward.7} parent=0 // pred_check_branch
    %17 = sbr.rel (%p15) target = $region17
  $region16: #{fc_discriminator_forward.7} parent=0 // pred_region
    %18 = vst [vmem:[#allocation2] sm:$0xff] 0.0
    %19 = vst [vmem:[#allocation2 + $0x8] sm:$0xff] 0.0
    %20 = vst [vmem:[#allocation2 + $0x10] sm:$0xff] 0.0
    %21 = vst [vmem:[#allocation2 + $0x18] sm:$0xff] 0.0
  $region17: #{fc_discriminator_forward.7} parent=0 // pred_fallthru
    _
  %v22 = vld [vmem:[#allocation2] sm:$0xff]
  %v23 = vld [vmem:[#allocation2 + $0x8] sm:$0xff]
  %v24 = vld [vmem:[#allocation2 + $0x10] sm:$0xff]
  %v25 = vld [vmem:[#allocation2 + $0x18] sm:$0xff]
  %v26 = vld [vmem:[%s0] sm:$0xff]
  %v27 = vld [vmem:[%s0 + $0x8] sm:$0xff]
  %v28 = vld [vmem:[%s0 + $0x10] sm:$0xff]
  %v29 = vld [vmem:[%s0 + $0x18] sm:$0xff]
  %v30 = vld [vmem:[%s0 + $0x20] sm:$0xff]
  %v31 = vld [vmem:[%s0 + $0x28] sm:$0xff]
  %v32 = vld [vmem:[%s0 + $0x30] sm:$0xff]
  %v33 = vld [vmem:[%s0 + $0x38] sm:$0xff]
  %v34 = vld [vmem:[%s1] sm:$0xf]
  %v35 = vld [vmem:[%s1 + $0x4] sm:$0xf]
  %v36 = vld [vmem:[%s1 + $0x8] sm:$0xf]
  %v37 = vld [vmem:[%s1 + $0xc] sm:$0xf]
  %v38 = vld [vmem:[%s1 + $0x10] sm:$0xf]
  %v39 = vld [vmem:[%s1 + $0x14] sm:$0xf]
  %v40 = vld [vmem:[%s1 + $0x18] sm:$0xf]
  %v41 = vld [vmem:[%s1 + $0x1c] sm:$0xf]
  %v42 = vld [vmem:[%s1 + $0x20] sm:$0xf]
  %v43 = vld [vmem:[%s1 + $0x24] sm:$0xf]
  %v44 = vld [vmem:[%s1 + $0x28] sm:$0xf]
  %v45 = vld [vmem:[%s1 + $0x2c] sm:$0xf]
  %v46 = vld [vmem:[%s1 + $0x30] sm:$0xf]
  %v47 = vld [vmem:[%s1 + $0x34] sm:$0xf]
  %v48 = vld [vmem:[%s1 + $0x38] sm:$0xf]
  %v49 = vld [vmem:[%s1 + $0x3c] sm:$0xf]
  %v50 = vld [vmem:[%s1 + $0x40] sm:$0xf]
  %v51 = vld [vmem:[%s1 + $0x44] sm:$0xf]
  %v52 = vld [vmem:[%s1 + $0x48] sm:$0xf]
  %v53 = vld [vmem:[%s1 + $0x4c] sm:$0xf]
  %v54 = vld [vmem:[%s1 + $0x50] sm:$0xf]
  %v55 = vld [vmem:[%s1 + $0x54] sm:$0xf]
  %v56 = vld [vmem:[%s1 + $0x58] sm:$0xf]
  %v57 = vld [vmem:[%s1 + $0x5c] sm:$0xf]
  %v58 = vld [vmem:[%s1 + $0x60] sm:$0xf]
  %v59 = vld [vmem:[%s1 + $0x64] sm:$0xf]
  %v60 = vld [vmem:[%s1 + $0x68] sm:$0xf]
  %v61 = vld [vmem:[%s1 + $0x6c] sm:$0xf]
  %v62 = vld [vmem:[%s1 + $0x70] sm:$0xf]
  %v63 = vld [vmem:[%s1 + $0x74] sm:$0xf]
  %v64 = vld [vmem:[%s1 + $0x78] sm:$0xf]
  %v65 = vld [vmem:[%s1 + $0x7c] sm:$0xf]
  %v66 = vld [vmem:[%s1 + $0x80] sm:$0xf]
  %v67 = vld [vmem:[%s1 + $0x84] sm:$0xf]
  %v68 = vld [vmem:[%s1 + $0x88] sm:$0xf]
  %v69 = vld [vmem:[%s1 + $0x8c] sm:$0xf]
  %v70 = vld [vmem:[%s1 + $0x90] sm:$0xf]
  %v71 = vld [vmem:[%s1 + $0x94] sm:$0xf]
  %v72 = vld [vmem:[%s1 + $0x98] sm:$0xf]
  %v73 = vld [vmem:[%s1 + $0x9c] sm:$0xf]
  %v74 = vld [vmem:[%s1 + $0xa0] sm:$0xf]
  %v75 = vld [vmem:[%s1 + $0xa4] sm:$0xf]
  %v76 = vld [vmem:[%s1 + $0xa8] sm:$0xf]
  %v77 = vld [vmem:[%s1 + $0xac] sm:$0xf]
  %v78 = vld [vmem:[%s1 + $0xb0] sm:$0xf]
  %v79 = vld [vmem:[%s1 + $0xb4] sm:$0xf]
  %v80 = vld [vmem:[%s1 + $0xb8] sm:$0xf]
  %v81 = vld [vmem:[%s1 + $0xbc] sm:$0xf]
  %v82 = vld [vmem:[%s1 + $0xc0] sm:$0xf]
  %v83 = vld [vmem:[%s1 + $0xc4] sm:$0xf]
  %v84 = vld [vmem:[%s1 + $0xc8] sm:$0xf]
  %v85 = vld [vmem:[%s1 + $0xcc] sm:$0xf]
  %v86 = vld [vmem:[%s1 + $0xd0] sm:$0xf]
  %v87 = vld [vmem:[%s1 + $0xd4] sm:$0xf]
  %v88 = vld [vmem:[%s1 + $0xd8] sm:$0xf]
  %v89 = vld [vmem:[%s1 + $0xdc] sm:$0xf]
  %v90 = vld [vmem:[%s1 + $0xe0] sm:$0xf]
  %v91 = vld [vmem:[%s1 + $0xe4] sm:$0xf]
  %v92 = vld [vmem:[%s1 + $0xe8] sm:$0xf]
  %v93 = vld [vmem:[%s1 + $0xec] sm:$0xf]
  %v94 = vld [vmem:[%s1 + $0xf0] sm:$0xf]
  %v95 = vld [vmem:[%s1 + $0xf4] sm:$0xf]
  %v96 = vld [vmem:[%s1 + $0xf8] sm:$0xf]
  %v97 = vld [vmem:[%s1 + $0xfc] sm:$0xf]
  %v106 = vunpack.c.l.b16 %v26
  %v107 = vunpack.c.h.b16 %v26
  %v108 = vunpack.c.l.b16 %v27
  %v109 = vunpack.c.h.b16 %v27
  %v110 = vunpack.c.l.b16 %v28
  %v111 = vunpack.c.h.b16 %v28
  %v112 = vunpack.c.l.b16 %v29
  %v113 = vunpack.c.h.b16 %v29
  %v114 = vunpack.c.l.b16 %v30
  %v115 = vunpack.c.h.b16 %v30
  %v116 = vunpack.c.l.b16 %v31
  %v117 = vunpack.c.h.b16 %v31
  %v118 = vunpack.c.l.b16 %v32
  %v119 = vunpack.c.h.b16 %v32
  %v120 = vunpack.c.l.b16 %v33
  %v121 = vunpack.c.h.b16 %v33
  %v122 = vpack.c.b16 %v110, %v106
  %v123 = vpack.c.b16 %v111, %v107
  %v124 = vpack.c.b16 %v112, %v108
  %v125 = vpack.c.b16 %v113, %v109
  %v126 = vpack.c.b16 %v118, %v114
  %v127 = vpack.c.b16 %v119, %v115
  %v128 = vpack.c.b16 %v120, %v116
  %v129 = vpack.c.b16 %v121, %v117
  %v202 = vunpack.c.l.b16 %v34
  %v203 = vunpack.c.l.b16 %v35
  %v204 = vunpack.c.l.b16 %v36
  %v205 = vunpack.c.l.b16 %v37
  %v206 = vunpack.c.l.b16 %v38
  %v207 = vunpack.c.l.b16 %v39
  %v208 = vunpack.c.l.b16 %v40
  %v209 = vunpack.c.l.b16 %v41
  %v210 = vunpack.c.l.b16 %v42
  %v211 = vunpack.c.l.b16 %v43
  %v212 = vunpack.c.l.b16 %v44
  %v213 = vunpack.c.l.b16 %v45
  %v214 = vunpack.c.l.b16 %v46
  %v215 = vunpack.c.l.b16 %v47
  %v216 = vunpack.c.l.b16 %v48
  %v217 = vunpack.c.l.b16 %v49
  %v218 = vunpack.c.l.b16 %v50
  %v219 = vunpack.c.l.b16 %v51
  %v220 = vunpack.c.l.b16 %v52
  %v221 = vunpack.c.l.b16 %v53
  %v222 = vunpack.c.l.b16 %v54
  %v223 = vunpack.c.l.b16 %v55
  %v224 = vunpack.c.l.b16 %v56
  %v225 = vunpack.c.l.b16 %v57
  %v226 = vunpack.c.l.b16 %v58
  %v227 = vunpack.c.l.b16 %v59
  %v228 = vunpack.c.l.b16 %v60
  %v229 = vunpack.c.l.b16 %v61
  %v230 = vunpack.c.l.b16 %v62
  %v231 = vunpack.c.l.b16 %v63
  %v232 = vunpack.c.l.b16 %v64
  %v233 = vunpack.c.l.b16 %v65
  %v234 = vunpack.c.l.b16 %v66
  %v235 = vunpack.c.l.b16 %v67
  %v236 = vunpack.c.l.b16 %v68
  %v237 = vunpack.c.l.b16 %v69
  %v238 = vunpack.c.l.b16 %v70
  %v239 = vunpack.c.l.b16 %v71
  %v240 = vunpack.c.l.b16 %v72
  %v241 = vunpack.c.l.b16 %v73
  %v242 = vunpack.c.l.b16 %v74
  %v243 = vunpack.c.l.b16 %v75
  %v244 = vunpack.c.l.b16 %v76
  %v245 = vunpack.c.l.b16 %v77
  %v246 = vunpack.c.l.b16 %v78
  %v247 = vunpack.c.l.b16 %v79
  %v248 = vunpack.c.l.b16 %v80
  %v249 = vunpack.c.l.b16 %v81
  %v250 = vunpack.c.l.b16 %v82
  %v251 = vunpack.c.l.b16 %v83
  %v252 = vunpack.c.l.b16 %v84
  %v253 = vunpack.c.l.b16 %v85
  %v254 = vunpack.c.l.b16 %v86
  %v255 = vunpack.c.l.b16 %v87
  %v256 = vunpack.c.l.b16 %v88
  %v257 = vunpack.c.l.b16 %v89
  %v258 = vunpack.c.l.b16 %v90
  %v259 = vunpack.c.l.b16 %v91
  %v260 = vunpack.c.l.b16 %v92
  %v261 = vunpack.c.l.b16 %v93
  %v262 = vunpack.c.l.b16 %v94
  %v263 = vunpack.c.l.b16 %v95
  %v264 = vunpack.c.l.b16 %v96
  %v265 = vunpack.c.l.b16 %v97
  %v266 = vpack.c.b16 %v203, %v202
  %v267 = vpack.c.b16 %v205, %v204
  %v268 = vpack.c.b16 %v207, %v206
  %v269 = vpack.c.b16 %v209, %v208
  %v270 = vpack.c.b16 %v211, %v210
  %v271 = vpack.c.b16 %v213, %v212
  %v272 = vpack.c.b16 %v215, %v214
  %v273 = vpack.c.b16 %v217, %v216
  %v274 = vpack.c.b16 %v219, %v218
  %v275 = vpack.c.b16 %v221, %v220
  %v276 = vpack.c.b16 %v223, %v222
  %v277 = vpack.c.b16 %v225, %v224
  %v278 = vpack.c.b16 %v227, %v226
  %v279 = vpack.c.b16 %v229, %v228
  %v280 = vpack.c.b16 %v231, %v230
  %v281 = vpack.c.b16 %v233, %v232
  %v282 = vpack.c.b16 %v235, %v234
  %v283 = vpack.c.b16 %v237, %v236
  %v284 = vpack.c.b16 %v239, %v238
  %v285 = vpack.c.b16 %v241, %v240
  %v286 = vpack.c.b16 %v243, %v242
  %v287 = vpack.c.b16 %v245, %v244
  %v288 = vpack.c.b16 %v247, %v246
  %v289 = vpack.c.b16 %v249, %v248
  %v290 = vpack.c.b16 %v251, %v250
  %v291 = vpack.c.b16 %v253, %v252
  %v292 = vpack.c.b16 %v255, %v254
  %v293 = vpack.c.b16 %v257, %v256
  %v294 = vpack.c.b16 %v259, %v258
  %v295 = vpack.c.b16 %v261, %v260
  %v296 = vpack.c.b16 %v263, %v262
  %v297 = vpack.c.b16 %v265, %v264
  %330 = vmatpush.bf16.msra.mxu0 %v273
  %331 = vmatpush.bf16.msra.mxu0 %v272
  %332 = vmatpush.bf16.msra.mxu0 %v271
  %333 = vmatpush.bf16.msra.mxu0 %v270
  %334 = vmatpush.bf16.msra.mxu0 %v269
  %335 = vmatpush.bf16.msra.mxu0 %v268
  %336 = vmatpush.bf16.msra.mxu0 %v267
  %337 = vmatpush.bf16.msra.mxu0 %v266
  %338 = vmatmul.bf16.gmra.mxu0 %v122
  %v339 = vpop.f32.mrf.mxu0
  %v340 = vadd.f32 0.0, %v339
  %v341 = vpop.f32.mrf.mxu0
  %v342 = vadd.f32 0.0, %v341
  %343 = vmatmul.bf16.gmra.mxu0 %v126
  %v344 = vpop.f32.mrf.mxu0
  %v345 = vadd.f32 0.0, %v344
  %v346 = vpop.f32.mrf.mxu0
  %v347 = vadd.f32 0.0, %v346
  %348 = vdwg.mxu0
  %349 = vmatpush.bf16.msra.mxu0 %v281
  %350 = vmatpush.bf16.msra.mxu0 %v280
  %351 = vmatpush.bf16.msra.mxu0 %v279
  %352 = vmatpush.bf16.msra.mxu0 %v278
  %353 = vmatpush.bf16.msra.mxu0 %v277
  %354 = vmatpush.bf16.msra.mxu0 %v276
  %355 = vmatpush.bf16.msra.mxu0 %v275
  %356 = vmatpush.bf16.msra.mxu0 %v274
  %357 = vmatmul.bf16.gmra.mxu0 %v123
  %v358 = vpop.f32.mrf.mxu0
  %v359 = vadd.f32 %v340, %v358
  %v360 = vpop.f32.mrf.mxu0
  %v361 = vadd.f32 %v342, %v360
  %362 = vmatmul.bf16.gmra.mxu0 %v127
  %v363 = vpop.f32.mrf.mxu0
  %v364 = vadd.f32 %v345, %v363
  %v365 = vpop.f32.mrf.mxu0
  %v366 = vadd.f32 %v347, %v365
  %367 = vdwg.mxu0
  %368 = vmatpush.bf16.msra.mxu0 %v289
  %369 = vmatpush.bf16.msra.mxu0 %v288
  %370 = vmatpush.bf16.msra.mxu0 %v287
  %371 = vmatpush.bf16.msra.mxu0 %v286
  %372 = vmatpush.bf16.msra.mxu0 %v285
  %373 = vmatpush.bf16.msra.mxu0 %v284
  %374 = vmatpush.bf16.msra.mxu0 %v283
  %375 = vmatpush.bf16.msra.mxu0 %v282
  %376 = vmatmul.bf16.gmra.mxu0 %v124
  %v377 = vpop.f32.mrf.mxu0
  %v378 = vadd.f32 %v359, %v377
  %v379 = vpop.f32.mrf.mxu0
  %v380 = vadd.f32 %v361, %v379
  %381 = vmatmul.bf16.gmra.mxu0 %v128
  %v382 = vpop.f32.mrf.mxu0
  %v383 = vadd.f32 %v364, %v382
  %v384 = vpop.f32.mrf.mxu0
  %v385 = vadd.f32 %v366, %v384
  %386 = vdwg.mxu0
  %387 = vmatpush.bf16.msra.mxu0 %v297
  %388 = vmatpush.bf16.msra.mxu0 %v296
  %389 = vmatpush.bf16.msra.mxu0 %v295
  %390 = vmatpush.bf16.msra.mxu0 %v294
  %391 = vmatpush.bf16.msra.mxu0 %v293
  %392 = vmatpush.bf16.msra.mxu0 %v292
  %393 = vmatpush.bf16.msra.mxu0 %v291
  %394 = vmatpush.bf16.msra.mxu0 %v290
  %395 = vmatmul.bf16.gmra.mxu0 %v125
  %v396 = vpop.f32.mrf.mxu0
  %v397 = vadd.f32 %v378, %v396
  %v398 = vpop.f32.mrf.mxu0
  %v399 = vadd.f32 %v380, %v398
  %400 = vmatmul.bf16.gmra.mxu0 %v129
  %v401 = vpop.f32.mrf.mxu0
  %v402 = vadd.f32 %v383, %v401
  %v403 = vpop.f32.mrf.mxu0
  %v404 = vadd.f32 %v385, %v403
  %405 = vdwg.mxu0
  %v406 = vadd.f32 %v22, %v397
  %v407 = vadd.f32 %v23, %v399
  %v408 = vadd.f32 %v24, %v402
  %v409 = vadd.f32 %v25, %v404
  %410 = vst [vmem:[#allocation2] sm:$0xff] %v406
  %411 = vst [vmem:[#allocation2 + $0x8] sm:$0xff] %v407
  %412 = vst [vmem:[#allocation2 + $0x10] sm:$0xff] %v408
  %413 = vst [vmem:[#allocation2 + $0x18] sm:$0xff] %v409
  // Predicated region
  $region18: #{fc_discriminator_forward.7} parent=0 // pred_check
    %p414 = pneg %p14
  $region19: #{fc_discriminator_forward.7} parent=0 // pred_check_branch
    %416 = sbr.rel (%p414) target = $region21
  $region20: #{fc_discriminator_forward.7} parent=0 // pred_region
    %v417 = vld [vmem:[#allocation2] sm:$0xff]
    %v418 = vld [vmem:[#allocation2 + $0x8] sm:$0xff]
    %v419 = vld [vmem:[#allocation2 + $0x10] sm:$0xff]
    %v420 = vld [vmem:[#allocation2 + $0x18] sm:$0xff]
    %v421 = vld [vmem:[%s2] sm:$0x1]
    %v423 = vperm.slane %v421, 0
    %v425 = vadd.f32 %v417, %v423
    %v426 = vadd.f32 %v418, %v423
    %v427 = vadd.f32 %v419, %v423
    %v428 = vadd.f32 %v420, %v423
    %vm429 = vcmp.gt.f32.partialorder %v425, 0.0
    %vm430 = vcmp.gt.f32.partialorder %v426, 0.0
    %vm431 = vcmp.gt.f32.partialorder %v427, 0.0
    %vm432 = vcmp.gt.f32.partialorder %v428, 0.0
    %v433 = vmul.f32 %v425, 0.2
    %v434 = vmul.f32 %v426, 0.2
    %v435 = vmul.f32 %v427, 0.2
    %v436 = vmul.f32 %v428, 0.2
    %v437 = vsel %vm429, %v425, %v433
    %v438 = vsel %vm430, %v426, %v434
    %v439 = vsel %vm431, %v427, %v435
    %v440 = vsel %vm432, %v428, %v436
    %v441 = vpack.c.bf16 %v437, %v437
    %v442 = vpack.c.bf16 %v438, %v438
    %v443 = vpack.c.bf16 %v439, %v439
    %v444 = vpack.c.bf16 %v440, %v440
    %445 = vst [vmem:[%s3] sm:$0xf] %v441
    %446 = vst [vmem:[%s3 + $0x4] sm:$0xf] %v442
    %447 = vst [vmem:[%s3 + $0x8] sm:$0xf] %v443
    %448 = vst [vmem:[%s3 + $0xc] sm:$0xf] %v444
  $region21: #{fc_discriminator_forward.7} parent=0 // pred_fallthru
    _
  // Predicated region
  $region22: #{fc_discriminator_forward.7} parent=0 // pred_check
    _
  $region23: #{fc_discriminator_forward.7} parent=0 // pred_check_branch
    %450 = sbr.rel (0) target = $region25
  $region24: #{fc_discriminator_forward.7} parent=0 // pred_region
    _
  $region25: #{fc_discriminator_forward.7} parent=0 // pred_fallthru
    _
  // Predicated region
  $region26: #{fc_discriminator_forward.7} parent=0 // pred_check
    _
  $region27: #{fc_discriminator_forward.7} parent=0 // pred_check_branch
    %452 = sbr.rel (0) target = $region29
  $region28: #{fc_discriminator_forward.7} parent=0 // pred_region
    _
  $region29: #{fc_discriminator_forward.7} parent=0 // pred_fallthru
    _

// kernel: fc_discriminator_forward.8
$region0: #{fc_discriminator_forward.8}
  #allocation0 [shape = 'u32[]', space=smem, size = 0x4, offset = 0x4, fixed_abs, tag = 'smem constant byte address 0x4 - core index']
  #allocation1 [shape = 'u32[72,128]{1,0:T(1,128)}', space=vmem, size = 0x9000, scoped, tag = 'internal scratch']
  #allocation2 [shape = 'f32[8,128]{1,0:T(8,128)}', space=vmem, size = 0x1000, scoped, tag = 'scratch operand']
  %s0 = inlined_call_operand.vmem [shape: bf16[8,1024], index: 0, kind: input, shape index: {}]
  %s1 = inlined_call_operand.vmem [shape: bf16[1024,128], index: 1, kind: input, shape index: {}]
  %s2 = inlined_call_operand.vmem [shape: f32[1,128], index: 2, kind: input, shape index: {}]
  %s3 = inlined_call_operand.vmem [shape: bf16[8,128], index: 3, kind: output, shape index: {}]
  %s4 = sld [smem:[#allocation0]]
  $region53: #{fc_discriminator_forward.8} parent=0
    _
  %s6 = ssub.s32 1, %s4
  %s7 = scalar_select 0, %s6, %s4
  loop: start=0, step=1, limit=4
  $region2: #{fc_discriminator_forward.8} parent=0 // loop_pre_header
    _
  $region3: #{fc_discriminator_forward.8} parent=0 // loop_header
    %s9 = sphi 0, %s13
    %p10 = scmp.ge.s32.totalorder %s9, 4
    %s16 = sphi 0, %s28
    %s17 = sphi 0, %s24
    %s18 = sphi 0, %s16
    %s19 = sphi 0, %s17
    %s20 = sphi 0, %s18
    %s21 = sphi 0, %s19
    %s33 = sphi 0, %s35
    %s36 = sphi 0, %s33
    %s37 = sphi 0, %s36
    %s53 = sphi 0, %s37
    %s59 = sphi 0, %s61
    %s62 = sphi 0, %s59
    %s63 = sphi 0, %s62
    %s79 = sphi 0, %s63
    %s83 = sphi 0, %s83
    %s85 = sphi 0, %s83
    %s86 = sphi 0, %s85
    %s100 = sphi 0, %s86
    %s106 = sphi 0, %s108
    %s109 = sphi 0, %s106
    %s110 = sphi 0, %s109
    %s126 = sphi 0, %s110
  $region4: #{fc_discriminator_forward.8} parent=0 // loop_header_branch
    %12 = sbr.rel (%p10) target = $region8
  $region5: #{fc_discriminator_forward.8} parent=0 // loop_body
    %s14 = ssub.s32 %s9, 1
    %s15 = ssub.s32 %s9, 2
    %s22 = sadd.s32 1, %s17
    %p23 = scmp.ge.s32.totalorder %s22, 2
    %s24 = scalar_select %p23, 0, %s22
    %s25 = sadd.s32 1, %s16
    %s26 = scalar_select %p23, %s25, %s16
    %p27 = scmp.ge.s32.totalorder %s26, 1
    %s28 = scalar_select %p27, 0, %s26
    %s29 = ssub.s32 %s16, %s28
    %s30 = ssub.s32 %s17, %s24
    %s31 = sor.u32 %s29, %s30
    %p32 = scmp.eq.s32.totalorder %s31, 0
    %s34 = sadd.s32 %s33, 1
    %s35 = scalar_select %p32, %s33, %s34
    %p38 = pneg %p32
    %p39 = scmp.eq.s32.totalorder %s9, 1
    %p40 = por %p38, %p39
    %p41 = scmp.ne.s32.totalorder %s33, %s36
    %p42 = scmp.eq.s32.totalorder %s9, 0
    %p43 = por %p41, %p42
    %p44 = scmp.ne.s32.totalorder %s33, %s36
    %p45 = scmp.eq.s32.totalorder %s14, 1
    %p46 = por %p44, %p45
    %p47 = scmp.ne.s32.totalorder %s36, %s37
    %p48 = scmp.eq.s32.totalorder %s14, 0
    %p49 = por %p47, %p48
    %p50 = scmp.ne.s32.totalorder %s36, %s37
    %p51 = scmp.eq.s32.totalorder %s15, 1
    %p52 = por %p50, %p51
    %p54 = scmp.ne.s32.totalorder %s37, %s53
    %p55 = scmp.eq.s32.totalorder %s15, 0
    %p56 = por %p54, %p55
    %s57 = ssub.s32 %s17, %s24
    %p58 = scmp.eq.s32.totalorder %s57, 0
    %s60 = sadd.s32 %s59, 1
    %s61 = scalar_select %p58, %s59, %s60
    %p64 = pneg %p58
    %p65 = scmp.eq.s32.totalorder %s9, 1
    %p66 = por %p64, %p65
    %p67 = scmp.ne.s32.totalorder %s59, %s62
    %p68 = scmp.eq.s32.totalorder %s9, 0
    %p69 = por %p67, %p68
    %p70 = scmp.ne.s32.totalorder %s59, %s62
    %p71 = scmp.eq.s32.totalorder %s14, 1
    %p72 = por %p70, %p71
    %p73 = scmp.ne.s32.totalorder %s62, %s63
    %p74 = scmp.eq.s32.totalorder %s14, 0
    %p75 = por %p73, %p74
    %p76 = scmp.ne.s32.totalorder %s62, %s63
    %p77 = scmp.eq.s32.totalorder %s15, 1
    %p78 = por %p76, %p77
    %p80 = scmp.ne.s32.totalorder %s63, %s79
    %p81 = scmp.eq.s32.totalorder %s15, 0
    %p82 = por %p80, %p81
    %s84 = sadd.s32 %s83, 1
    %p87 = scmp.eq.s32.totalorder %s9, 1
    %p88 = scmp.ne.s32.totalorder %s83, %s85
    %p89 = scmp.eq.s32.totalorder %s9, 0
    %p90 = por %p88, %p89
    %p91 = scmp.ne.s32.totalorder %s83, %s85
    %p92 = scmp.eq.s32.totalorder %s14, 1
    %p93 = por %p91, %p92
    %p94 = scmp.ne.s32.totalorder %s85, %s86
    %p95 = scmp.eq.s32.totalorder %s14, 0
    %p96 = por %p94, %p95
    %p97 = scmp.ne.s32.totalorder %s85, %s86
    %p98 = scmp.eq.s32.totalorder %s15, 1
    %p99 = por %p97, %p98
    %p101 = scmp.ne.s32.totalorder %s86, %s100
    %p102 = scmp.eq.s32.totalorder %s15, 0
    %p103 = por %p101, %p102
    %s104 = ssub.s32 %s16, %s28
    %p105 = scmp.eq.s32.totalorder %s104, 0
    %s107 = sadd.s32 %s106, 1
    %s108 = scalar_select %p105, %s106, %s107
    %p111 = pneg %p105
    %p112 = scmp.eq.s32.totalorder %s9, 1
    %p113 = por %p111, %p112
    %p114 = scmp.ne.s32.totalorder %s106, %s109
    %p115 = scmp.eq.s32.totalorder %s9, 0
    %p116 = por %p114, %p115
    %p117 = scmp.ne.s32.totalorder %s106, %s109
    %p118 = scmp.eq.s32.totalorder %s14, 1
    %p119 = por %p117, %p118
    %p120 = scmp.ne.s32.totalorder %s109, %s110
    %p121 = scmp.eq.s32.totalorder %s14, 0
    %p122 = por %p120, %p121
    %p123 = scmp.ne.s32.totalorder %s109, %s110
    %p124 = scmp.eq.s32.totalorder %s15, 1
    %p125 = por %p123, %p124
    %p127 = scmp.ne.s32.totalorder %s110, %s126
    %p128 = scmp.eq.s32.totalorder %s15, 0
    %p129 = por %p127, %p128
    %p130 = scmp.le.s32.totalorder 1, %s9
    %p131 = scmp.lt.s32.totalorder %s9, 3
    %p132 = pnand %p130, %p131
    %p133 = pneg %p132
    // Predicated region
    $region9: #{fc_discriminator_forward.8} parent=5 // pred_check
      _
    $region10: #{fc_discriminator_forward.8} parent=5 // pred_check_branch
      %135 = sbr.rel (%p132) target = $region12
    $region11: #{fc_discriminator_forward.8} parent=5 // pred_region
      %s136 = ssub.s32 %s9, 1
      // Predicated region
      $region13: #{fc_discriminator_forward.8} parent=11 // pred_check
        %p137 = pneg %p96
      $region14: #{fc_discriminator_forward.8} parent=11 // pred_check_branch
        %139 = sbr.rel (%p137) target = $region16
      $region15: #{fc_discriminator_forward.8} parent=11 // pred_region
        _
      $region16: #{fc_discriminator_forward.8} parent=11 // pred_fallthru
        _
    $region12: #{fc_discriminator_forward.8} parent=5 // pred_fallthru
      _
    %p140 = scmp.lt.s32.totalorder %s9, 2
    // Predicated region
    $region17: #{fc_discriminator_forward.8} parent=5 // pred_check
      %p141 = pneg %p140
    $region18: #{fc_discriminator_forward.8} parent=5 // pred_check_branch
      %143 = sbr.rel (%p141) target = $region20
    $region19: #{fc_discriminator_forward.8} parent=5 // pred_region
      // Predicated region
      $region21: #{fc_discriminator_forward.8} parent=19 // pred_check
        %p144 = pneg %p43
      $region22: #{fc_discriminator_forward.8} parent=19 // pred_check_branch
        %146 = sbr.rel (%p144) target = $region24
      $region23: #{fc_discriminator_forward.8} parent=19 // pred_region
        %s147 = smul.u32 4, %s17
        %p148 = scmp.lt.s32.totalorder %s16, 0
        %s149 = scalar_select %p148, %s16, 0
        %p150 = scmp.lt.s32.totalorder %s147, 7
        %s151 = scalar_select %p150, %s147, 7
        %s152 = smul.addr %s149, 8
        %s153 = sadd.s32 %s151, %s152
        %s154 = smul.addr %s153, 4
        %s155 = scalar_lea.vmem %s0, %s154
        %s156 = smul.u32 4, %s17
      $region24: #{fc_discriminator_forward.8} parent=19 // pred_fallthru
        _
      // Predicated region
      $region25: #{fc_discriminator_forward.8} parent=19 // pred_check
        %p157 = pneg %p69
      $region26: #{fc_discriminator_forward.8} parent=19 // pred_check_branch
        %159 = sbr.rel (%p157) target = $region28
      $region27: #{fc_discriminator_forward.8} parent=19 // pred_region
        %s160 = smul.u32 64, %s17
        %p161 = scmp.lt.s32.totalorder %s160, 127
        %s162 = scalar_select %p161, %s160, 127
        %s163 = smul.addr %s162, 4
        %s164 = scalar_lea.vmem %s1, %s163
        %s165 = smul.u32 64, %s17
      $region28: #{fc_discriminator_forward.8} parent=19 // pred_fallthru
        _
    $region20: #{fc_discriminator_forward.8} parent=5 // pred_fallthru
      _
    %p166 = scmp.le.s32.totalorder 1, %s9
    %p167 = scmp.lt.s32.totalorder %s9, 3
    %p168 = pnand %p166, %p167
    %p169 = pneg %p168
    // Predicated region
    $region29: #{fc_discriminator_forward.8} parent=5 // pred_check
      _
    $region30: #{fc_discriminator_forward.8} parent=5 // pred_check_branch
      %171 = sbr.rel (%p168) target = $region32
    $region31: #{fc_discriminator_forward.8} parent=5 // pred_region
      %s172 = ssub.s32 %s9, 1
      %s173 = smul.u32 4, %s19
      %p174 = scmp.lt.s32.totalorder %s18, 0
      %s175 = scalar_select %p174, %s18, 0
      %p176 = scmp.lt.s32.totalorder %s173, 7
      %s177 = scalar_select %p176, %s173, 7
      %s178 = smul.addr %s175, 8
      %s179 = sadd.s32 %s177, %s178
      %s180 = smul.addr %s179, 4
      %s181 = scalar_lea.vmem %s0, %s180
      %p182 = pneg %p49
      %p183 = pneg %p46
      %s184 = smul.u32 64, %s19
      %p185 = scmp.lt.s32.totalorder %s184, 127
      %s186 = scalar_select %p185, %s184, 127
      %s187 = smul.addr %s186, 4
      %s188 = scalar_lea.vmem %s1, %s187
      %p189 = pneg %p75
      %p190 = pneg %p72
      %p191 = pneg %p96
      %p192 = pneg %p93
      %p193 = pneg %p122
      %p194 = pneg %p119
      %p195 = scmp.lt.s32.totalorder %s18, 0
      %s196 = scalar_select %p195, %s18, 0
      %s197 = smul.addr %s196, 4
      %s198 = scalar_lea.vmem %s3, %s197
      %s199 = smul.u32 4, %s19
      %p200 = scmp.lt.s32.totalorder %s18, 0
      %s201 = scalar_select %p200, %s18, 0
      %p202 = scmp.lt.s32.totalorder %s199, 7
      %s203 = scalar_select %p202, %s199, 7
      %s204 = smul.addr %s201, 8
      %s205 = sadd.s32 %s203, %s204
      %s206 = smul.addr %s205, 4
      %s207 = scalar_lea.vmem %s0, %s206
      %s208 = smul.u32 4, %s19
      %s209 = smul.u32 64, %s19
      %p210 = scmp.lt.s32.totalorder %s209, 127
      %s211 = scalar_select %p210, %s209, 127
      %s212 = smul.addr %s211, 4
      %s213 = scalar_lea.vmem %s1, %s212
      %s214 = smul.u32 64, %s19
      %p215 = scmp.lt.s32.totalorder %s18, 0
      %s216 = scalar_select %p215, %s18, 0
      %s217 = smul.addr %s216, 4
      %s218 = scalar_lea.vmem %s3, %s217
      %p219 = scmp.eq.s32.totalorder %s19, 0
      // Predicated region
      $region33: #{fc_discriminator_forward.8} parent=31 // pred_check
        %p220 = pneg %p219
      $region34: #{fc_discriminator_forward.8} parent=31 // pred_check_branch
        %222 = sbr.rel (%p220) target = $region36
      $region35: #{fc_discriminator_forward.8} parent=31 // pred_region
        %223 = vst [vmem:[#allocation2] sm:$0xff] 0.0
      $region36: #{fc_discriminator_forward.8} parent=31 // pred_fallthru
        _
      %v224 = vld [vmem:[#allocation2] sm:$0xff]
      %v225 = vld [vmem:[%s207] sm:$0xff]
      %v226 = vld [vmem:[%s207 + $0x8] sm:$0xff]
      %v227 = vld [vmem:[%s213] sm:$0xf]
      %v228 = vld [vmem:[%s213 + $0x4] sm:$0xf]
      %v229 = vld [vmem:[%s213 + $0x8] sm:$0xf]
      %v230 = vld [vmem:[%s213 + $0xc] sm:$0xf]
      %v231 = vld [vmem:[%s213 + $0x10] sm:$0xf]
      %v232 = vld [vmem:[%s213 + $0x14] sm:$0xf]
      %v233 = vld [vmem:[%s213 + $0x18] sm:$0xf]
      %v234 = vld [vmem:[%s213 + $0x1c] sm:$0xf]
      %v235 = vld [vmem:[%s213 + $0x20] sm:$0xf]
      %v236 = vld [vmem:[%s213 + $0x24] sm:$0xf]
      %v237 = vld [vmem:[%s213 + $0x28] sm:$0xf]
      %v238 = vld [vmem:[%s213 + $0x2c] sm:$0xf]
      %v239 = vld [vmem:[%s213 + $0x30] sm:$0xf]
      %v240 = vld [vmem:[%s213 + $0x34] sm:$0xf]
      %v241 = vld [vmem:[%s213 + $0x38] sm:$0xf]
      %v242 = vld [vmem:[%s213 + $0x3c] sm:$0xf]
      %v243 = vld [vmem:[%s213 + $0x40] sm:$0xf]
      %v244 = vld [vmem:[%s213 + $0x44] sm:$0xf]
      %v245 = vld [vmem:[%s213 + $0x48] sm:$0xf]
      %v246 = vld [vmem:[%s213 + $0x4c] sm:$0xf]
      %v247 = vld [vmem:[%s213 + $0x50] sm:$0xf]
      %v248 = vld [vmem:[%s213 + $0x54] sm:$0xf]
      %v249 = vld [vmem:[%s213 + $0x58] sm:$0xf]
      %v250 = vld [vmem:[%s213 + $0x5c] sm:$0xf]
      %v251 = vld [vmem:[%s213 + $0x60] sm:$0xf]
      %v252 = vld [vmem:[%s213 + $0x64] sm:$0xf]
      %v253 = vld [vmem:[%s213 + $0x68] sm:$0xf]
      %v254 = vld [vmem:[%s213 + $0x6c] sm:$0xf]
      %v255 = vld [vmem:[%s213 + $0x70] sm:$0xf]
      %v256 = vld [vmem:[%s213 + $0x74] sm:$0xf]
      %v257 = vld [vmem:[%s213 + $0x78] sm:$0xf]
      %v258 = vld [vmem:[%s213 + $0x7c] sm:$0xf]
      %v259 = vld [vmem:[%s213 + $0x80] sm:$0xf]
      %v260 = vld [vmem:[%s213 + $0x84] sm:$0xf]
      %v261 = vld [vmem:[%s213 + $0x88] sm:$0xf]
      %v262 = vld [vmem:[%s213 + $0x8c] sm:$0xf]
      %v263 = vld [vmem:[%s213 + $0x90] sm:$0xf]
      %v264 = vld [vmem:[%s213 + $0x94] sm:$0xf]
      %v265 = vld [vmem:[%s213 + $0x98] sm:$0xf]
      %v266 = vld [vmem:[%s213 + $0x9c] sm:$0xf]
      %v267 = vld [vmem:[%s213 + $0xa0] sm:$0xf]
      %v268 = vld [vmem:[%s213 + $0xa4] sm:$0xf]
      %v269 = vld [vmem:[%s213 + $0xa8] sm:$0xf]
      %v270 = vld [vmem:[%s213 + $0xac] sm:$0xf]
      %v271 = vld [vmem:[%s213 + $0xb0] sm:$0xf]
      %v272 = vld [vmem:[%s213 + $0xb4] sm:$0xf]
      %v273 = vld [vmem:[%s213 + $0xb8] sm:$0xf]
      %v274 = vld [vmem:[%s213 + $0xbc] sm:$0xf]
      %v275 = vld [vmem:[%s213 + $0xc0] sm:$0xf]
      %v276 = vld [vmem:[%s213 + $0xc4] sm:$0xf]
      %v277 = vld [vmem:[%s213 + $0xc8] sm:$0xf]
      %v278 = vld [vmem:[%s213 + $0xcc] sm:$0xf]
      %v279 = vld [vmem:[%s213 + $0xd0] sm:$0xf]
      %v280 = vld [vmem:[%s213 + $0xd4] sm:$0xf]
      %v281 = vld [vmem:[%s213 + $0xd8] sm:$0xf]
      %v282 = vld [vmem:[%s213 + $0xdc] sm:$0xf]
      %v283 = vld [vmem:[%s213 + $0xe0] sm:$0xf]
      %v284 = vld [vmem:[%s213 + $0xe4] sm:$0xf]
      %v285 = vld [vmem:[%s213 + $0xe8] sm:$0xf]
      %v286 = vld [vmem:[%s213 + $0xec] sm:$0xf]
      %v287 = vld [vmem:[%s213 + $0xf0] sm:$0xf]
      %v288 = vld [vmem:[%s213 + $0xf4] sm:$0xf]
      %v289 = vld [vmem:[%s213 + $0xf8] sm:$0xf]
      %v290 = vld [vmem:[%s213 + $0xfc] sm:$0xf]
      %v293 = vunpack.c.l.b16 %v225
      %v294 = vunpack.c.h.b16 %v225
      %v295 = vunpack.c.l.b16 %v226
      %v296 = vunpack.c.h.b16 %v226
      %v297 = vpack.c.b16 %v293, %v293
      %v298 = vpack.c.b16 %v294, %v294
      %v299 = vpack.c.b16 %v295, %v295
      %v300 = vpack.c.b16 %v296, %v296
      %v369 = vunpack.c.l.b16 %v227
      %v370 = vunpack.c.l.b16 %v228
      %v371 = vunpack.c.l.b16 %v229
      %v372 = vunpack.c.l.b16 %v230
      %v373 = vunpack.c.l.b16 %v231
      %v374 = vunpack.c.l.b16 %v232
      %v375 = vunpack.c.l.b16 %v233
      %v376 = vunpack.c.l.b16 %v234
      %v377 = vunpack.c.l.b16 %v235
      %v378 = vunpack.c.l.b16 %v236
      %v379 = vunpack.c.l.b16 %v237
      %v380 = vunpack.c.l.b16 %v238
      %v381 = vunpack.c.l.b16 %v239
      %v382 = vunpack.c.l.b16 %v240
      %v383 = vunpack.c.l.b16 %v241
      %v384 = vunpack.c.l.b16 %v242
      %v385 = vunpack.c.l.b16 %v243
      %v386 = vunpack.c.l.b16 %v244
      %v387 = vunpack.c.l.b16 %v245
      %v388 = vunpack.c.l.b16 %v246
      %v389 = vunpack.c.l.b16 %v247
      %v390 = vunpack.c.l.b16 %v248
      %v391 = vunpack.c.l.b16 %v249
      %v392 = vunpack.c.l.b16 %v250
      %v393 = vunpack.c.l.b16 %v251
      %v394 = vunpack.c.l.b16 %v252
      %v395 = vunpack.c.l.b16 %v253
      %v396 = vunpack.c.l.b16 %v254
      %v397 = vunpack.c.l.b16 %v255
      %v398 = vunpack.c.l.b16 %v256
      %v399 = vunpack.c.l.b16 %v257
      %v400 = vunpack.c.l.b16 %v258
      %v401 = vunpack.c.l.b16 %v259
      %v402 = vunpack.c.l.b16 %v260
      %v403 = vunpack.c.l.b16 %v261
      %v404 = vunpack.c.l.b16 %v262
      %v405 = vunpack.c.l.b16 %v263
      %v406 = vunpack.c.l.b16 %v264
      %v407 = vunpack.c.l.b16 %v265
      %v408 = vunpack.c.l.b16 %v266
      %v409 = vunpack.c.l.b16 %v267
      %v410 = vunpack.c.l.b16 %v268
      %v411 = vunpack.c.l.b16 %v269
      %v412 = vunpack.c.l.b16 %v270
      %v413 = vunpack.c.l.b16 %v271
      %v414 = vunpack.c.l.b16 %v272
      %v415 = vunpack.c.l.b16 %v273
      %v416 = vunpack.c.l.b16 %v274
      %v417 = vunpack.c.l.b16 %v275
      %v418 = vunpack.c.l.b16 %v276
      %v419 = vunpack.c.l.b16 %v277
      %v420 = vunpack.c.l.b16 %v278
      %v421 = vunpack.c.l.b16 %v279
      %v422 = vunpack.c.l.b16 %v280
      %v423 = vunpack.c.l.b16 %v281
      %v424 = vunpack.c.l.b16 %v282
      %v425 = vunpack.c.l.b16 %v283
      %v426 = vunpack.c.l.b16 %v284
      %v427 = vunpack.c.l.b16 %v285
      %v428 = vunpack.c.l.b16 %v286
      %v429 = vunpack.c.l.b16 %v287
      %v430 = vunpack.c.l.b16 %v288
      %v431 = vunpack.c.l.b16 %v289
      %v432 = vunpack.c.l.b16 %v290
      %v433 = vpack.c.b16 %v370, %v369
      %v434 = vpack.c.b16 %v372, %v371
      %v435 = vpack.c.b16 %v374, %v373
      %v436 = vpack.c.b16 %v376, %v375
      %v437 = vpack.c.b16 %v378, %v377
      %v438 = vpack.c.b16 %v380, %v379
      %v439 = vpack.c.b16 %v382, %v381
      %v440 = vpack.c.b16 %v384, %v383
      %v441 = vpack.c.b16 %v386, %v385
      %v442 = vpack.c.b16 %v388, %v387
      %v443 = vpack.c.b16 %v390, %v389
      %v444 = vpack.c.b16 %v392, %v391
      %v445 = vpack.c.b16 %v394, %v393
      %v446 = vpack.c.b16 %v396, %v395
      %v447 = vpack.c.b16 %v398, %v397
      %v448 = vpack.c.b16 %v400, %v399
      %v449 = vpack.c.b16 %v402, %v401
      %v450 = vpack.c.b16 %v404, %v403
      %v451 = vpack.c.b16 %v406, %v405
      %v452 = vpack.c.b16 %v408, %v407
      %v453 = vpack.c.b16 %v410, %v409
      %v454 = vpack.c.b16 %v412, %v411
      %v455 = vpack.c.b16 %v414, %v413
      %v456 = vpack.c.b16 %v416, %v415
      %v457 = vpack.c.b16 %v418, %v417
      %v458 = vpack.c.b16 %v420, %v419
      %v459 = vpack.c.b16 %v422, %v421
      %v460 = vpack.c.b16 %v424, %v423
      %v461 = vpack.c.b16 %v426, %v425
      %v462 = vpack.c.b16 %v428, %v427
      %v463 = vpack.c.b16 %v430, %v429
      %v464 = vpack.c.b16 %v432, %v431
      %497 = vmatpush.bf16.msra.mxu0 %v440
      %498 = vmatpush.bf16.msra.mxu0 %v439
      %499 = vmatpush.bf16.msra.mxu0 %v438
      %500 = vmatpush.bf16.msra.mxu0 %v437
      %501 = vmatpush.bf16.msra.mxu0 %v436
      %502 = vmatpush.bf16.msra.mxu0 %v435
      %503 = vmatpush.bf16.msra.mxu0 %v434
      %504 = vmatpush.bf16.msra.mxu0 %v433
      %505 = vmatmul.bf16.gmra.mxu0 %v297
      %v506 = vpop.f32.mrf.mxu0
      %v507 = vadd.f32 0.0, %v506
      %v508 = vpop.f32.mrf.mxu0
      %509 = vdwg.mxu0
      %510 = vmatpush.bf16.msra.mxu0 %v448
      %511 = vmatpush.bf16.msra.mxu0 %v447
      %512 = vmatpush.bf16.msra.mxu0 %v446
      %513 = vmatpush.bf16.msra.mxu0 %v445
      %514 = vmatpush.bf16.msra.mxu0 %v444
      %515 = vmatpush.bf16.msra.mxu0 %v443
      %516 = vmatpush.bf16.msra.mxu0 %v442
      %517 = vmatpush.bf16.msra.mxu0 %v441
      %518 = vmatmul.bf16.gmra.mxu0 %v298
      %v519 = vpop.f32.mrf.mxu0
      %v520 = vadd.f32 %v507, %v519
      %v521 = vpop.f32.mrf.mxu0
      %522 = vdwg.mxu0
      %523 = vmatpush.bf16.msra.mxu0 %v456
      %524 = vmatpush.bf16.msra.mxu0 %v455
      %525 = vmatpush.bf16.msra.mxu0 %v454
      %526 = vmatpush.bf16.msra.mxu0 %v453
      %527 = vmatpush.bf16.msra.mxu0 %v452
      %528 = vmatpush.bf16.msra.mxu0 %v451
      %529 = vmatpush.bf16.msra.mxu0 %v450
      %530 = vmatpush.bf16.msra.mxu0 %v449
      %531 = vmatmul.bf16.gmra.mxu0 %v299
      %v532 = vpop.f32.mrf.mxu0
      %v533 = vadd.f32 %v520, %v532
      %v534 = vpop.f32.mrf.mxu0
      %535 = vdwg.mxu0
      %536 = vmatpush.bf16.msra.mxu0 %v464
      %537 = vmatpush.bf16.msra.mxu0 %v463
      %538 = vmatpush.bf16.msra.mxu0 %v462
      %539 = vmatpush.bf16.msra.mxu0 %v461
      %540 = vmatpush.bf16.msra.mxu0 %v460
      %541 = vmatpush.bf16.msra.mxu0 %v459
      %542 = vmatpush.bf16.msra.mxu0 %v458
      %543 = vmatpush.bf16.msra.mxu0 %v457
      %544 = vmatmul.bf16.gmra.mxu0 %v300
      %v545 = vpop.f32.mrf.mxu0
      %v546 = vadd.f32 %v533, %v545
      %v547 = vpop.f32.mrf.mxu0
      %548 = vdwg.mxu0
      %v549 = vadd.f32 %v224, %v546
      %550 = vst [vmem:[#allocation2] sm:$0xff] %v549
      %p551 = scmp.eq.s32.totalorder %s19, 1
      // Predicated region
      $region37: #{fc_discriminator_forward.8} parent=31 // pred_check
        %p552 = pneg %p551
      $region38: #{fc_discriminator_forward.8} parent=31 // pred_check_branch
        %554 = sbr.rel (%p552) target = $region40
      $region39: #{fc_discriminator_forward.8} parent=31 // pred_region
        %v555 = vld [vmem:[#allocation2] sm:$0xff]
        %v556 = vld [vmem:[%s2] sm:$0x1]
        %v558 = vperm.slane %v556, 0
        %v560 = vadd.f32 %v555, %v558
        %vm561 = vcmp.gt.f32.partialorder %v560, 0.0
        %v562 = vmul.f32 %v560, 0.2
        %v563 = vsel %vm561, %v560, %v562
        %v564 = vpack.c.bf16 %v563, %v563
        %565 = vst [vmem:[%s218] sm:$0xf] %v564
      $region40: #{fc_discriminator_forward.8} parent=31 // pred_fallthru
        _
      %p566 = scmp.lt.s32.totalorder %s18, 0
      %s567 = scalar_select %p566, %s18, 0
      %s568 = smul.addr %s567, 4
      %s569 = scalar_lea.vmem %s3, %s568
      // Predicated region
      $region41: #{fc_discriminator_forward.8} parent=31 // pred_check
        %p570 = pneg %p119
      $region42: #{fc_discriminator_forward.8} parent=31 // pred_check_branch
        %572 = sbr.rel (%p570) target = $region44
      $region43: #{fc_discriminator_forward.8} parent=31 // pred_region
        _
      $region44: #{fc_discriminator_forward.8} parent=31 // pred_fallthru
        _
      // Predicated region
      $region45: #{fc_discriminator_forward.8} parent=31 // pred_check
        %p573 = pneg %p119
      $region46: #{fc_discriminator_forward.8} parent=31 // pred_check_branch
        %575 = sbr.rel (%p573) target = $region48
      $region47: #{fc_discriminator_forward.8} parent=31 // pred_region
        %p576 = scmp.lt.s32.totalorder %s18, 0
        %s577 = scalar_select %p576, %s18, 0
        %s578 = smul.addr %s577, 4
        %s579 = scalar_lea.vmem %s3, %s578
      $region48: #{fc_discriminator_forward.8} parent=31 // pred_fallthru
        _
    $region32: #{fc_discriminator_forward.8} parent=5 // pred_fallthru
      _
    %p580 = scmp.le.s32.totalorder 2, %s9
    // Predicated region
    $region49: #{fc_discriminator_forward.8} parent=5 // pred_check
      %p581 = pneg %p580
    $region50: #{fc_discriminator_forward.8} parent=5 // pred_check_branch
      %583 = sbr.rel (%p581) target = $region52
    $region51: #{fc_discriminator_forward.8} parent=5 // pred_region
      %s584 = ssub.s32 %s9, 2
    $region52: #{fc_discriminator_forward.8} parent=5 // pred_fallthru
      _
  $region6: #{fc_discriminator_forward.8} parent=0 // loop_footer
    %s13 = sadd.s32 1, %s9
  $region7: #{fc_discriminator_forward.8} parent=0 // loop_footer_branch
    %8 = sbr.rel target = $region3
  $region8: #{fc_discriminator_forward.8} parent=0 // loop_exit
    _

// kernel: fc_discriminator_forward.9
$region0: #{fc_discriminator_forward.9}
  #allocation0 [shape = 'u32[]', space=smem, size = 0x4, offset = 0x4, fixed_abs, tag = 'smem constant byte address 0x4 - core index']
  #allocation1 [shape = 'u32[72,128]{1,0:T(1,128)}', space=vmem, size = 0x9000, scoped, tag = 'internal scratch']
  #allocation2 [shape = 'f32[8,128]{1,0:T(8,128)}', space=vmem, size = 0x1000, scoped, tag = 'scratch operand']
  %s0 = inlined_call_operand.vmem [shape: bf16[8,2048], index: 0, kind: input, shape index: {}]
  %s1 = inlined_call_operand.vmem [shape: bf16[2048,128], index: 1, kind: input, shape index: {}]
  %s2 = inlined_call_operand.vmem [shape: f32[1,128], index: 2, kind: input, shape index: {}]
  %s3 = inlined_call_operand.vmem [shape: f32[8,128], index: 3, kind: output, shape index: {}]
  %s4 = sld [smem:[#allocation0]]
  $region53: #{fc_discriminator_forward.9} parent=0
    _
  %s6 = ssub.s32 1, %s4
  %s7 = scalar_select 0, %s6, %s4
  loop: start=0, step=1, limit=6
  $region2: #{fc_discriminator_forward.9} parent=0 // loop_pre_header
    _
  $region3: #{fc_discriminator_forward.9} parent=0 // loop_header
    %s9 = sphi 0, %s13
    %p10 = scmp.ge.s32.totalorder %s9, 6
    %s16 = sphi 0, %s28
    %s17 = sphi 0, %s24
    %s18 = sphi 0, %s16
    %s19 = sphi 0, %s17
    %s20 = sphi 0, %s18
    %s21 = sphi 0, %s19
    %s33 = sphi 0, %s35
    %s36 = sphi 0, %s33
    %s37 = sphi 0, %s36
    %s53 = sphi 0, %s37
    %s59 = sphi 0, %s61
    %s62 = sphi 0, %s59
    %s63 = sphi 0, %s62
    %s79 = sphi 0, %s63
    %s83 = sphi 0, %s83
    %s85 = sphi 0, %s83
    %s86 = sphi 0, %s85
    %s100 = sphi 0, %s86
    %s106 = sphi 0, %s108
    %s109 = sphi 0, %s106
    %s110 = sphi 0, %s109
    %s126 = sphi 0, %s110
  $region4: #{fc_discriminator_forward.9} parent=0 // loop_header_branch
    %12 = sbr.rel (%p10) target = $region8
  $region5: #{fc_discriminator_forward.9} parent=0 // loop_body
    %s14 = ssub.s32 %s9, 1
    %s15 = ssub.s32 %s9, 2
    %s22 = sadd.s32 1, %s17
    %p23 = scmp.ge.s32.totalorder %s22, 4
    %s24 = scalar_select %p23, 0, %s22
    %s25 = sadd.s32 1, %s16
    %s26 = scalar_select %p23, %s25, %s16
    %p27 = scmp.ge.s32.totalorder %s26, 1
    %s28 = scalar_select %p27, 0, %s26
    %s29 = ssub.s32 %s16, %s28
    %s30 = ssub.s32 %s17, %s24
    %s31 = sor.u32 %s29, %s30
    %p32 = scmp.eq.s32.totalorder %s31, 0
    %s34 = sadd.s32 %s33, 1
    %s35 = scalar_select %p32, %s33, %s34
    %p38 = pneg %p32
    %p39 = scmp.eq.s32.totalorder %s9, 3
    %p40 = por %p38, %p39
    %p41 = scmp.ne.s32.totalorder %s33, %s36
    %p42 = scmp.eq.s32.totalorder %s9, 0
    %p43 = por %p41, %p42
    %p44 = scmp.ne.s32.totalorder %s33, %s36
    %p45 = scmp.eq.s32.totalorder %s14, 3
    %p46 = por %p44, %p45
    %p47 = scmp.ne.s32.totalorder %s36, %s37
    %p48 = scmp.eq.s32.totalorder %s14, 0
    %p49 = por %p47, %p48
    %p50 = scmp.ne.s32.totalorder %s36, %s37
    %p51 = scmp.eq.s32.totalorder %s15, 3
    %p52 = por %p50, %p51
    %p54 = scmp.ne.s32.totalorder %s37, %s53
    %p55 = scmp.eq.s32.totalorder %s15, 0
    %p56 = por %p54, %p55
    %s57 = ssub.s32 %s17, %s24
    %p58 = scmp.eq.s32.totalorder %s57, 0
    %s60 = sadd.s32 %s59, 1
    %s61 = scalar_select %p58, %s59, %s60
    %p64 = pneg %p58
    %p65 = scmp.eq.s32.totalorder %s9, 3
    %p66 = por %p64, %p65
    %p67 = scmp.ne.s32.totalorder %s59, %s62
    %p68 = scmp.eq.s32.totalorder %s9, 0
    %p69 = por %p67, %p68
    %p70 = scmp.ne.s32.totalorder %s59, %s62
    %p71 = scmp.eq.s32.totalorder %s14, 3
    %p72 = por %p70, %p71
    %p73 = scmp.ne.s32.totalorder %s62, %s63
    %p74 = scmp.eq.s32.totalorder %s14, 0
    %p75 = por %p73, %p74
    %p76 = scmp.ne.s32.totalorder %s62, %s63
    %p77 = scmp.eq.s32.totalorder %s15, 3
    %p78 = por %p76, %p77
    %p80 = scmp.ne.s32.totalorder %s63, %s79
    %p81 = scmp.eq.s32.totalorder %s15, 0
    %p82 = por %p80, %p81
    %s84 = sadd.s32 %s83, 1
    %p87 = scmp.eq.s32.totalorder %s9, 3
    %p88 = scmp.ne.s32.totalorder %s83, %s85
    %p89 = scmp.eq.s32.totalorder %s9, 0
    %p90 = por %p88, %p89
    %p91 = scmp.ne.s32.totalorder %s83, %s85
    %p92 = scmp.eq.s32.totalorder %s14, 3
    %p93 = por %p91, %p92
    %p94 = scmp.ne.s32.totalorder %s85, %s86
    %p95 = scmp.eq.s32.totalorder %s14, 0
    %p96 = por %p94, %p95
    %p97 = scmp.ne.s32.totalorder %s85, %s86
    %p98 = scmp.eq.s32.totalorder %s15, 3
    %p99 = por %p97, %p98
    %p101 = scmp.ne.s32.totalorder %s86, %s100
    %p102 = scmp.eq.s32.totalorder %s15, 0
    %p103 = por %p101, %p102
    %s104 = ssub.s32 %s16, %s28
    %p105 = scmp.eq.s32.totalorder %s104, 0
    %s107 = sadd.s32 %s106, 1
    %s108 = scalar_select %p105, %s106, %s107
    %p111 = pneg %p105
    %p112 = scmp.eq.s32.totalorder %s9, 3
    %p113 = por %p111, %p112
    %p114 = scmp.ne.s32.totalorder %s106, %s109
    %p115 = scmp.eq.s32.totalorder %s9, 0
    %p116 = por %p114, %p115
    %p117 = scmp.ne.s32.totalorder %s106, %s109
    %p118 = scmp.eq.s32.totalorder %s14, 3
    %p119 = por %p117, %p118
    %p120 = scmp.ne.s32.totalorder %s109, %s110
    %p121 = scmp.eq.s32.totalorder %s14, 0
    %p122 = por %p120, %p121
    %p123 = scmp.ne.s32.totalorder %s109, %s110
    %p124 = scmp.eq.s32.totalorder %s15, 3
    %p125 = por %p123, %p124
    %p127 = scmp.ne.s32.totalorder %s110, %s126
    %p128 = scmp.eq.s32.totalorder %s15, 0
    %p129 = por %p127, %p128
    %p130 = scmp.le.s32.totalorder 1, %s9
    %p131 = scmp.lt.s32.totalorder %s9, 5
    %p132 = pnand %p130, %p131
    %p133 = pneg %p132
    // Predicated region
    $region9: #{fc_discriminator_forward.9} parent=5 // pred_check
      _
    $region10: #{fc_discriminator_forward.9} parent=5 // pred_check_branch
      %135 = sbr.rel (%p132) target = $region12
    $region11: #{fc_discriminator_forward.9} parent=5 // pred_region
      %s136 = ssub.s32 %s9, 1
      // Predicated region
      $region13: #{fc_discriminator_forward.9} parent=11 // pred_check
        %p137 = pneg %p96
      $region14: #{fc_discriminator_forward.9} parent=11 // pred_check_branch
        %139 = sbr.rel (%p137) target = $region16
      $region15: #{fc_discriminator_forward.9} parent=11 // pred_region
        _
      $region16: #{fc_discriminator_forward.9} parent=11 // pred_fallthru
        _
    $region12: #{fc_discriminator_forward.9} parent=5 // pred_fallthru
      _
    %p140 = scmp.lt.s32.totalorder %s9, 4
    // Predicated region
    $region17: #{fc_discriminator_forward.9} parent=5 // pred_check
      %p141 = pneg %p140
    $region18: #{fc_discriminator_forward.9} parent=5 // pred_check_branch
      %143 = sbr.rel (%p141) target = $region20
    $region19: #{fc_discriminator_forward.9} parent=5 // pred_region
      // Predicated region
      $region21: #{fc_discriminator_forward.9} parent=19 // pred_check
        %p144 = pneg %p43
      $region22: #{fc_discriminator_forward.9} parent=19 // pred_check_branch
        %146 = sbr.rel (%p144) target = $region24
      $region23: #{fc_discriminator_forward.9} parent=19 // pred_region
        %s147 = smul.u32 4, %s17
        %p148 = scmp.lt.s32.totalorder %s16, 0
        %s149 = scalar_select %p148, %s16, 0
        %p150 = scmp.lt.s32.totalorder %s147, 15
        %s151 = scalar_select %p150, %s147, 15
        %s152 = smul.addr %s149, 16
        %s153 = sadd.s32 %s151, %s152
        %s154 = smul.addr %s153, 4
        %s155 = scalar_lea.vmem %s0, %s154
        %s156 = smul.u32 4, %s17
      $region24: #{fc_discriminator_forward.9} parent=19 // pred_fallthru
        _
      // Predicated region
      $region25: #{fc_discriminator_forward.9} parent=19 // pred_check
        %p157 = pneg %p69
      $region26: #{fc_discriminator_forward.9} parent=19 // pred_check_branch
        %159 = sbr.rel (%p157) target = $region28
      $region27: #{fc_discriminator_forward.9} parent=19 // pred_region
        %s160 = smul.u32 64, %s17
        %p161 = scmp.lt.s32.totalorder %s160, 255
        %s162 = scalar_select %p161, %s160, 255
        %s163 = smul.addr %s162, 4
        %s164 = scalar_lea.vmem %s1, %s163
        %s165 = smul.u32 64, %s17
      $region28: #{fc_discriminator_forward.9} parent=19 // pred_fallthru
        _
    $region20: #{fc_discriminator_forward.9} parent=5 // pred_fallthru
      _
    %p166 = scmp.le.s32.totalorder 1, %s9
    %p167 = scmp.lt.s32.totalorder %s9, 5
    %p168 = pnand %p166, %p167
    %p169 = pneg %p168
    // Predicated region
    $region29: #{fc_discriminator_forward.9} parent=5 // pred_check
      _
    $region30: #{fc_discriminator_forward.9} parent=5 // pred_check_branch
      %171 = sbr.rel (%p168) target = $region32
    $region31: #{fc_discriminator_forward.9} parent=5 // pred_region
      %s172 = ssub.s32 %s9, 1
      %s173 = smul.u32 4, %s19
      %p174 = scmp.lt.s32.totalorder %s18, 0
      %s175 = scalar_select %p174, %s18, 0
      %p176 = scmp.lt.s32.totalorder %s173, 15
      %s177 = scalar_select %p176, %s173, 15
      %s178 = smul.addr %s175, 16
      %s179 = sadd.s32 %s177, %s178
      %s180 = smul.addr %s179, 4
      %s181 = scalar_lea.vmem %s0, %s180
      %p182 = pneg %p49
      %p183 = pneg %p46
      %s184 = smul.u32 64, %s19
      %p185 = scmp.lt.s32.totalorder %s184, 255
      %s186 = scalar_select %p185, %s184, 255
      %s187 = smul.addr %s186, 4
      %s188 = scalar_lea.vmem %s1, %s187
      %p189 = pneg %p75
      %p190 = pneg %p72
      %p191 = pneg %p96
      %p192 = pneg %p93
      %p193 = pneg %p122
      %p194 = pneg %p119
      %p195 = scmp.lt.s32.totalorder %s18, 0
      %s196 = scalar_select %p195, %s18, 0
      %s197 = smul.addr %s196, 8
      %s198 = scalar_lea.vmem %s3, %s197
      %s199 = smul.u32 4, %s19
      %p200 = scmp.lt.s32.totalorder %s18, 0
      %s201 = scalar_select %p200, %s18, 0
      %p202 = scmp.lt.s32.totalorder %s199, 15
      %s203 = scalar_select %p202, %s199, 15
      %s204 = smul.addr %s201, 16
      %s205 = sadd.s32 %s203, %s204
      %s206 = smul.addr %s205, 4
      %s207 = scalar_lea.vmem %s0, %s206
      %s208 = smul.u32 4, %s19
      %s209 = smul.u32 64, %s19
      %p210 = scmp.lt.s32.totalorder %s209, 255
      %s211 = scalar_select %p210, %s209, 255
      %s212 = smul.addr %s211, 4
      %s213 = scalar_lea.vmem %s1, %s212
      %s214 = smul.u32 64, %s19
      %p215 = scmp.lt.s32.totalorder %s18, 0
      %s216 = scalar_select %p215, %s18, 0
      %s217 = smul.addr %s216, 8
      %s218 = scalar_lea.vmem %s3, %s217
      %p219 = scmp.eq.s32.totalorder %s19, 0
      // Predicated region
      $region33: #{fc_discriminator_forward.9} parent=31 // pred_check
        %p220 = pneg %p219
      $region34: #{fc_discriminator_forward.9} parent=31 // pred_check_branch
        %222 = sbr.rel (%p220) target = $region36
      $region35: #{fc_discriminator_forward.9} parent=31 // pred_region
        %223 = vst [vmem:[#allocation2] sm:$0xff] 0.0
      $region36: #{fc_discriminator_forward.9} parent=31 // pred_fallthru
        _
      %v224 = vld [vmem:[#allocation2] sm:$0xff]
      %v225 = vld [vmem:[%s207] sm:$0xff]
      %v226 = vld [vmem:[%s207 + $0x8] sm:$0xff]
      %v227 = vld [vmem:[%s213] sm:$0xf]
      %v228 = vld [vmem:[%s213 + $0x4] sm:$0xf]
      %v229 = vld [vmem:[%s213 + $0x8] sm:$0xf]
      %v230 = vld [vmem:[%s213 + $0xc] sm:$0xf]
      %v231 = vld [vmem:[%s213 + $0x10] sm:$0xf]
      %v232 = vld [vmem:[%s213 + $0x14] sm:$0xf]
      %v233 = vld [vmem:[%s213 + $0x18] sm:$0xf]
      %v234 = vld [vmem:[%s213 + $0x1c] sm:$0xf]
      %v235 = vld [vmem:[%s213 + $0x20] sm:$0xf]
      %v236 = vld [vmem:[%s213 + $0x24] sm:$0xf]
      %v237 = vld [vmem:[%s213 + $0x28] sm:$0xf]
      %v238 = vld [vmem:[%s213 + $0x2c] sm:$0xf]
      %v239 = vld [vmem:[%s213 + $0x30] sm:$0xf]
      %v240 = vld [vmem:[%s213 + $0x34] sm:$0xf]
      %v241 = vld [vmem:[%s213 + $0x38] sm:$0xf]
      %v242 = vld [vmem:[%s213 + $0x3c] sm:$0xf]
      %v243 = vld [vmem:[%s213 + $0x40] sm:$0xf]
      %v244 = vld [vmem:[%s213 + $0x44] sm:$0xf]
      %v245 = vld [vmem:[%s213 + $0x48] sm:$0xf]
      %v246 = vld [vmem:[%s213 + $0x4c] sm:$0xf]
      %v247 = vld [vmem:[%s213 + $0x50] sm:$0xf]
      %v248 = vld [vmem:[%s213 + $0x54] sm:$0xf]
      %v249 = vld [vmem:[%s213 + $0x58] sm:$0xf]
      %v250 = vld [vmem:[%s213 + $0x5c] sm:$0xf]
      %v251 = vld [vmem:[%s213 + $0x60] sm:$0xf]
      %v252 = vld [vmem:[%s213 + $0x64] sm:$0xf]
      %v253 = vld [vmem:[%s213 + $0x68] sm:$0xf]
      %v254 = vld [vmem:[%s213 + $0x6c] sm:$0xf]
      %v255 = vld [vmem:[%s213 + $0x70] sm:$0xf]
      %v256 = vld [vmem:[%s213 + $0x74] sm:$0xf]
      %v257 = vld [vmem:[%s213 + $0x78] sm:$0xf]
      %v258 = vld [vmem:[%s213 + $0x7c] sm:$0xf]
      %v259 = vld [vmem:[%s213 + $0x80] sm:$0xf]
      %v260 = vld [vmem:[%s213 + $0x84] sm:$0xf]
      %v261 = vld [vmem:[%s213 + $0x88] sm:$0xf]
      %v262 = vld [vmem:[%s213 + $0x8c] sm:$0xf]
      %v263 = vld [vmem:[%s213 + $0x90] sm:$0xf]
      %v264 = vld [vmem:[%s213 + $0x94] sm:$0xf]
      %v265 = vld [vmem:[%s213 + $0x98] sm:$0xf]
      %v266 = vld [vmem:[%s213 + $0x9c] sm:$0xf]
      %v267 = vld [vmem:[%s213 + $0xa0] sm:$0xf]
      %v268 = vld [vmem:[%s213 + $0xa4] sm:$0xf]
      %v269 = vld [vmem:[%s213 + $0xa8] sm:$0xf]
      %v270 = vld [vmem:[%s213 + $0xac] sm:$0xf]
      %v271 = vld [vmem:[%s213 + $0xb0] sm:$0xf]
      %v272 = vld [vmem:[%s213 + $0xb4] sm:$0xf]
      %v273 = vld [vmem:[%s213 + $0xb8] sm:$0xf]
      %v274 = vld [vmem:[%s213 + $0xbc] sm:$0xf]
      %v275 = vld [vmem:[%s213 + $0xc0] sm:$0xf]
      %v276 = vld [vmem:[%s213 + $0xc4] sm:$0xf]
      %v277 = vld [vmem:[%s213 + $0xc8] sm:$0xf]
      %v278 = vld [vmem:[%s213 + $0xcc] sm:$0xf]
      %v279 = vld [vmem:[%s213 + $0xd0] sm:$0xf]
      %v280 = vld [vmem:[%s213 + $0xd4] sm:$0xf]
      %v281 = vld [vmem:[%s213 + $0xd8] sm:$0xf]
      %v282 = vld [vmem:[%s213 + $0xdc] sm:$0xf]
      %v283 = vld [vmem:[%s213 + $0xe0] sm:$0xf]
      %v284 = vld [vmem:[%s213 + $0xe4] sm:$0xf]
      %v285 = vld [vmem:[%s213 + $0xe8] sm:$0xf]
      %v286 = vld [vmem:[%s213 + $0xec] sm:$0xf]
      %v287 = vld [vmem:[%s213 + $0xf0] sm:$0xf]
      %v288 = vld [vmem:[%s213 + $0xf4] sm:$0xf]
      %v289 = vld [vmem:[%s213 + $0xf8] sm:$0xf]
      %v290 = vld [vmem:[%s213 + $0xfc] sm:$0xf]
      %v293 = vunpack.c.l.b16 %v225
      %v294 = vunpack.c.h.b16 %v225
      %v295 = vunpack.c.l.b16 %v226
      %v296 = vunpack.c.h.b16 %v226
      %v297 = vpack.c.b16 %v293, %v293
      %v298 = vpack.c.b16 %v294, %v294
      %v299 = vpack.c.b16 %v295, %v295
      %v300 = vpack.c.b16 %v296, %v296
      %v369 = vunpack.c.l.b16 %v227
      %v370 = vunpack.c.l.b16 %v228
      %v371 = vunpack.c.l.b16 %v229
      %v372 = vunpack.c.l.b16 %v230
      %v373 = vunpack.c.l.b16 %v231
      %v374 = vunpack.c.l.b16 %v232
      %v375 = vunpack.c.l.b16 %v233
      %v376 = vunpack.c.l.b16 %v234
      %v377 = vunpack.c.l.b16 %v235
      %v378 = vunpack.c.l.b16 %v236
      %v379 = vunpack.c.l.b16 %v237
      %v380 = vunpack.c.l.b16 %v238
      %v381 = vunpack.c.l.b16 %v239
      %v382 = vunpack.c.l.b16 %v240
      %v383 = vunpack.c.l.b16 %v241
      %v384 = vunpack.c.l.b16 %v242
      %v385 = vunpack.c.l.b16 %v243
      %v386 = vunpack.c.l.b16 %v244
      %v387 = vunpack.c.l.b16 %v245
      %v388 = vunpack.c.l.b16 %v246
      %v389 = vunpack.c.l.b16 %v247
      %v390 = vunpack.c.l.b16 %v248
      %v391 = vunpack.c.l.b16 %v249
      %v392 = vunpack.c.l.b16 %v250
      %v393 = vunpack.c.l.b16 %v251
      %v394 = vunpack.c.l.b16 %v252
      %v395 = vunpack.c.l.b16 %v253
      %v396 = vunpack.c.l.b16 %v254
      %v397 = vunpack.c.l.b16 %v255
      %v398 = vunpack.c.l.b16 %v256
      %v399 = vunpack.c.l.b16 %v257
      %v400 = vunpack.c.l.b16 %v258
      %v401 = vunpack.c.l.b16 %v259
      %v402 = vunpack.c.l.b16 %v260
      %v403 = vunpack.c.l.b16 %v261
      %v404 = vunpack.c.l.b16 %v262
      %v405 = vunpack.c.l.b16 %v263
      %v406 = vunpack.c.l.b16 %v264
      %v407 = vunpack.c.l.b16 %v265
      %v408 = vunpack.c.l.b16 %v266
      %v409 = vunpack.c.l.b16 %v267
      %v410 = vunpack.c.l.b16 %v268
      %v411 = vunpack.c.l.b16 %v269
      %v412 = vunpack.c.l.b16 %v270
      %v413 = vunpack.c.l.b16 %v271
      %v414 = vunpack.c.l.b16 %v272
      %v415 = vunpack.c.l.b16 %v273
      %v416 = vunpack.c.l.b16 %v274
      %v417 = vunpack.c.l.b16 %v275
      %v418 = vunpack.c.l.b16 %v276
      %v419 = vunpack.c.l.b16 %v277
      %v420 = vunpack.c.l.b16 %v278
      %v421 = vunpack.c.l.b16 %v279
      %v422 = vunpack.c.l.b16 %v280
      %v423 = vunpack.c.l.b16 %v281
      %v424 = vunpack.c.l.b16 %v282
      %v425 = vunpack.c.l.b16 %v283
      %v426 = vunpack.c.l.b16 %v284
      %v427 = vunpack.c.l.b16 %v285
      %v428 = vunpack.c.l.b16 %v286
      %v429 = vunpack.c.l.b16 %v287
      %v430 = vunpack.c.l.b16 %v288
      %v431 = vunpack.c.l.b16 %v289
      %v432 = vunpack.c.l.b16 %v290
      %v433 = vpack.c.b16 %v370, %v369
      %v434 = vpack.c.b16 %v372, %v371
      %v435 = vpack.c.b16 %v374, %v373
      %v436 = vpack.c.b16 %v376, %v375
      %v437 = vpack.c.b16 %v378, %v377
      %v438 = vpack.c.b16 %v380, %v379
      %v439 = vpack.c.b16 %v382, %v381
      %v440 = vpack.c.b16 %v384, %v383
      %v441 = vpack.c.b16 %v386, %v385
      %v442 = vpack.c.b16 %v388, %v387
      %v443 = vpack.c.b16 %v390, %v389
      %v444 = vpack.c.b16 %v392, %v391
      %v445 = vpack.c.b16 %v394, %v393
      %v446 = vpack.c.b16 %v396, %v395
      %v447 = vpack.c.b16 %v398, %v397
      %v448 = vpack.c.b16 %v400, %v399
      %v449 = vpack.c.b16 %v402, %v401
      %v450 = vpack.c.b16 %v404, %v403
      %v451 = vpack.c.b16 %v406, %v405
      %v452 = vpack.c.b16 %v408, %v407
      %v453 = vpack.c.b16 %v410, %v409
      %v454 = vpack.c.b16 %v412, %v411
      %v455 = vpack.c.b16 %v414, %v413
      %v456 = vpack.c.b16 %v416, %v415
      %v457 = vpack.c.b16 %v418, %v417
      %v458 = vpack.c.b16 %v420, %v419
      %v459 = vpack.c.b16 %v422, %v421
      %v460 = vpack.c.b16 %v424, %v423
      %v461 = vpack.c.b16 %v426, %v425
      %v462 = vpack.c.b16 %v428, %v427
      %v463 = vpack.c.b16 %v430, %v429
      %v464 = vpack.c.b16 %v432, %v431
      %497 = vmatpush.bf16.msra.mxu0 %v440
      %498 = vmatpush.bf16.msra.mxu0 %v439
      %499 = vmatpush.bf16.msra.mxu0 %v438
      %500 = vmatpush.bf16.msra.mxu0 %v437
      %501 = vmatpush.bf16.msra.mxu0 %v436
      %502 = vmatpush.bf16.msra.mxu0 %v435
      %503 = vmatpush.bf16.msra.mxu0 %v434
      %504 = vmatpush.bf16.msra.mxu0 %v433
      %505 = vmatmul.bf16.gmra.mxu0 %v297
      %v506 = vpop.f32.mrf.mxu0
      %v507 = vadd.f32 0.0, %v506
      %v508 = vpop.f32.mrf.mxu0
      %509 = vdwg.mxu0
      %510 = vmatpush.bf16.msra.mxu0 %v448
      %511 = vmatpush.bf16.msra.mxu0 %v447
      %512 = vmatpush.bf16.msra.mxu0 %v446
      %513 = vmatpush.bf16.msra.mxu0 %v445
      %514 = vmatpush.bf16.msra.mxu0 %v444
      %515 = vmatpush.bf16.msra.mxu0 %v443
      %516 = vmatpush.bf16.msra.mxu0 %v442
      %517 = vmatpush.bf16.msra.mxu0 %v441
      %518 = vmatmul.bf16.gmra.mxu0 %v298
      %v519 = vpop.f32.mrf.mxu0
      %v520 = vadd.f32 %v507, %v519
      %v521 = vpop.f32.mrf.mxu0
      %522 = vdwg.mxu0
      %523 = vmatpush.bf16.msra.mxu0 %v456
      %524 = vmatpush.bf16.msra.mxu0 %v455
      %525 = vmatpush.bf16.msra.mxu0 %v454
      %526 = vmatpush.bf16.msra.mxu0 %v453
      %527 = vmatpush.bf16.msra.mxu0 %v452
      %528 = vmatpush.bf16.msra.mxu0 %v451
      %529 = vmatpush.bf16.msra.mxu0 %v450
      %530 = vmatpush.bf16.msra.mxu0 %v449
      %531 = vmatmul.bf16.gmra.mxu0 %v299
      %v532 = vpop.f32.mrf.mxu0
      %v533 = vadd.f32 %v520, %v532
      %v534 = vpop.f32.mrf.mxu0
      %535 = vdwg.mxu0
      %536 = vmatpush.bf16.msra.mxu0 %v464
      %537 = vmatpush.bf16.msra.mxu0 %v463
      %538 = vmatpush.bf16.msra.mxu0 %v462
      %539 = vmatpush.bf16.msra.mxu0 %v461
      %540 = vmatpush.bf16.msra.mxu0 %v460
      %541 = vmatpush.bf16.msra.mxu0 %v459
      %542 = vmatpush.bf16.msra.mxu0 %v458
      %543 = vmatpush.bf16.msra.mxu0 %v457
      %544 = vmatmul.bf16.gmra.mxu0 %v300
      %v545 = vpop.f32.mrf.mxu0
      %v546 = vadd.f32 %v533, %v545
      %v547 = vpop.f32.mrf.mxu0
      %548 = vdwg.mxu0
      %v549 = vadd.f32 %v224, %v546
      %550 = vst [vmem:[#allocation2] sm:$0xff] %v549
      %p551 = scmp.eq.s32.totalorder %s19, 3
      // Predicated region
      $region37: #{fc_discriminator_forward.9} parent=31 // pred_check
        %p552 = pneg %p551
      $region38: #{fc_discriminator_forward.9} parent=31 // pred_check_branch
        %554 = sbr.rel (%p552) target = $region40
      $region39: #{fc_discriminator_forward.9} parent=31 // pred_region
        %v555 = vld [vmem:[#allocation2] sm:$0xff]
        %v556 = vld [vmem:[%s2] sm:$0x1]
        %v558 = vperm.slane %v556, 0
        %v560 = vadd.f32 %v555, %v558
        %561 = vst [vmem:[%s218] sm:$0xff] %v560
      $region40: #{fc_discriminator_forward.9} parent=31 // pred_fallthru
        _
      %p562 = scmp.lt.s32.totalorder %s18, 0
      %s563 = scalar_select %p562, %s18, 0
      %s564 = smul.addr %s563, 8
      %s565 = scalar_lea.vmem %s3, %s564
      // Predicated region
      $region41: #{fc_discriminator_forward.9} parent=31 // pred_check
        %p566 = pneg %p119
      $region42: #{fc_discriminator_forward.9} parent=31 // pred_check_branch
        %568 = sbr.rel (%p566) target = $region44
      $region43: #{fc_discriminator_forward.9} parent=31 // pred_region
        _
      $region44: #{fc_discriminator_forward.9} parent=31 // pred_fallthru
        _
      // Predicated region
      $region45: #{fc_discriminator_forward.9} parent=31 // pred_check
        %p569 = pneg %p119
      $region46: #{fc_discriminator_forward.9} parent=31 // pred_check_branch
        %571 = sbr.rel (%p569) target = $region48
      $region47: #{fc_discriminator_forward.9} parent=31 // pred_region
        %p572 = scmp.lt.s32.totalorder %s18, 0
        %s573 = scalar_select %p572, %s18, 0
        %s574 = smul.addr %s573, 8
        %s575 = scalar_lea.vmem %s3, %s574
      $region48: #{fc_discriminator_forward.9} parent=31 // pred_fallthru
        _
    $region32: #{fc_discriminator_forward.9} parent=5 // pred_fallthru
      _
    %p576 = scmp.le.s32.totalorder 2, %s9
    // Predicated region
    $region49: #{fc_discriminator_forward.9} parent=5 // pred_check
      %p577 = pneg %p576
    $region50: #{fc_discriminator_forward.9} parent=5 // pred_check_branch
      %579 = sbr.rel (%p577) target = $region52
    $region51: #{fc_discriminator_forward.9} parent=5 // pred_region
      %s580 = ssub.s32 %s9, 2
    $region52: #{fc_discriminator_forward.9} parent=5 // pred_fallthru
      _
  $region6: #{fc_discriminator_forward.9} parent=0 // loop_footer
    %s13 = sadd.s32 1, %s9
  $region7: #{fc_discriminator_forward.9} parent=0 // loop_footer_branch
    %8 = sbr.rel target = $region3
  $region8: #{fc_discriminator_forward.9} parent=0 // loop_exit
    _

</llo_original>
